<compile_context>
chip_gen: v6e
topology: v6e:2x2x1
jax: 0.10.0
libtpu: 0.0.40
codegen_flags: <defaults>
</compile_context>

<pallas_src>
import functools

import jax
import jax.numpy as jnp
from jax.experimental import pallas as pl
from jax.experimental.pallas import tpu as pltpu

EPS = 1e-5          # nn.BatchNorm2d default eps
LANE = 128          # TPU lane width; output-channel padding target


# ------------------------------ small helpers ------------------------------ #

def _round_up(x, m):
    return ((x + m - 1) // m) * m


def _largest_divisor_leq(n, target):
    t = max(1, min(n, target))
    while n % t:
        t -= 1
    return t


def _pick_conv_tb(h, w, cin, cpad, vmem_budget=20 * 1024 * 1024):
    """Row-band height for the conv kernel: ~2048 matmul rows, VMEM-bounded."""
    def est_bytes(tb):
        band = 2 * (tb + 2) * (w + 2) * cin * 2     # double-buffered input band
        slab = tb * w * 9 * cin * 2                 # bf16 im2col slab
        acc = tb * w * cpad * 4                     # f32 matmul result
        yblk = 2 * tb * w * cpad * 2                # double-buffered bf16 y block
        wgt = 2 * 9 * cin * cpad * 2                # resident packed weights
        return band + slab + acc + yblk + wgt

    tb = _largest_divisor_leq(h, max(1, 2048 // max(w, 1)))
    while tb > 1 and est_bytes(tb) > vmem_budget:
        tb = _largest_divisor_leq(h, tb - 1)
    return tb


# ------------------------------ Pallas kernels ------------------------------ #

def _maxpool_kernel(x_ref, o_ref):
    # x_ref block: (1, 2*TH, 2*WO, C); o_ref block: (1, TH, WO, C).
    th, wo, c = o_ref.shape[1], o_ref.shape[2], o_ref.shape[3]
    x = x_ref[...].reshape(th, 2, wo, 2, c)
    r = jnp.maximum(x[:, 0], x[:, 1])                 # row pairs   -> (TH, WO, 2, C)
    m = jnp.maximum(r[:, :, 0, :], r[:, :, 1, :])     # column pairs -> (TH, WO, C)
    o_ref[...] = m.reshape(1, th, wo, c).astype(o_ref.dtype)


def _conv_bn_stats_kernel(band_ref, halo0_ref, halo1_ref, w_ref, y_ref, stats_ref):
    # band_ref : (1, TB, W+2, Cin) bf16, rows [i*TB, i*TB+TB) of the padded input.
    # halo0/1  : (1, 1,  W+2, Cin) bf16, rows  i*TB+TB and i*TB+TB+1.
    # w_ref    : (9*Cin, Cpad) bf16 packed weights (resident across the grid).
    # y_ref    : (1, TB, W, Cpad) bf16 conv output tile.
    # stats_ref: (1, 1, 2, Cpad) f32 per-tile [sum, sum-of-squares] (fused BN pass 1).
    tb, wp, cin = band_ref.shape[1], band_ref.shape[2], band_ref.shape[3]
    wo, cpad = y_ref.shape[2], y_ref.shape[3]

    band = jnp.concatenate(
        [band_ref[...].reshape(tb, wp, cin),
         halo0_ref[...].reshape(1, wp, cin),
         halo1_ref[...].reshape(1, wp, cin)], axis=0)          # (TB+2, W+2, Cin)

    # In-VMEM im2col: 9 statically shifted windows concatenated along channels,
    # then a single MXU matmul with K = 9*Cin (no per-tap accumulator passes).
    taps = [band[dy:dy + tb, dx:dx + wo, :] for dy in range(3) for dx in range(3)]
    slab = jnp.concatenate(taps, axis=-1).reshape(tb * wo, 9 * cin)   # bf16

    acc = jnp.dot(slab, w_ref[...], preferred_element_type=jnp.float32)

    y_ref[...] = acc.reshape(1, tb, wo, cpad).astype(y_ref.dtype)
    s = jnp.sum(acc, axis=0, keepdims=True)                    # (1, Cpad)
    ss = jnp.sum(acc * acc, axis=0, keepdims=True)             # (1, Cpad)
    stats_ref[...] = jnp.concatenate([s, ss], axis=0).reshape(1, 1, 2, cpad)


def _bn_relu_kernel(y_ref, scale_ref, shift_ref, o_ref):
    # y_ref: (TB, W, Cpad) bf16; scale/shift: (1, Cpad) f32 broadcast over rows.
    y = y_ref[...].astype(jnp.float32)
    o_ref[...] = jnp.maximum(y * scale_ref[...] + shift_ref[...],
                             0.0).astype(o_ref.dtype)


# -------------------------------- wrappers ---------------------------------- #

def maxpool2x2(x_nhwc, *, out_dtype=jnp.bfloat16):
    n, h, w, c = x_nhwc.shape
    ho, wo = h // 2, w // 2
    x = x_nhwc[:, :2 * ho, :2 * wo, :]        # PyTorch MaxPool2d(2) floors odd sizes
    th = _largest_divisor_leq(ho, max(1, 2048 // max(2 * wo, 1)))
    return pl.pallas_call(
        _maxpool_kernel,
        out_shape=jax.ShapeDtypeStruct((n, ho, wo, c), out_dtype),
        grid=(n, ho // th),
        in_specs=[pl.BlockSpec((1, 2 * th, 2 * wo, c), lambda ni, ti: (ni, ti, 0, 0))],
        out_specs=pl.BlockSpec((1, th, wo, c), lambda ni, ti: (ni, ti, 0, 0)),
        compiler_params=pltpu.CompilerParams(
            dimension_semantics=("parallel", "parallel")),
    )(x)


def conv3x3_bn_stats(x_nhwc, w_packed, cpad, *, y_dtype=jnp.bfloat16):
    """3x3 conv (stride 1, zero pad 1) in bf16 + fused per-tile BN statistics."""
    n, h, w, cin = x_nhwc.shape
    k_dim, cpad_w = w_packed.shape
    assert k_dim == 9 * cin and cpad_w == cpad

    xp = jnp.pad(x_nhwc.astype(jnp.bfloat16), ((0, 0), (1, 1), (1, 1), (0, 0)))
    tb = _pick_conv_tb(h, w, cin, cpad)
    t = h // tb

    flops = 2 * n * h * w * 9 * cin * cpad
    bytes_accessed = (xp.size * 2 + w_packed.size * 2
                      + n * h * w * cpad * 2 + n * t * 2 * cpad * 4)

    return pl.pallas_call(
        _conv_bn_stats_kernel,
        out_shape=(jax.ShapeDtypeStruct((n, h, w, cpad), y_dtype),
                   jax.ShapeDtypeStruct((n, t, 2, cpad), jnp.float32)),
        grid=(n, t),
        in_specs=[
            # Main TB-row band of the padded input.
            pl.BlockSpec((1, tb, w + 2, cin), lambda ni, ti: (ni, ti, 0, 0)),
            # Two 1-row halo blocks (block height 1 => block index == row index).
            pl.BlockSpec((1, 1, w + 2, cin), lambda ni, ti: (ni, ti * tb + tb, 0, 0)),
            pl.BlockSpec((1, 1, w + 2, cin), lambda ni, ti: (ni, ti * tb + tb + 1, 0, 0)),
            # Packed weights, resident across the whole grid.
            pl.BlockSpec((9 * cin, cpad), lambda ni, ti: (0, 0)),
        ],
        out_specs=(pl.BlockSpec((1, tb, w, cpad), lambda ni, ti: (ni, ti, 0, 0)),
                   pl.BlockSpec((1, 1, 2, cpad), lambda ni, ti: (ni, ti, 0, 0))),
        compiler_params=pltpu.CompilerParams(
            dimension_semantics=("parallel", "parallel"),
            vmem_limit_bytes=40 * 1024 * 1024),
        cost_estimate=pl.CostEstimate(flops=flops, transcendentals=0,
                                      bytes_accessed=bytes_accessed),
    )(xp, xp, xp, w_packed)


def _bn_scale_shift(stats, gamma_pad, beta_pad, count):
    # Reduce tiny per-tile stats to per-channel affine params (plain-JAX glue).
    s = jnp.sum(stats[:, :, 0, :], axis=(0, 1))
    ss = jnp.sum(stats[:, :, 1, :], axis=(0, 1))
    mean = s / count
    var = jnp.maximum(ss / count - mean * mean, 0.0)   # guard E[x^2]-E[x]^2 round-off
    scale = gamma_pad * jax.lax.rsqrt(var + EPS)
    shift = beta_pad - mean * scale
    return scale[None, :].astype(jnp.float32), shift[None, :].astype(jnp.float32)


def bn_relu_apply(y, scale, shift, *, out_dtype):
    n, h, w, cpad = y.shape
    rows = n * h
    yf = y.reshape(rows, w, cpad)                       # leading-dim merge only
    tb = _largest_divisor_leq(rows, max(1, (1 << 20) // max(w * cpad, 1)))
    out = pl.pallas_call(
        _bn_relu_kernel,
        out_shape=jax.ShapeDtypeStruct((rows, w, cpad), out_dtype),
        grid=(rows // tb,),
        in_specs=[pl.BlockSpec((tb, w, cpad), lambda ti: (ti, 0, 0)),
                  pl.BlockSpec((1, cpad), lambda ti: (0, 0)),
                  pl.BlockSpec((1, cpad), lambda ti: (0, 0))],
        out_specs=pl.BlockSpec((tb, w, cpad), lambda ti: (ti, 0, 0)),
        compiler_params=pltpu.CompilerParams(dimension_semantics=("parallel",)),
    )(yf, scale, shift)
    return out.reshape(n, h, w, cpad)


def _pack_weight(w_oihw, cin_pad, cout_pad):
    # (Cout, Cin, 3, 3) -> (9*cin_pad, cout_pad), K index = (dy*3+dx)*cin_pad + ci.
    cout, cin, kh, kw = w_oihw.shape
    wm = jnp.transpose(w_oihw, (2, 3, 1, 0))                         # (3,3,Cin,Cout)
    wm = jnp.pad(wm, ((0, 0), (0, 0), (0, cin_pad - cin), (0, cout_pad - cout)))
    return wm.reshape(kh * kw * cin_pad, cout_pad).astype(jnp.bfloat16)


def _pad_vec(v, cpad):
    return jnp.pad(v.astype(jnp.float32), (0, cpad - v.shape[0]))


def down_forward(x_nchw, params):
    """Down.forward: MaxPool2d(2) -> (Conv3x3 -> BN(train stats) -> ReLU) x 2."""
    cout, cin = params["w1"].shape[0], params["w1"].shape[1]
    cpad = _round_up(cout, LANE)

    # NOTE: conv biases (params['b1'], params['b2']) are intentionally unused:
    # training-mode BatchNorm subtracts the per-channel batch mean, so the conv
    # bias cancels exactly in the forward output (the reference keeps it).
    w1p = _pack_weight(params["w1"], cin, cpad)        # (9*cin,  cpad)
    w2p = _pack_weight(params["w2"], cpad, cpad)       # (9*cpad, cpad)
    g1p, be1p = _pad_vec(params["g1"], cpad), _pad_vec(params["be1"], cpad)
    g2p, be2p = _pad_vec(params["g2"], cpad), _pad_vec(params["be2"], cpad)

    x = jnp.transpose(x_nchw, (0, 2, 3, 1))            # NCHW -> NHWC (layout glue)
    x = maxpool2x2(x)                                  # (N, Ho, Wo, Cin) bf16
    n, ho, wo, _ = x.shape
    count = n * ho * wo

    y1, st1 = conv3x3_bn_stats(x, w1p, cpad)           # bf16 y1 + f32 stats
    sc1, sh1 = _bn_scale_shift(st1, g1p, be1p, count)
    a1 = bn_relu_apply(y1, sc1, sh1, out_dtype=jnp.bfloat16)

    y2, st2 = conv3x3_bn_stats(a1, w2p, cpad)
    sc2, sh2 = _bn_scale_shift(st2, g2p, be2p, count)
    a2 = bn_relu_apply(y2, sc2, sh2, out_dtype=jnp.float32)

    out = a2[:, :, :, :cout]                           # drop channel padding
    return jnp.transpose(out, (0, 3, 1, 2))            # NHWC -> NCHW


# ---------------------------- pure-JAX reference ----------------------------- #

def _ref_down(x_nchw, p):
    x = jax.lax.reduce_window(x_nchw, -jnp.inf, jax.lax.max,
                              (1, 1, 2, 2), (1, 1, 2, 2), "VALID")

    def conv_bn_relu(x, w, b, g, be):
        y = jax.lax.conv_general_dilated(
            x, w, (1, 1), ((1, 1), (1, 1)),
            dimension_numbers=("NCHW", "OIHW", "NCHW"))
        y = y + b[None, :, None, None]
        mean = y.mean(axis=(0, 2, 3), keepdims=True)
        var = y.var(axis=(0, 2, 3), keepdims=True)      # biased, like BN training
        y = (y - mean) * jax.lax.rsqrt(var + EPS)
        y = y * g[None, :, None, None] + be[None, :, None, None]
        return jnp.maximum(y, 0.0)

    x = conv_bn_relu(x, p["w1"], p["b1"], p["g1"], p["be1"])
    x = conv_bn_relu(x, p["w2"], p["b2"], p["g2"], p["be2"])
    return x


# ----------------------------------- main ------------------------------------ #

def _init_params(key, in_channels, out_channels):
    ks = jax.random.split(key, 4)

    def conv_init(kw, kb, cin, cout):
        fan_in = cin * 9
        bound = 1.0 / jnp.sqrt(fan_in)
        w = jax.random.uniform(kw, (cout, cin, 3, 3), jnp.float32, -bound, bound)
        b = jax.random.uniform(kb, (cout,), jnp.float32, -bound, bound)
        return w, b

    w1, b1 = conv_init(ks[0], ks[1], in_channels, out_channels)
    w2, b2 = conv_init(ks[2], ks[3], out_channels, out_channels)
    return {
        "w1": w1, "b1": b1,
        "g1": jnp.ones((out_channels,), jnp.float32),
        "be1": jnp.zeros((out_channels,), jnp.float32),
        "w2": w2, "b2": b2,
        "g2": jnp.ones((out_channels,), jnp.float32),
        "be2": jnp.zeros((out_channels,), jnp.float32),
    }


if __name__ == "__main__":
    key = jax.random.PRNGKey(0)
    k_x, k_p = jax.random.split(key)

    N, Cin, H, W = 2, 4, 16, 16
    Cout = 8
    x = jax.random.normal(k_x, (N, Cin, H, W), jnp.float32)
    params = _init_params(k_p, Cin, Cout)

    fwd = jax.jit(functools.partial(down_forward, params=params))
    out = jax.block_until_ready(fwd(x))
    assert out.shape == (N, Cout, H // 2, W // 2), out.shape

    ref = jax.block_until_ready(_ref_down(x, params))
    # bf16 MXU path with bf16 intermediate activations, f32 accumulation / stats.
    err = float(jnp.max(jnp.abs(out - ref)))
    assert jnp.allclose(out, ref, rtol=5e-2, atol=5e-2), f"max|err|={err}"

    print("KERNEL_OK")
</pallas_src>

<mosaic_0001>
module attributes {stable_mosaic.version = 11 : i64} {
  func.func @_maxpool_kernel(%arg0: i32, %arg1: i32, %arg2: memref<1x16x16x4xf32, #tpu.memory_space<vmem>>, %arg3: memref<1x8x8x4xbf16, #tpu.memory_space<vmem>>) attributes {dimension_semantics = [#tpu.dimension_semantics<parallel>, #tpu.dimension_semantics<parallel>], iteration_bounds = array<i64: 2, 1>, scalar_prefetch = 0 : i64, scratch_operands = 0 : i64, tpu.core_type = #tpu.core_type<tc>, window_params = [{transform_indices = @transform_0, window_bounds = array<i64: 1, 16, 16, 4>}, {transform_indices = @transform_1, window_bounds = array<i64: 1, 8, 8, 4>}]} {
    %c0 = arith.constant 0 : index
    %c0_0 = arith.constant 0 : index
    %c0_1 = arith.constant 0 : index
    %c0_2 = arith.constant 0 : index
    %0 = vector.load %arg2[%c0, %c0_0, %c0_1, %c0_2] : memref<1x16x16x4xf32, #tpu.memory_space<vmem>>, vector<1x16x16x4xf32>
    %1 = vector.shape_cast %0 : vector<1x16x16x4xf32> to vector<8x2x8x2x4xf32>
    %2 = vector.extract_strided_slice %1 {offsets = [0, 0, 0, 0, 0], sizes = [8, 1, 8, 2, 4], strides = [1, 1, 1, 1, 1]} : vector<8x2x8x2x4xf32> to vector<8x1x8x2x4xf32>
    %3 = vector.shape_cast %2 : vector<8x1x8x2x4xf32> to vector<8x8x2x4xf32>
    %4 = vector.extract_strided_slice %1 {offsets = [0, 1, 0, 0, 0], sizes = [8, 1, 8, 2, 4], strides = [1, 1, 1, 1, 1]} : vector<8x2x8x2x4xf32> to vector<8x1x8x2x4xf32>
    %5 = vector.shape_cast %4 : vector<8x1x8x2x4xf32> to vector<8x8x2x4xf32>
    %6 = arith.maximumf %3, %5 : vector<8x8x2x4xf32>
    %7 = vector.extract_strided_slice %6 {offsets = [0, 0, 0, 0], sizes = [8, 8, 1, 4], strides = [1, 1, 1, 1]} : vector<8x8x2x4xf32> to vector<8x8x1x4xf32>
    %8 = vector.shape_cast %7 : vector<8x8x1x4xf32> to vector<8x8x4xf32>
    %9 = vector.extract_strided_slice %6 {offsets = [0, 0, 1, 0], sizes = [8, 8, 1, 4], strides = [1, 1, 1, 1]} : vector<8x8x2x4xf32> to vector<8x8x1x4xf32>
    %10 = vector.shape_cast %9 : vector<8x8x1x4xf32> to vector<8x8x4xf32>
    %11 = arith.maximumf %8, %10 : vector<8x8x4xf32>
    %12 = vector.shape_cast %11 : vector<8x8x4xf32> to vector<1x8x8x4xf32>
    %13 = arith.truncf %12 : vector<1x8x8x4xf32> to vector<1x8x8x4xbf16>
    %c0_3 = arith.constant 0 : index
    %c0_4 = arith.constant 0 : index
    %c0_5 = arith.constant 0 : index
    %c0_6 = arith.constant 0 : index
    %14 = vector.load %arg3[%c0_3, %c0_4, %c0_5, %c0_6] : memref<1x8x8x4xbf16, #tpu.memory_space<vmem>>, vector<1x8x8x4xbf16>
    tpu.vector_store %arg3[%c0_3, %c0_4, %c0_5, %c0_6], %13 {strides = array<i32>} : memref<1x8x8x4xbf16, #tpu.memory_space<vmem>>, vector<1x8x8x4xbf16>,
    return
  }
  func.func @transform_0(%arg0: i32, %arg1: i32) -> (i32, i32, i32, i32) {
    %c0_i32 = arith.constant 0 : i32
    %c0_i32_0 = arith.constant 0 : i32
    %c0_i32_1 = arith.constant 0 : i32
    return %arg0, %arg1, %c0_i32, %c0_i32_0 : i32, i32, i32, i32
  }
  func.func @transform_1(%arg0: i32, %arg1: i32) -> (i32, i32, i32, i32) {
    %c0_i32 = arith.constant 0 : i32
    %c0_i32_0 = arith.constant 0 : i32
    %c0_i32_1 = arith.constant 0 : i32
    return %arg0, %arg1, %c0_i32, %c0_i32_0 : i32, i32, i32, i32
  }
}

module attributes {stable_mosaic.version = 11 : i64} {
  func.func @_conv_bn_stats_kernel(%arg0: i32, %arg1: i32, %arg2: memref<1x8x10x4xbf16, #tpu.memory_space<vmem>>, %arg3: memref<1x1x10x4xbf16, #tpu.memory_space<vmem>>, %arg4: memref<1x1x10x4xbf16, #tpu.memory_space<vmem>>, %arg5: memref<36x128xbf16, #tpu.memory_space<vmem>>, %arg6: memref<1x8x8x128xbf16, #tpu.memory_space<vmem>>, %arg7: memref<1x1x2x128xf32, #tpu.memory_space<vmem>>) attributes {dimension_semantics = [#tpu.dimension_semantics<parallel>, #tpu.dimension_semantics<parallel>], iteration_bounds = array<i64: 2, 1>, scalar_prefetch = 0 : i64, scratch_operands = 0 : i64, tpu.core_type = #tpu.core_type<tc>, window_params = [{transform_indices = @transform_0, window_bounds = array<i64: 1, 8, 10, 4>}, {transform_indices = @transform_1, window_bounds = array<i64: 1, 1, 10, 4>}, {transform_indices = @transform_2, window_bounds = array<i64: 1, 1, 10, 4>}, {pipeline_mode = #tpu.pipeline_mode<synchronous>, transform_indices = @transform_3, window_bounds = array<i64: 36, 128>}, {transform_indices = @transform_4, window_bounds = array<i64: 1, 8, 8, 128>}, {transform_indices = @transform_5, window_bounds = array<i64: 1, 1, 2, 128>}]} {
    %c0 = arith.constant 0 : index
    %c0_0 = arith.constant 0 : index
    %c0_1 = arith.constant 0 : index
    %c0_2 = arith.constant 0 : index
    %0 = vector.load %arg2[%c0, %c0_0, %c0_1, %c0_2] : memref<1x8x10x4xbf16, #tpu.memory_space<vmem>>, vector<1x8x10x4xbf16>
    %1 = vector.shape_cast %0 : vector<1x8x10x4xbf16> to vector<8x10x4xbf16>
    %c0_3 = arith.constant 0 : index
    %c0_4 = arith.constant 0 : index
    %c0_5 = arith.constant 0 : index
    %c0_6 = arith.constant 0 : index
    %2 = vector.load %arg3[%c0_3, %c0_4, %c0_5, %c0_6] : memref<1x1x10x4xbf16, #tpu.memory_space<vmem>>, vector<1x1x10x4xbf16>
    %3 = vector.shape_cast %2 : vector<1x1x10x4xbf16> to vector<1x10x4xbf16>
    %c0_7 = arith.constant 0 : index
    %c0_8 = arith.constant 0 : index
    %c0_9 = arith.constant 0 : index
    %c0_10 = arith.constant 0 : index
    %4 = vector.load %arg4[%c0_7, %c0_8, %c0_9, %c0_10] : memref<1x1x10x4xbf16, #tpu.memory_space<vmem>>, vector<1x1x10x4xbf16>
    %5 = vector.shape_cast %4 : vector<1x1x10x4xbf16> to vector<1x10x4xbf16>
    %6 = tpu.concatenate %1, %3, %5 in 0 : vector<8x10x4xbf16>, vector<1x10x4xbf16>, vector<1x10x4xbf16> -> vector<10x10x4xbf16>
    %7 = vector.extract_strided_slice %6 {offsets = [0, 0, 0], sizes = [8, 8, 4], strides = [1, 1, 1]} : vector<10x10x4xbf16> to vector<8x8x4xbf16>
    %8 = vector.extract_strided_slice %6 {offsets = [0, 1, 0], sizes = [8, 8, 4], strides = [1, 1, 1]} : vector<10x10x4xbf16> to vector<8x8x4xbf16>
    %9 = vector.extract_strided_slice %6 {offsets = [0, 2, 0], sizes = [8, 8, 4], strides = [1, 1, 1]} : vector<10x10x4xbf16> to vector<8x8x4xbf16>
    %10 = vector.extract_strided_slice %6 {offsets = [1, 0, 0], sizes = [8, 8, 4], strides = [1, 1, 1]} : vector<10x10x4xbf16> to vector<8x8x4xbf16>
    %11 = vector.extract_strided_slice %6 {offsets = [1, 1, 0], sizes = [8, 8, 4], strides = [1, 1, 1]} : vector<10x10x4xbf16> to vector<8x8x4xbf16>
    %12 = vector.extract_strided_slice %6 {offsets = [1, 2, 0], sizes = [8, 8, 4], strides = [1, 1, 1]} : vector<10x10x4xbf16> to vector<8x8x4xbf16>
    %13 = vector.extract_strided_slice %6 {offsets = [2, 0, 0], sizes = [8, 8, 4], strides = [1, 1, 1]} : vector<10x10x4xbf16> to vector<8x8x4xbf16>
    %14 = vector.extract_strided_slice %6 {offsets = [2, 1, 0], sizes = [8, 8, 4], strides = [1, 1, 1]} : vector<10x10x4xbf16> to vector<8x8x4xbf16>
    %15 = vector.extract_strided_slice %6 {offsets = [2, 2, 0], sizes = [8, 8, 4], strides = [1, 1, 1]} : vector<10x10x4xbf16> to vector<8x8x4xbf16>
    %16 = tpu.concatenate %7, %8, %9, %10, %11, %12, %13, %14, %15 in 2 : vector<8x8x4xbf16>, vector<8x8x4xbf16>, vector<8x8x4xbf16>, vector<8x8x4xbf16>, vector<8x8x4xbf16>, vector<8x8x4xbf16>, vector<8x8x4xbf16>, vector<8x8x4xbf16>, vector<8x8x4xbf16> -> vector<8x8x36xbf16>
    %17 = vector.shape_cast %16 : vector<8x8x36xbf16> to vector<64x36xbf16>
    %c0_11 = arith.constant 0 : index
    %c0_12 = arith.constant 0 : index
    %18 = vector.load %arg5[%c0_11, %c0_12] : memref<36x128xbf16, #tpu.memory_space<vmem>>, vector<36x128xbf16>
    %cst = arith.constant dense<0.000000e+00> : vector<64x128xf32>
    %19 = tpu.matmul %17, %18, %cst {dimension_numbers = #tpu.dot_dimension_numbers<[1], [0], [0], [1], [0, 0, 1, 1], [], []>} : vector<64x36xbf16>, vector<36x128xbf16>, vector<64x128xf32> -> vector<64x128xf32>
    %20 = vector.shape_cast %19 : vector<64x128xf32> to vector<1x8x8x128xf32>
    %21 = arith.truncf %20 : vector<1x8x8x128xf32> to vector<1x8x8x128xbf16>
    %c0_13 = arith.constant 0 : index
    %c0_14 = arith.constant 0 : index
    %c0_15 = arith.constant 0 : index
    %c0_16 = arith.constant 0 : index
    %22 = vector.load %arg6[%c0_13, %c0_14, %c0_15, %c0_16] : memref<1x8x8x128xbf16, #tpu.memory_space<vmem>>, vector<1x8x8x128xbf16>
    tpu.vector_store %arg6[%c0_13, %c0_14, %c0_15, %c0_16], %21 {strides = array<i32>} : memref<1x8x8x128xbf16, #tpu.memory_space<vmem>>, vector<1x8x8x128xbf16>,
    %cst_17 = arith.constant dense<0.000000e+00> : vector<128xf32>
    %23 = vector.multi_reduction <add>, %19, %cst_17 [0] : vector<64x128xf32> to vector<128xf32>
    %24 = vector.shape_cast %23 : vector<128xf32> to vector<1x128xf32>
    %25 = arith.mulf %19, %19 : vector<64x128xf32>
    %cst_18 = arith.constant dense<0.000000e+00> : vector<128xf32>
    %26 = vector.multi_reduction <add>, %25, %cst_18 [0] : vector<64x128xf32> to vector<128xf32>
    %27 = vector.shape_cast %26 : vector<128xf32> to vector<1x128xf32>
    %28 = tpu.concatenate %24, %27 in 0 : vector<1x128xf32>, vector<1x128xf32> -> vector<2x128xf32>
    %29 = vector.shape_cast %28 : vector<2x128xf32> to vector<1x1x2x128xf32>
    %c0_19 = arith.constant 0 : index
    %c0_20 = arith.constant 0 : index
    %c0_21 = arith.constant 0 : index
    %c0_22 = arith.constant 0 : index
    %30 = vector.load %arg7[%c0_19, %c0_20, %c0_21, %c0_22] : memref<1x1x2x128xf32, #tpu.memory_space<vmem>>, vector<1x1x2x128xf32>
    tpu.vector_store %arg7[%c0_19, %c0_20, %c0_21, %c0_22], %29 {strides = array<i32>} : memref<1x1x2x128xf32, #tpu.memory_space<vmem>>, vector<1x1x2x128xf32>,
    return
  }
  func.func @transform_0(%arg0: i32, %arg1: i32) -> (i32, i32, i32, i32) {
    %c0_i32 = arith.constant 0 : i32
    %c0_i32_0 = arith.constant 0 : i32
    %c0_i32_1 = arith.constant 0 : i32
    return %arg0, %arg1, %c0_i32, %c0_i32_0 : i32, i32, i32, i32
  }
  func.func @transform_1(%arg0: i32, %arg1: i32) -> (i32, i32, i32, i32) {
    %c8_i32 = arith.constant 8 : i32
    %0 = arith.muli %arg1, %c8_i32 : i32
    %c8_i32_0 = arith.constant 8 : i32
    %1 = arith.addi %0, %c8_i32_0 : i32
    %c0_i32 = arith.constant 0 : i32
    %c0_i32_1 = arith.constant 0 : i32
    %c0_i32_2 = arith.constant 0 : i32
    return %arg0, %1, %c0_i32, %c0_i32_1 : i32, i32, i32, i32
  }
  func.func @transform_2(%arg0: i32, %arg1: i32) -> (i32, i32, i32, i32) {
    %c8_i32 = arith.constant 8 : i32
    %0 = arith.muli %arg1, %c8_i32 : i32
    %c8_i32_0 = arith.constant 8 : i32
    %1 = arith.addi %0, %c8_i32_0 : i32
    %c1_i32 = arith.constant 1 : i32
    %2 = arith.addi %1, %c1_i32 : i32
    %c0_i32 = arith.constant 0 : i32
    %c0_i32_1 = arith.constant 0 : i32
    %c0_i32_2 = arith.constant 0 : i32
    return %arg0, %2, %c0_i32, %c0_i32_1 : i32, i32, i32, i32
  }
  func.func @transform_3(%arg0: i32, %arg1: i32) -> (i32, i32) {
    %c0_i32 = arith.constant 0 : i32
    %c0_i32_0 = arith.constant 0 : i32
    %c0_i32_1 = arith.constant 0 : i32
    return %c0_i32, %c0_i32_0 : i32, i32
  }
  func.func @transform_4(%arg0: i32, %arg1: i32) -> (i32, i32, i32, i32) {
    %c0_i32 = arith.constant 0 : i32
    %c0_i32_0 = arith.constant 0 : i32
    %c0_i32_1 = arith.constant 0 : i32
    return %arg0, %arg1, %c0_i32, %c0_i32_0 : i32, i32, i32, i32
  }
  func.func @transform_5(%arg0: i32, %arg1: i32) -> (i32, i32, i32, i32) {
    %c0_i32 = arith.constant 0 : i32
    %c0_i32_0 = arith.constant 0 : i32
    %c0_i32_1 = arith.constant 0 : i32
    return %arg0, %arg1, %c0_i32, %c0_i32_0 : i32, i32, i32, i32
  }
}

module attributes {stable_mosaic.version = 11 : i64} {
  func.func @_bn_relu_kernel(%arg0: i32, %arg1: memref<16x8x128xbf16, #tpu.memory_space<vmem>>, %arg2: memref<1x128xf32, #tpu.memory_space<vmem>>, %arg3: memref<1x128xf32, #tpu.memory_space<vmem>>, %arg4: memref<16x8x128xbf16, #tpu.memory_space<vmem>>) attributes {dimension_semantics = [#tpu.dimension_semantics<parallel>], iteration_bounds = array<i64: 1>, scalar_prefetch = 0 : i64, scratch_operands = 0 : i64, tpu.core_type = #tpu.core_type<tc>, window_params = [{transform_indices = @transform_0, window_bounds = array<i64: 16, 8, 128>}, {pipeline_mode = #tpu.pipeline_mode<synchronous>, transform_indices = @transform_1, window_bounds = array<i64: 1, 128>}, {pipeline_mode = #tpu.pipeline_mode<synchronous>, transform_indices = @transform_2, window_bounds = array<i64: 1, 128>}, {transform_indices = @transform_3, window_bounds = array<i64: 16, 8, 128>}]} {
    %c0 = arith.constant 0 : index
    %c0_0 = arith.constant 0 : index
    %c0_1 = arith.constant 0 : index
    %0 = vector.load %arg1[%c0, %c0_0, %c0_1] : memref<16x8x128xbf16, #tpu.memory_space<vmem>>, vector<16x8x128xbf16>
    %1 = arith.extf %0 : vector<16x8x128xbf16> to vector<16x8x128xf32>
    %c0_2 = arith.constant 0 : index
    %c0_3 = arith.constant 0 : index
    %2 = vector.load %arg2[%c0_2, %c0_3] : memref<1x128xf32, #tpu.memory_space<vmem>>, vector<1x128xf32>
    %3 = vector.shape_cast %2 : vector<1x128xf32> to vector<1x1x128xf32>
    %4 = vector.broadcast %3 : vector<1x1x128xf32> to vector<16x8x128xf32>
    %5 = arith.mulf %1, %4 : vector<16x8x128xf32>
    %c0_4 = arith.constant 0 : index
    %c0_5 = arith.constant 0 : index
    %6 = vector.load %arg3[%c0_4, %c0_5] : memref<1x128xf32, #tpu.memory_space<vmem>>, vector<1x128xf32>
    %7 = vector.shape_cast %6 : vector<1x128xf32> to vector<1x1x128xf32>
    %8 = vector.broadcast %7 : vector<1x1x128xf32> to vector<16x8x128xf32>
    %9 = arith.addf %5, %8 : vector<16x8x128xf32>
    %cst = arith.constant 0.000000e+00 : f32
    %10 = vector.broadcast %cst : f32 to vector<16x8x128xf32>
    %11 = arith.maximumf %9, %10 : vector<16x8x128xf32>
    %12 = arith.truncf %11 : vector<16x8x128xf32> to vector<16x8x128xbf16>
    %c0_6 = arith.constant 0 : index
    %c0_7 = arith.constant 0 : index
    %c0_8 = arith.constant 0 : index
    %13 = vector.load %arg4[%c0_6, %c0_7, %c0_8] : memref<16x8x128xbf16, #tpu.memory_space<vmem>>, vector<16x8x128xbf16>
    tpu.vector_store %arg4[%c0_6, %c0_7, %c0_8], %12 {strides = array<i32>} : memref<16x8x128xbf16, #tpu.memory_space<vmem>>, vector<16x8x128xbf16>,
    return
  }
  func.func @transform_0(%arg0: i32) -> (i32, i32, i32) {
    %c0_i32 = arith.constant 0 : i32
    %c0_i32_0 = arith.constant 0 : i32
    %c0_i32_1 = arith.constant 0 : i32
    return %arg0, %c0_i32, %c0_i32_0 : i32, i32, i32
  }
  func.func @transform_1(%arg0: i32) -> (i32, i32) {
    %c0_i32 = arith.constant 0 : i32
    %c0_i32_0 = arith.constant 0 : i32
    %c0_i32_1 = arith.constant 0 : i32
    return %c0_i32, %c0_i32_0 : i32, i32
  }
  func.func @transform_2(%arg0: i32) -> (i32, i32) {
    %c0_i32 = arith.constant 0 : i32
    %c0_i32_0 = arith.constant 0 : i32
    %c0_i32_1 = arith.constant 0 : i32
    return %c0_i32, %c0_i32_0 : i32, i32
  }
  func.func @transform_3(%arg0: i32) -> (i32, i32, i32) {
    %c0_i32 = arith.constant 0 : i32
    %c0_i32_0 = arith.constant 0 : i32
    %c0_i32_1 = arith.constant 0 : i32
    return %arg0, %c0_i32, %c0_i32_0 : i32, i32, i32
  }
}

module attributes {stable_mosaic.version = 11 : i64} {
  func.func @_conv_bn_stats_kernel(%arg0: i32, %arg1: i32, %arg2: memref<1x8x10x128xbf16, #tpu.memory_space<vmem>>, %arg3: memref<1x1x10x128xbf16, #tpu.memory_space<vmem>>, %arg4: memref<1x1x10x128xbf16, #tpu.memory_space<vmem>>, %arg5: memref<1152x128xbf16, #tpu.memory_space<vmem>>, %arg6: memref<1x8x8x128xbf16, #tpu.memory_space<vmem>>, %arg7: memref<1x1x2x128xf32, #tpu.memory_space<vmem>>) attributes {dimension_semantics = [#tpu.dimension_semantics<parallel>, #tpu.dimension_semantics<parallel>], iteration_bounds = array<i64: 2, 1>, scalar_prefetch = 0 : i64, scratch_operands = 0 : i64, tpu.core_type = #tpu.core_type<tc>, window_params = [{transform_indices = @transform_0, window_bounds = array<i64: 1, 8, 10, 128>}, {transform_indices = @transform_1, window_bounds = array<i64: 1, 1, 10, 128>}, {transform_indices = @transform_2, window_bounds = array<i64: 1, 1, 10, 128>}, {pipeline_mode = #tpu.pipeline_mode<synchronous>, transform_indices = @transform_3, window_bounds = array<i64: 1152, 128>}, {transform_indices = @transform_4, window_bounds = array<i64: 1, 8, 8, 128>}, {transform_indices = @transform_5, window_bounds = array<i64: 1, 1, 2, 128>}]} {
    %c0 = arith.constant 0 : index
    %c0_0 = arith.constant 0 : index
    %c0_1 = arith.constant 0 : index
    %c0_2 = arith.constant 0 : index
    %0 = vector.load %arg2[%c0, %c0_0, %c0_1, %c0_2] : memref<1x8x10x128xbf16, #tpu.memory_space<vmem>>, vector<1x8x10x128xbf16>
    %1 = vector.shape_cast %0 : vector<1x8x10x128xbf16> to vector<8x10x128xbf16>
    %c0_3 = arith.constant 0 : index
    %c0_4 = arith.constant 0 : index
    %c0_5 = arith.constant 0 : index
    %c0_6 = arith.constant 0 : index
    %2 = vector.load %arg3[%c0_3, %c0_4, %c0_5, %c0_6] : memref<1x1x10x128xbf16, #tpu.memory_space<vmem>>, vector<1x1x10x128xbf16>
    %3 = vector.shape_cast %2 : vector<1x1x10x128xbf16> to vector<1x10x128xbf16>
    %c0_7 = arith.constant 0 : index
    %c0_8 = arith.constant 0 : index
    %c0_9 = arith.constant 0 : index
    %c0_10 = arith.constant 0 : index
    %4 = vector.load %arg4[%c0_7, %c0_8, %c0_9, %c0_10] : memref<1x1x10x128xbf16, #tpu.memory_space<vmem>>, vector<1x1x10x128xbf16>
    %5 = vector.shape_cast %4 : vector<1x1x10x128xbf16> to vector<1x10x128xbf16>
    %6 = tpu.concatenate %1, %3, %5 in 0 : vector<8x10x128xbf16>, vector<1x10x128xbf16>, vector<1x10x128xbf16> -> vector<10x10x128xbf16>
    %7 = vector.extract_strided_slice %6 {offsets = [0, 0, 0], sizes = [8, 8, 128], strides = [1, 1, 1]} : vector<10x10x128xbf16> to vector<8x8x128xbf16>
    %8 = vector.extract_strided_slice %6 {offsets = [0, 1, 0], sizes = [8, 8, 128], strides = [1, 1, 1]} : vector<10x10x128xbf16> to vector<8x8x128xbf16>
    %9 = vector.extract_strided_slice %6 {offsets = [0, 2, 0], sizes = [8, 8, 128], strides = [1, 1, 1]} : vector<10x10x128xbf16> to vector<8x8x128xbf16>
    %10 = vector.extract_strided_slice %6 {offsets = [1, 0, 0], sizes = [8, 8, 128], strides = [1, 1, 1]} : vector<10x10x128xbf16> to vector<8x8x128xbf16>
    %11 = vector.extract_strided_slice %6 {offsets = [1, 1, 0], sizes = [8, 8, 128], strides = [1, 1, 1]} : vector<10x10x128xbf16> to vector<8x8x128xbf16>
    %12 = vector.extract_strided_slice %6 {offsets = [1, 2, 0], sizes = [8, 8, 128], strides = [1, 1, 1]} : vector<10x10x128xbf16> to vector<8x8x128xbf16>
    %13 = vector.extract_strided_slice %6 {offsets = [2, 0, 0], sizes = [8, 8, 128], strides = [1, 1, 1]} : vector<10x10x128xbf16> to vector<8x8x128xbf16>
    %14 = vector.extract_strided_slice %6 {offsets = [2, 1, 0], sizes = [8, 8, 128], strides = [1, 1, 1]} : vector<10x10x128xbf16> to vector<8x8x128xbf16>
    %15 = vector.extract_strided_slice %6 {offsets = [2, 2, 0], sizes = [8, 8, 128], strides = [1, 1, 1]} : vector<10x10x128xbf16> to vector<8x8x128xbf16>
    %16 = tpu.concatenate %7, %8, %9, %10, %11, %12, %13, %14, %15 in 2 : vector<8x8x128xbf16>, vector<8x8x128xbf16>, vector<8x8x128xbf16>, vector<8x8x128xbf16>, vector<8x8x128xbf16>, vector<8x8x128xbf16>, vector<8x8x128xbf16>, vector<8x8x128xbf16>, vector<8x8x128xbf16> -> vector<8x8x1152xbf16>
    %17 = vector.shape_cast %16 : vector<8x8x1152xbf16> to vector<64x1152xbf16>
    %c0_11 = arith.constant 0 : index
    %c0_12 = arith.constant 0 : index
    %18 = vector.load %arg5[%c0_11, %c0_12] : memref<1152x128xbf16, #tpu.memory_space<vmem>>, vector<1152x128xbf16>
    %cst = arith.constant dense<0.000000e+00> : vector<64x128xf32>
    %19 = tpu.matmul %17, %18, %cst {dimension_numbers = #tpu.dot_dimension_numbers<[1], [0], [0], [1], [0, 0, 1, 1], [], []>} : vector<64x1152xbf16>, vector<1152x128xbf16>, vector<64x128xf32> -> vector<64x128xf32>
    %20 = vector.shape_cast %19 : vector<64x128xf32> to vector<1x8x8x128xf32>
    %21 = arith.truncf %20 : vector<1x8x8x128xf32> to vector<1x8x8x128xbf16>
    %c0_13 = arith.constant 0 : index
    %c0_14 = arith.constant 0 : index
    %c0_15 = arith.constant 0 : index
    %c0_16 = arith.constant 0 : index
    %22 = vector.load %arg6[%c0_13, %c0_14, %c0_15, %c0_16] : memref<1x8x8x128xbf16, #tpu.memory_space<vmem>>, vector<1x8x8x128xbf16>
    tpu.vector_store %arg6[%c0_13, %c0_14, %c0_15, %c0_16], %21 {strides = array<i32>} : memref<1x8x8x128xbf16, #tpu.memory_space<vmem>>, vector<1x8x8x128xbf16>,
    %cst_17 = arith.constant dense<0.000000e+00> : vector<128xf32>
    %23 = vector.multi_reduction <add>, %19, %cst_17 [0] : vector<64x128xf32> to vector<128xf32>
    %24 = vector.shape_cast %23 : vector<128xf32> to vector<1x128xf32>
    %25 = arith.mulf %19, %19 : vector<64x128xf32>
    %cst_18 = arith.constant dense<0.000000e+00> : vector<128xf32>
    %26 = vector.multi_reduction <add>, %25, %cst_18 [0] : vector<64x128xf32> to vector<128xf32>
    %27 = vector.shape_cast %26 : vector<128xf32> to vector<1x128xf32>
    %28 = tpu.concatenate %24, %27 in 0 : vector<1x128xf32>, vector<1x128xf32> -> vector<2x128xf32>
    %29 = vector.shape_cast %28 : vector<2x128xf32> to vector<1x1x2x128xf32>
    %c0_19 = arith.constant 0 : index
    %c0_20 = arith.constant 0 : index
    %c0_21 = arith.constant 0 : index
    %c0_22 = arith.constant 0 : index
    %30 = vector.load %arg7[%c0_19, %c0_20, %c0_21, %c0_22] : memref<1x1x2x128xf32, #tpu.memory_space<vmem>>, vector<1x1x2x128xf32>
    tpu.vector_store %arg7[%c0_19, %c0_20, %c0_21, %c0_22], %29 {strides = array<i32>} : memref<1x1x2x128xf32, #tpu.memory_space<vmem>>, vector<1x1x2x128xf32>,
    return
  }
  func.func @transform_0(%arg0: i32, %arg1: i32) -> (i32, i32, i32, i32) {
    %c0_i32 = arith.constant 0 : i32
    %c0_i32_0 = arith.constant 0 : i32
    %c0_i32_1 = arith.constant 0 : i32
    return %arg0, %arg1, %c0_i32, %c0_i32_0 : i32, i32, i32, i32
  }
  func.func @transform_1(%arg0: i32, %arg1: i32) -> (i32, i32, i32, i32) {
    %c8_i32 = arith.constant 8 : i32
    %0 = arith.muli %arg1, %c8_i32 : i32
    %c8_i32_0 = arith.constant 8 : i32
    %1 = arith.addi %0, %c8_i32_0 : i32
    %c0_i32 = arith.constant 0 : i32
    %c0_i32_1 = arith.constant 0 : i32
    %c0_i32_2 = arith.constant 0 : i32
    return %arg0, %1, %c0_i32, %c0_i32_1 : i32, i32, i32, i32
  }
  func.func @transform_2(%arg0: i32, %arg1: i32) -> (i32, i32, i32, i32) {
    %c8_i32 = arith.constant 8 : i32
    %0 = arith.muli %arg1, %c8_i32 : i32
    %c8_i32_0 = arith.constant 8 : i32
    %1 = arith.addi %0, %c8_i32_0 : i32
    %c1_i32 = arith.constant 1 : i32
    %2 = arith.addi %1, %c1_i32 : i32
    %c0_i32 = arith.constant 0 : i32
    %c0_i32_1 = arith.constant 0 : i32
    %c0_i32_2 = arith.constant 0 : i32
    return %arg0, %2, %c0_i32, %c0_i32_1 : i32, i32, i32, i32
  }
  func.func @transform_3(%arg0: i32, %arg1: i32) -> (i32, i32) {
    %c0_i32 = arith.constant 0 : i32
    %c0_i32_0 = arith.constant 0 : i32
    %c0_i32_1 = arith.constant 0 : i32
    return %c0_i32, %c0_i32_0 : i32, i32
  }
  func.func @transform_4(%arg0: i32, %arg1: i32) -> (i32, i32, i32, i32) {
    %c0_i32 = arith.constant 0 : i32
    %c0_i32_0 = arith.constant 0 : i32
    %c0_i32_1 = arith.constant 0 : i32
    return %arg0, %arg1, %c0_i32, %c0_i32_0 : i32, i32, i32, i32
  }
  func.func @transform_5(%arg0: i32, %arg1: i32) -> (i32, i32, i32, i32) {
    %c0_i32 = arith.constant 0 : i32
    %c0_i32_0 = arith.constant 0 : i32
    %c0_i32_1 = arith.constant 0 : i32
    return %arg0, %arg1, %c0_i32, %c0_i32_0 : i32, i32, i32, i32
  }
}

module attributes {stable_mosaic.version = 11 : i64} {
  func.func @_bn_relu_kernel(%arg0: i32, %arg1: memref<16x8x128xbf16, #tpu.memory_space<vmem>>, %arg2: memref<1x128xf32, #tpu.memory_space<vmem>>, %arg3: memref<1x128xf32, #tpu.memory_space<vmem>>, %arg4: memref<16x8x128xf32, #tpu.memory_space<vmem>>) attributes {dimension_semantics = [#tpu.dimension_semantics<parallel>], iteration_bounds = array<i64: 1>, scalar_prefetch = 0 : i64, scratch_operands = 0 : i64, tpu.core_type = #tpu.core_type<tc>, window_params = [{transform_indices = @transform_0, window_bounds = array<i64: 16, 8, 128>}, {pipeline_mode = #tpu.pipeline_mode<synchronous>, transform_indices = @transform_1, window_bounds = array<i64: 1, 128>}, {pipeline_mode = #tpu.pipeline_mode<synchronous>, transform_indices = @transform_2, window_bounds = array<i64: 1, 128>}, {transform_indices = @transform_3, window_bounds = array<i64: 16, 8, 128>}]} {
    %c0 = arith.constant 0 : index
    %c0_0 = arith.constant 0 : index
    %c0_1 = arith.constant 0 : index
    %0 = vector.load %arg1[%c0, %c0_0, %c0_1] : memref<16x8x128xbf16, #tpu.memory_space<vmem>>, vector<16x8x128xbf16>
    %1 = arith.extf %0 : vector<16x8x128xbf16> to vector<16x8x128xf32>
    %c0_2 = arith.constant 0 : index
    %c0_3 = arith.constant 0 : index
    %2 = vector.load %arg2[%c0_2, %c0_3] : memref<1x128xf32, #tpu.memory_space<vmem>>, vector<1x128xf32>
    %3 = vector.shape_cast %2 : vector<1x128xf32> to vector<1x1x128xf32>
    %4 = vector.broadcast %3 : vector<1x1x128xf32> to vector<16x8x128xf32>
    %5 = arith.mulf %1, %4 : vector<16x8x128xf32>
    %c0_4 = arith.constant 0 : index
    %c0_5 = arith.constant 0 : index
    %6 = vector.load %arg3[%c0_4, %c0_5] : memref<1x128xf32, #tpu.memory_space<vmem>>, vector<1x128xf32>
    %7 = vector.shape_cast %6 : vector<1x128xf32> to vector<1x1x128xf32>
    %8 = vector.broadcast %7 : vector<1x1x128xf32> to vector<16x8x128xf32>
    %9 = arith.addf %5, %8 : vector<16x8x128xf32>
    %cst = arith.constant 0.000000e+00 : f32
    %10 = vector.broadcast %cst : f32 to vector<16x8x128xf32>
    %11 = arith.maximumf %9, %10 : vector<16x8x128xf32>
    %c0_6 = arith.constant 0 : index
    %c0_7 = arith.constant 0 : index
    %c0_8 = arith.constant 0 : index
    %12 = vector.load %arg4[%c0_6, %c0_7, %c0_8] : memref<16x8x128xf32, #tpu.memory_space<vmem>>, vector<16x8x128xf32>
    tpu.vector_store %arg4[%c0_6, %c0_7, %c0_8], %11 {strides = array<i32>} : memref<16x8x128xf32, #tpu.memory_space<vmem>>, vector<16x8x128xf32>,
    return
  }
  func.func @transform_0(%arg0: i32) -> (i32, i32, i32) {
    %c0_i32 = arith.constant 0 : i32
    %c0_i32_0 = arith.constant 0 : i32
    %c0_i32_1 = arith.constant 0 : i32
    return %arg0, %c0_i32, %c0_i32_0 : i32, i32, i32
  }
  func.func @transform_1(%arg0: i32) -> (i32, i32) {
    %c0_i32 = arith.constant 0 : i32
    %c0_i32_0 = arith.constant 0 : i32
    %c0_i32_1 = arith.constant 0 : i32
    return %c0_i32, %c0_i32_0 : i32, i32
  }
  func.func @transform_2(%arg0: i32) -> (i32, i32) {
    %c0_i32 = arith.constant 0 : i32
    %c0_i32_0 = arith.constant 0 : i32
    %c0_i32_1 = arith.constant 0 : i32
    return %c0_i32, %c0_i32_0 : i32, i32
  }
  func.func @transform_3(%arg0: i32) -> (i32, i32, i32) {
    %c0_i32 = arith.constant 0 : i32
    %c0_i32_0 = arith.constant 0 : i32
    %c0_i32_1 = arith.constant 0 : i32
    return %arg0, %c0_i32, %c0_i32_0 : i32, i32, i32
  }
}

</mosaic_0001>

<llo_original>
// kernel: down_forward.7
$region0: #{down_forward.7}
  #allocation0 [shape = 'u32[]', space=smem, size = 0x4, offset = 0x4, fixed_abs, tag = 'smem constant byte address 0x4 - core index']
  #allocation1 [shape = 'u32[144,128]{1,0:T(1,128)}', space=vmem, size = 0x12000, scoped, tag = 'internal scratch']
  %s0 = inlined_call_operand.vmem [shape: bf16[16,8,128], index: 0, kind: input, shape index: {}]
  %s1 = inlined_call_operand.vmem [shape: f32[1,128], index: 1, kind: input, shape index: {}]
  %s2 = inlined_call_operand.vmem [shape: f32[1,128], index: 2, kind: input, shape index: {}]
  %s3 = inlined_call_operand.vmem [shape: bf16[16,8,128], index: 3, kind: output, shape index: {}]
  %s4 = sld [smem:[#allocation0]]
  $region22: #{down_forward.7} parent=0
    _
  %s6 = ssub.s32 1, %s4
  %s7 = scalar_select 0, %s6, %s4
  // Predicated region
  $region2: #{down_forward.7} parent=0 // pred_check
    _
  $region3: #{down_forward.7} parent=0 // pred_check_branch
    %9 = sbr.rel (0) target = $region5
  $region4: #{down_forward.7} parent=0 // pred_region
    _
  $region5: #{down_forward.7} parent=0 // pred_fallthru
    _
  // Predicated region
  $region6: #{down_forward.7} parent=0 // pred_check
    _
  $region7: #{down_forward.7} parent=0 // pred_check_branch
    %11 = sbr.rel (0) target = $region9
  $region8: #{down_forward.7} parent=0 // pred_region
    _
  $region9: #{down_forward.7} parent=0 // pred_fallthru
    _
  // Predicated region
  $region10: #{down_forward.7} parent=0 // pred_check
    _
  $region11: #{down_forward.7} parent=0 // pred_check_branch
    %13 = sbr.rel (0) target = $region13
  $region12: #{down_forward.7} parent=0 // pred_region
    _
  $region13: #{down_forward.7} parent=0 // pred_fallthru
    _
  %v14 = vld [vmem:[%s0] sm:$0xf]
  %v15 = vld [vmem:[%s0 + $0x4] sm:$0xf]
  %v16 = vld [vmem:[%s0 + $0x8] sm:$0xf]
  %v17 = vld [vmem:[%s0 + $0xc] sm:$0xf]
  %v18 = vld [vmem:[%s0 + $0x10] sm:$0xf]
  %v19 = vld [vmem:[%s0 + $0x14] sm:$0xf]
  %v20 = vld [vmem:[%s0 + $0x18] sm:$0xf]
  %v21 = vld [vmem:[%s0 + $0x1c] sm:$0xf]
  %v22 = vld [vmem:[%s0 + $0x20] sm:$0xf]
  %v23 = vld [vmem:[%s0 + $0x24] sm:$0xf]
  %v24 = vld [vmem:[%s0 + $0x28] sm:$0xf]
  %v25 = vld [vmem:[%s0 + $0x2c] sm:$0xf]
  %v26 = vld [vmem:[%s0 + $0x30] sm:$0xf]
  %v27 = vld [vmem:[%s0 + $0x34] sm:$0xf]
  %v28 = vld [vmem:[%s0 + $0x38] sm:$0xf]
  %v29 = vld [vmem:[%s0 + $0x3c] sm:$0xf]
  %v30 = vunpack.c.l.bf16 %v14
  %v31 = vunpack.c.l.bf16 %v15
  %v32 = vunpack.c.l.bf16 %v16
  %v33 = vunpack.c.l.bf16 %v17
  %v34 = vunpack.c.l.bf16 %v18
  %v35 = vunpack.c.l.bf16 %v19
  %v36 = vunpack.c.l.bf16 %v20
  %v37 = vunpack.c.l.bf16 %v21
  %v38 = vunpack.c.l.bf16 %v22
  %v39 = vunpack.c.l.bf16 %v23
  %v40 = vunpack.c.l.bf16 %v24
  %v41 = vunpack.c.l.bf16 %v25
  %v42 = vunpack.c.l.bf16 %v26
  %v43 = vunpack.c.l.bf16 %v27
  %v44 = vunpack.c.l.bf16 %v28
  %v45 = vunpack.c.l.bf16 %v29
  %v46 = vld [vmem:[%s1] sm:$0x1]
  %v48 = vlaneseq
  %v49 = vshrl.u32 %v48, 7
  %v50 = vsub.s32 0, %v49
  %v51 = vrot.slane %v46, %v50
  %v53 = vmul.f32 %v30, %v51
  %v54 = vmul.f32 %v31, %v51
  %v55 = vmul.f32 %v32, %v51
  %v56 = vmul.f32 %v33, %v51
  %v57 = vmul.f32 %v34, %v51
  %v58 = vmul.f32 %v35, %v51
  %v59 = vmul.f32 %v36, %v51
  %v60 = vmul.f32 %v37, %v51
  %v61 = vmul.f32 %v38, %v51
  %v62 = vmul.f32 %v39, %v51
  %v63 = vmul.f32 %v40, %v51
  %v64 = vmul.f32 %v41, %v51
  %v65 = vmul.f32 %v42, %v51
  %v66 = vmul.f32 %v43, %v51
  %v67 = vmul.f32 %v44, %v51
  %v68 = vmul.f32 %v45, %v51
  %v69 = vld [vmem:[%s2] sm:$0x1]
  %v71 = vlaneseq
  %v72 = vshrl.u32 %v71, 7
  %v73 = vsub.s32 0, %v72
  %v74 = vrot.slane %v69, %v73
  %v76 = vadd.f32 %v53, %v74
  %v77 = vadd.f32 %v54, %v74
  %v78 = vadd.f32 %v55, %v74
  %v79 = vadd.f32 %v56, %v74
  %v80 = vadd.f32 %v57, %v74
  %v81 = vadd.f32 %v58, %v74
  %v82 = vadd.f32 %v59, %v74
  %v83 = vadd.f32 %v60, %v74
  %v84 = vadd.f32 %v61, %v74
  %v85 = vadd.f32 %v62, %v74
  %v86 = vadd.f32 %v63, %v74
  %v87 = vadd.f32 %v64, %v74
  %v88 = vadd.f32 %v65, %v74
  %v89 = vadd.f32 %v66, %v74
  %v90 = vadd.f32 %v67, %v74
  %v91 = vadd.f32 %v68, %v74
  %v92 = vmax.f32 %v76, 0.0
  %v93 = vmax.f32 %v77, 0.0
  %v94 = vmax.f32 %v78, 0.0
  %v95 = vmax.f32 %v79, 0.0
  %v96 = vmax.f32 %v80, 0.0
  %v97 = vmax.f32 %v81, 0.0
  %v98 = vmax.f32 %v82, 0.0
  %v99 = vmax.f32 %v83, 0.0
  %v100 = vmax.f32 %v84, 0.0
  %v101 = vmax.f32 %v85, 0.0
  %v102 = vmax.f32 %v86, 0.0
  %v103 = vmax.f32 %v87, 0.0
  %v104 = vmax.f32 %v88, 0.0
  %v105 = vmax.f32 %v89, 0.0
  %v106 = vmax.f32 %v90, 0.0
  %v107 = vmax.f32 %v91, 0.0
  %v108 = vpack.c.bf16 %v92, %v92
  %v109 = vpack.c.bf16 %v93, %v93
  %v110 = vpack.c.bf16 %v94, %v94
  %v111 = vpack.c.bf16 %v95, %v95
  %v112 = vpack.c.bf16 %v96, %v96
  %v113 = vpack.c.bf16 %v97, %v97
  %v114 = vpack.c.bf16 %v98, %v98
  %v115 = vpack.c.bf16 %v99, %v99
  %v116 = vpack.c.bf16 %v100, %v100
  %v117 = vpack.c.bf16 %v101, %v101
  %v118 = vpack.c.bf16 %v102, %v102
  %v119 = vpack.c.bf16 %v103, %v103
  %v120 = vpack.c.bf16 %v104, %v104
  %v121 = vpack.c.bf16 %v105, %v105
  %v122 = vpack.c.bf16 %v106, %v106
  %v123 = vpack.c.bf16 %v107, %v107
  %124 = vst [vmem:[%s3] sm:$0xf] %v108
  %125 = vst [vmem:[%s3 + $0x4] sm:$0xf] %v109
  %126 = vst [vmem:[%s3 + $0x8] sm:$0xf] %v110
  %127 = vst [vmem:[%s3 + $0xc] sm:$0xf] %v111
  %128 = vst [vmem:[%s3 + $0x10] sm:$0xf] %v112
  %129 = vst [vmem:[%s3 + $0x14] sm:$0xf] %v113
  %130 = vst [vmem:[%s3 + $0x18] sm:$0xf] %v114
  %131 = vst [vmem:[%s3 + $0x1c] sm:$0xf] %v115
  %132 = vst [vmem:[%s3 + $0x20] sm:$0xf] %v116
  %133 = vst [vmem:[%s3 + $0x24] sm:$0xf] %v117
  %134 = vst [vmem:[%s3 + $0x28] sm:$0xf] %v118
  %135 = vst [vmem:[%s3 + $0x2c] sm:$0xf] %v119
  %136 = vst [vmem:[%s3 + $0x30] sm:$0xf] %v120
  %137 = vst [vmem:[%s3 + $0x34] sm:$0xf] %v121
  %138 = vst [vmem:[%s3 + $0x38] sm:$0xf] %v122
  %139 = vst [vmem:[%s3 + $0x3c] sm:$0xf] %v123
  // Predicated region
  $region14: #{down_forward.7} parent=0 // pred_check
    _
  $region15: #{down_forward.7} parent=0 // pred_check_branch
    %141 = sbr.rel (0) target = $region17
  $region16: #{down_forward.7} parent=0 // pred_region
    _
  $region17: #{down_forward.7} parent=0 // pred_fallthru
    _
  // Predicated region
  $region18: #{down_forward.7} parent=0 // pred_check
    _
  $region19: #{down_forward.7} parent=0 // pred_check_branch
    %143 = sbr.rel (0) target = $region21
  $region20: #{down_forward.7} parent=0 // pred_region
    _
  $region21: #{down_forward.7} parent=0 // pred_fallthru
    _

// kernel: down_forward.6
$region0: #{down_forward.6}
  #allocation0 [shape = 'u32[]', space=smem, size = 0x4, offset = 0x4, fixed_abs, tag = 'smem constant byte address 0x4 - core index']
  #allocation1 [shape = 'u32[144,128]{1,0:T(1,128)}', space=vmem, size = 0x12000, scoped, tag = 'internal scratch']
  %s0 = inlined_call_operand.vmem [shape: bf16[2,10,10,4], index: 0, kind: input, shape index: {}, may-alias: {0,1,2}]
  %s1 = inlined_call_operand.vmem [shape: bf16[2,10,10,4], index: 1, kind: input, shape index: {}, may-alias: {0,1,2}]
  %s2 = inlined_call_operand.vmem [shape: bf16[2,10,10,4], index: 2, kind: input, shape index: {}, may-alias: {0,1,2}]
  %s3 = inlined_call_operand.vmem [shape: bf16[36,128], index: 3, kind: input, shape index: {}]
  %s4 = inlined_call_operand.vmem [shape: bf16[2,8,8,128], index: 4, kind: output, shape index: {0}]
  %s5 = inlined_call_operand.vmem [shape: f32[2,1,2,128], index: 5, kind: output, shape index: {1}]
  %6 = xla_tuple %s4, %s5
  %s7 = sld [smem:[#allocation0]]
  $region57: #{down_forward.6} parent=0
    _
  %s9 = ssub.s32 1, %s7
  %s10 = scalar_select 0, %s9, %s7
  loop: start=0, step=1, limit=4
  $region2: #{down_forward.6} parent=0 // loop_pre_header
    _
  $region3: #{down_forward.6} parent=0 // loop_header
    %s12 = sphi 0, %s16
    %p13 = scmp.ge.s32.totalorder %s12, 4
    %s19 = sphi 0, %s31
    %s20 = sphi 0, %s27
    %s21 = sphi 0, %s19
    %s22 = sphi 0, %s20
    %s23 = sphi 0, %s21
    %s24 = sphi 0, %s22
    %s36 = sphi 0, %s38
    %s39 = sphi 0, %s36
    %s40 = sphi 0, %s39
    %s56 = sphi 0, %s40
    %s68 = sphi 0, %s70
    %s71 = sphi 0, %s68
    %s72 = sphi 0, %s71
    %s88 = sphi 0, %s72
    %s100 = sphi 0, %s102
    %s103 = sphi 0, %s100
    %s104 = sphi 0, %s103
    %s120 = sphi 0, %s104
    %s124 = sphi 0, %s124
    %s126 = sphi 0, %s124
    %s127 = sphi 0, %s126
    %s141 = sphi 0, %s127
    %s149 = sphi 0, %s151
    %s152 = sphi 0, %s149
    %s153 = sphi 0, %s152
    %s169 = sphi 0, %s153
    %s177 = sphi 0, %s179
    %s180 = sphi 0, %s177
    %s181 = sphi 0, %s180
    %s197 = sphi 0, %s181
  $region4: #{down_forward.6} parent=0 // loop_header_branch
    %15 = sbr.rel (%p13) target = $region8
  $region5: #{down_forward.6} parent=0 // loop_body
    %s17 = ssub.s32 %s12, 1
    %s18 = ssub.s32 %s12, 2
    %s25 = sadd.s32 1, %s20
    %p26 = scmp.ge.s32.totalorder %s25, 1
    %s27 = scalar_select %p26, 0, %s25
    %s28 = sadd.s32 1, %s19
    %s29 = scalar_select %p26, %s28, %s19
    %p30 = scmp.ge.s32.totalorder %s29, 2
    %s31 = scalar_select %p30, 0, %s29
    %s32 = ssub.s32 %s19, %s31
    %s33 = ssub.s32 %s20, %s27
    %s34 = sor.u32 %s32, %s33
    %p35 = scmp.eq.s32.totalorder %s34, 0
    %s37 = sadd.s32 %s36, 1
    %s38 = scalar_select %p35, %s36, %s37
    %p41 = pneg %p35
    %p42 = scmp.eq.s32.totalorder %s12, 1
    %p43 = por %p41, %p42
    %p44 = scmp.ne.s32.totalorder %s36, %s39
    %p45 = scmp.eq.s32.totalorder %s12, 0
    %p46 = por %p44, %p45
    %p47 = scmp.ne.s32.totalorder %s36, %s39
    %p48 = scmp.eq.s32.totalorder %s17, 1
    %p49 = por %p47, %p48
    %p50 = scmp.ne.s32.totalorder %s39, %s40
    %p51 = scmp.eq.s32.totalorder %s17, 0
    %p52 = por %p50, %p51
    %p53 = scmp.ne.s32.totalorder %s39, %s40
    %p54 = scmp.eq.s32.totalorder %s18, 1
    %p55 = por %p53, %p54
    %p57 = scmp.ne.s32.totalorder %s40, %s56
    %p58 = scmp.eq.s32.totalorder %s18, 0
    %p59 = por %p57, %p58
    %s60 = smul.u32 %s20, 8
    %s61 = sadd.s32 %s60, 8
    %s62 = smul.u32 %s27, 8
    %s63 = sadd.s32 %s62, 8
    %s64 = ssub.s32 %s19, %s31
    %s65 = ssub.s32 %s61, %s63
    %s66 = sor.u32 %s64, %s65
    %p67 = scmp.eq.s32.totalorder %s66, 0
    %s69 = sadd.s32 %s68, 1
    %s70 = scalar_select %p67, %s68, %s69
    %p73 = pneg %p67
    %p74 = scmp.eq.s32.totalorder %s12, 1
    %p75 = por %p73, %p74
    %p76 = scmp.ne.s32.totalorder %s68, %s71
    %p77 = scmp.eq.s32.totalorder %s12, 0
    %p78 = por %p76, %p77
    %p79 = scmp.ne.s32.totalorder %s68, %s71
    %p80 = scmp.eq.s32.totalorder %s17, 1
    %p81 = por %p79, %p80
    %p82 = scmp.ne.s32.totalorder %s71, %s72
    %p83 = scmp.eq.s32.totalorder %s17, 0
    %p84 = por %p82, %p83
    %p85 = scmp.ne.s32.totalorder %s71, %s72
    %p86 = scmp.eq.s32.totalorder %s18, 1
    %p87 = por %p85, %p86
    %p89 = scmp.ne.s32.totalorder %s72, %s88
    %p90 = scmp.eq.s32.totalorder %s18, 0
    %p91 = por %p89, %p90
    %s92 = smul.u32 %s20, 8
    %s93 = sadd.s32 %s92, 9
    %s94 = smul.u32 %s27, 8
    %s95 = sadd.s32 %s94, 9
    %s96 = ssub.s32 %s19, %s31
    %s97 = ssub.s32 %s93, %s95
    %s98 = sor.u32 %s96, %s97
    %p99 = scmp.eq.s32.totalorder %s98, 0
    %s101 = sadd.s32 %s100, 1
    %s102 = scalar_select %p99, %s100, %s101
    %p105 = pneg %p99
    %p106 = scmp.eq.s32.totalorder %s12, 1
    %p107 = por %p105, %p106
    %p108 = scmp.ne.s32.totalorder %s100, %s103
    %p109 = scmp.eq.s32.totalorder %s12, 0
    %p110 = por %p108, %p109
    %p111 = scmp.ne.s32.totalorder %s100, %s103
    %p112 = scmp.eq.s32.totalorder %s17, 1
    %p113 = por %p111, %p112
    %p114 = scmp.ne.s32.totalorder %s103, %s104
    %p115 = scmp.eq.s32.totalorder %s17, 0
    %p116 = por %p114, %p115
    %p117 = scmp.ne.s32.totalorder %s103, %s104
    %p118 = scmp.eq.s32.totalorder %s18, 1
    %p119 = por %p117, %p118
    %p121 = scmp.ne.s32.totalorder %s104, %s120
    %p122 = scmp.eq.s32.totalorder %s18, 0
    %p123 = por %p121, %p122
    %s125 = sadd.s32 %s124, 1
    %p128 = scmp.eq.s32.totalorder %s12, 1
    %p129 = scmp.ne.s32.totalorder %s124, %s126
    %p130 = scmp.eq.s32.totalorder %s12, 0
    %p131 = por %p129, %p130
    %p132 = scmp.ne.s32.totalorder %s124, %s126
    %p133 = scmp.eq.s32.totalorder %s17, 1
    %p134 = por %p132, %p133
    %p135 = scmp.ne.s32.totalorder %s126, %s127
    %p136 = scmp.eq.s32.totalorder %s17, 0
    %p137 = por %p135, %p136
    %p138 = scmp.ne.s32.totalorder %s126, %s127
    %p139 = scmp.eq.s32.totalorder %s18, 1
    %p140 = por %p138, %p139
    %p142 = scmp.ne.s32.totalorder %s127, %s141
    %p143 = scmp.eq.s32.totalorder %s18, 0
    %p144 = por %p142, %p143
    %s145 = ssub.s32 %s19, %s31
    %s146 = ssub.s32 %s20, %s27
    %s147 = sor.u32 %s145, %s146
    %p148 = scmp.eq.s32.totalorder %s147, 0
    %s150 = sadd.s32 %s149, 1
    %s151 = scalar_select %p148, %s149, %s150
    %p154 = pneg %p148
    %p155 = scmp.eq.s32.totalorder %s12, 1
    %p156 = por %p154, %p155
    %p157 = scmp.ne.s32.totalorder %s149, %s152
    %p158 = scmp.eq.s32.totalorder %s12, 0
    %p159 = por %p157, %p158
    %p160 = scmp.ne.s32.totalorder %s149, %s152
    %p161 = scmp.eq.s32.totalorder %s17, 1
    %p162 = por %p160, %p161
    %p163 = scmp.ne.s32.totalorder %s152, %s153
    %p164 = scmp.eq.s32.totalorder %s17, 0
    %p165 = por %p163, %p164
    %p166 = scmp.ne.s32.totalorder %s152, %s153
    %p167 = scmp.eq.s32.totalorder %s18, 1
    %p168 = por %p166, %p167
    %p170 = scmp.ne.s32.totalorder %s153, %s169
    %p171 = scmp.eq.s32.totalorder %s18, 0
    %p172 = por %p170, %p171
    %s173 = ssub.s32 %s19, %s31
    %s174 = ssub.s32 %s20, %s27
    %s175 = sor.u32 %s173, %s174
    %p176 = scmp.eq.s32.totalorder %s175, 0
    %s178 = sadd.s32 %s177, 1
    %s179 = scalar_select %p176, %s177, %s178
    %p182 = pneg %p176
    %p183 = scmp.eq.s32.totalorder %s12, 1
    %p184 = por %p182, %p183
    %p185 = scmp.ne.s32.totalorder %s177, %s180
    %p186 = scmp.eq.s32.totalorder %s12, 0
    %p187 = por %p185, %p186
    %p188 = scmp.ne.s32.totalorder %s177, %s180
    %p189 = scmp.eq.s32.totalorder %s17, 1
    %p190 = por %p188, %p189
    %p191 = scmp.ne.s32.totalorder %s180, %s181
    %p192 = scmp.eq.s32.totalorder %s17, 0
    %p193 = por %p191, %p192
    %p194 = scmp.ne.s32.totalorder %s180, %s181
    %p195 = scmp.eq.s32.totalorder %s18, 1
    %p196 = por %p194, %p195
    %p198 = scmp.ne.s32.totalorder %s181, %s197
    %p199 = scmp.eq.s32.totalorder %s18, 0
    %p200 = por %p198, %p199
    %p201 = scmp.le.s32.totalorder 1, %s12
    %p202 = scmp.lt.s32.totalorder %s12, 3
    %p203 = pnand %p201, %p202
    %p204 = pneg %p203
    // Predicated region
    $region9: #{down_forward.6} parent=5 // pred_check
      _
    $region10: #{down_forward.6} parent=5 // pred_check_branch
      %206 = sbr.rel (%p203) target = $region12
    $region11: #{down_forward.6} parent=5 // pred_region
      %s207 = ssub.s32 %s12, 1
      // Predicated region
      $region13: #{down_forward.6} parent=11 // pred_check
        %p208 = pneg %p137
      $region14: #{down_forward.6} parent=11 // pred_check_branch
        %210 = sbr.rel (%p208) target = $region16
      $region15: #{down_forward.6} parent=11 // pred_region
        _
      $region16: #{down_forward.6} parent=11 // pred_fallthru
        _
    $region12: #{down_forward.6} parent=5 // pred_fallthru
      _
    %p211 = scmp.lt.s32.totalorder %s12, 2
    // Predicated region
    $region17: #{down_forward.6} parent=5 // pred_check
      %p212 = pneg %p211
    $region18: #{down_forward.6} parent=5 // pred_check_branch
      %214 = sbr.rel (%p212) target = $region20
    $region19: #{down_forward.6} parent=5 // pred_region
      // Predicated region
      $region21: #{down_forward.6} parent=19 // pred_check
        %p215 = pneg %p46
      $region22: #{down_forward.6} parent=19 // pred_check_branch
        %217 = sbr.rel (%p215) target = $region24
      $region23: #{down_forward.6} parent=19 // pred_region
        %s218 = smul.u32 8, %s20
        %s219 = ssub.s32 10, %s218
        %p220 = scmp.lt.s32.totalorder %s219, 8
        %s221 = scalar_select %p220, %s219, 8
        %s222 = smul.u32 64, %s221
        %s223 = smul.u32 %s222, 2
        %p224 = scmp.lt.s32.totalorder %s19, 1
        %s225 = scalar_select %p224, %s19, 1
        %p226 = scmp.lt.s32.totalorder %s218, 9
        %s227 = scalar_select %p226, %s218, 9
        %s228 = smul.addr %s227, 2
        %s229 = smul.addr %s225, 20
        %s230 = sadd.s32 %s228, %s229
        %s231 = smul.addr %s230, 4
        %s232 = scalar_lea.vmem %s0, %s231
        %s233 = smul.u32 8, %s20
        %s234 = ssub.s32 10, %s233
        %p235 = scmp.lt.s32.totalorder %s234, 8
        %s236 = scalar_select %p235, %s234, 8
        %s237 = smul.u32 64, %s236
        %s238 = smul.u32 %s237, 2
      $region24: #{down_forward.6} parent=19 // pred_fallthru
        _
      // Predicated region
      $region25: #{down_forward.6} parent=19 // pred_check
        %p239 = pneg %p78
      $region26: #{down_forward.6} parent=19 // pred_check_branch
        %241 = sbr.rel (%p239) target = $region28
      $region27: #{down_forward.6} parent=19 // pred_region
        %s242 = smul.u32 %s20, 8
        %s243 = sadd.s32 %s242, 8
        %p244 = scmp.lt.s32.totalorder %s19, 1
        %s245 = scalar_select %p244, %s19, 1
        %p246 = scmp.lt.s32.totalorder %s243, 9
        %s247 = scalar_select %p246, %s243, 9
        %s248 = smul.addr %s247, 2
        %s249 = smul.addr %s245, 20
        %s250 = sadd.s32 %s248, %s249
        %s251 = smul.addr %s250, 4
        %s252 = scalar_lea.vmem %s1, %s251
        %s253 = smul.u32 %s20, 8
        %s254 = sadd.s32 %s253, 8
      $region28: #{down_forward.6} parent=19 // pred_fallthru
        _
      // Predicated region
      $region29: #{down_forward.6} parent=19 // pred_check
        %p255 = pneg %p110
      $region30: #{down_forward.6} parent=19 // pred_check_branch
        %257 = sbr.rel (%p255) target = $region32
      $region31: #{down_forward.6} parent=19 // pred_region
        %s258 = smul.u32 %s20, 8
        %s259 = sadd.s32 %s258, 9
        %p260 = scmp.lt.s32.totalorder %s19, 1
        %s261 = scalar_select %p260, %s19, 1
        %p262 = scmp.lt.s32.totalorder %s259, 9
        %s263 = scalar_select %p262, %s259, 9
        %s264 = smul.addr %s263, 2
        %s265 = smul.addr %s261, 20
        %s266 = sadd.s32 %s264, %s265
        %s267 = smul.addr %s266, 4
        %s268 = scalar_lea.vmem %s2, %s267
        %s269 = smul.u32 %s20, 8
        %s270 = sadd.s32 %s269, 9
      $region32: #{down_forward.6} parent=19 // pred_fallthru
        _
    $region20: #{down_forward.6} parent=5 // pred_fallthru
      _
    %p271 = scmp.le.s32.totalorder 1, %s12
    %p272 = scmp.lt.s32.totalorder %s12, 3
    %p273 = pnand %p271, %p272
    %p274 = pneg %p273
    // Predicated region
    $region33: #{down_forward.6} parent=5 // pred_check
      _
    $region34: #{down_forward.6} parent=5 // pred_check_branch
      %276 = sbr.rel (%p273) target = $region36
    $region35: #{down_forward.6} parent=5 // pred_region
      %s277 = ssub.s32 %s12, 1
      %s278 = smul.u32 8, %s22
      %s279 = ssub.s32 10, %s278
      %p280 = scmp.lt.s32.totalorder %s279, 8
      %s281 = scalar_select %p280, %s279, 8
      %s282 = smul.u32 64, %s281
      %s283 = smul.u32 %s282, 2
      %p284 = scmp.lt.s32.totalorder %s21, 1
      %s285 = scalar_select %p284, %s21, 1
      %p286 = scmp.lt.s32.totalorder %s278, 9
      %s287 = scalar_select %p286, %s278, 9
      %s288 = smul.addr %s287, 2
      %s289 = smul.addr %s285, 20
      %s290 = sadd.s32 %s288, %s289
      %s291 = smul.addr %s290, 4
      %s292 = scalar_lea.vmem %s0, %s291
      %p293 = pneg %p52
      %p294 = pneg %p49
      %s295 = smul.u32 %s22, 8
      %s296 = sadd.s32 %s295, 8
      %p297 = scmp.lt.s32.totalorder %s21, 1
      %s298 = scalar_select %p297, %s21, 1
      %p299 = scmp.lt.s32.totalorder %s296, 9
      %s300 = scalar_select %p299, %s296, 9
      %s301 = smul.addr %s300, 2
      %s302 = smul.addr %s298, 20
      %s303 = sadd.s32 %s301, %s302
      %s304 = smul.addr %s303, 4
      %s305 = scalar_lea.vmem %s1, %s304
      %p306 = pneg %p84
      %p307 = pneg %p81
      %s308 = smul.u32 %s22, 8
      %s309 = sadd.s32 %s308, 9
      %p310 = scmp.lt.s32.totalorder %s21, 1
      %s311 = scalar_select %p310, %s21, 1
      %p312 = scmp.lt.s32.totalorder %s309, 9
      %s313 = scalar_select %p312, %s309, 9
      %s314 = smul.addr %s313, 2
      %s315 = smul.addr %s311, 20
      %s316 = sadd.s32 %s314, %s315
      %s317 = smul.addr %s316, 4
      %s318 = scalar_lea.vmem %s2, %s317
      %p319 = pneg %p116
      %p320 = pneg %p113
      %p321 = pneg %p137
      %p322 = pneg %p134
      %p323 = pneg %p165
      %p324 = pneg %p162
      %s325 = smul.u32 8, %s22
      %p326 = scmp.lt.s32.totalorder %s21, 1
      %s327 = scalar_select %p326, %s21, 1
      %p328 = scmp.lt.s32.totalorder %s325, 7
      %s329 = scalar_select %p328, %s325, 7
      %s330 = smul.addr %s327, 8
      %s331 = sadd.s32 %s329, %s330
      %s332 = smul.addr %s331, 4
      %s333 = scalar_lea.vmem %s4, %s332
      %p334 = pneg %p193
      %p335 = pneg %p190
      %p336 = scmp.lt.s32.totalorder %s21, 1
      %s337 = scalar_select %p336, %s21, 1
      %p338 = scmp.lt.s32.totalorder %s22, 0
      %s339 = scalar_select %p338, %s22, 0
      %s340 = sadd.s32 %s339, %s337
      %s341 = smul.addr %s340, 2
      %s342 = scalar_lea.vmem %s5, %s341
      %s343 = smul.u32 8, %s22
      %s344 = ssub.s32 10, %s343
      %p345 = scmp.lt.s32.totalorder %s344, 8
      %s346 = scalar_select %p345, %s344, 8
      %s347 = smul.u32 64, %s346
      %s348 = smul.u32 %s347, 2
      %p349 = scmp.lt.s32.totalorder %s21, 1
      %s350 = scalar_select %p349, %s21, 1
      %p351 = scmp.lt.s32.totalorder %s343, 9
      %s352 = scalar_select %p351, %s343, 9
      %s353 = smul.addr %s352, 2
      %s354 = smul.addr %s350, 20
      %s355 = sadd.s32 %s353, %s354
      %s356 = smul.addr %s355, 4
      %s357 = scalar_lea.vmem %s0, %s356
      %s358 = smul.u32 8, %s22
      %s359 = ssub.s32 10, %s358
      %p360 = scmp.lt.s32.totalorder %s359, 8
      %s361 = scalar_select %p360, %s359, 8
      %s362 = smul.u32 64, %s361
      %s363 = smul.u32 %s362, 2
      %s364 = smul.u32 %s22, 8
      %s365 = sadd.s32 %s364, 8
      %p366 = scmp.lt.s32.totalorder %s21, 1
      %s367 = scalar_select %p366, %s21, 1
      %p368 = scmp.lt.s32.totalorder %s365, 9
      %s369 = scalar_select %p368, %s365, 9
      %s370 = smul.addr %s369, 2
      %s371 = smul.addr %s367, 20
      %s372 = sadd.s32 %s370, %s371
      %s373 = smul.addr %s372, 4
      %s374 = scalar_lea.vmem %s1, %s373
      %s375 = smul.u32 %s22, 8
      %s376 = sadd.s32 %s375, 8
      %s377 = smul.u32 %s22, 8
      %s378 = sadd.s32 %s377, 9
      %p379 = scmp.lt.s32.totalorder %s21, 1
      %s380 = scalar_select %p379, %s21, 1
      %p381 = scmp.lt.s32.totalorder %s378, 9
      %s382 = scalar_select %p381, %s378, 9
      %s383 = smul.addr %s382, 2
      %s384 = smul.addr %s380, 20
      %s385 = sadd.s32 %s383, %s384
      %s386 = smul.addr %s385, 4
      %s387 = scalar_lea.vmem %s2, %s386
      %s388 = smul.u32 %s22, 8
      %s389 = sadd.s32 %s388, 9
      %s390 = smul.u32 8, %s22
      %p391 = scmp.lt.s32.totalorder %s21, 1
      %s392 = scalar_select %p391, %s21, 1
      %p393 = scmp.lt.s32.totalorder %s390, 7
      %s394 = scalar_select %p393, %s390, 7
      %s395 = smul.addr %s392, 8
      %s396 = sadd.s32 %s394, %s395
      %s397 = smul.addr %s396, 4
      %s398 = scalar_lea.vmem %s4, %s397
      %s399 = smul.u32 8, %s22
      %p400 = scmp.lt.s32.totalorder %s21, 1
      %s401 = scalar_select %p400, %s21, 1
      %p402 = scmp.lt.s32.totalorder %s22, 0
      %s403 = scalar_select %p402, %s22, 0
      %s404 = sadd.s32 %s403, %s401
      %s405 = smul.addr %s404, 2
      %s406 = scalar_lea.vmem %s5, %s405
      %v408 = vld [vmem:[%s357] sm:$0xf]
      %v409 = vld [vmem:[%s357 + $0x4] sm:$0x1]
      %v410 = vld [vmem:[%s357 + $0x8] sm:$0xf]
      %v411 = vld [vmem:[%s357 + $0xc] sm:$0x1]
      %v412 = vld [vmem:[%s357 + $0x10] sm:$0xf]
      %v413 = vld [vmem:[%s357 + $0x14] sm:$0x1]
      %v414 = vld [vmem:[%s357 + $0x18] sm:$0xf]
      %v415 = vld [vmem:[%s357 + $0x1c] sm:$0x1]
      %v416 = vld [vmem:[%s357 + $0x20] sm:$0xf]
      %v417 = vld [vmem:[%s357 + $0x24] sm:$0x1]
      %v418 = vld [vmem:[%s357 + $0x28] sm:$0xf]
      %v419 = vld [vmem:[%s357 + $0x2c] sm:$0x1]
      %v420 = vld [vmem:[%s357 + $0x30] sm:$0xf]
      %v421 = vld [vmem:[%s357 + $0x34] sm:$0x1]
      %v422 = vld [vmem:[%s357 + $0x38] sm:$0xf]
      %v423 = vld [vmem:[%s357 + $0x3c] sm:$0x1]
      %v424 = vld [vmem:[%s374] sm:$0xf]
      %v425 = vld [vmem:[%s374 + $0x4] sm:$0x1]
      %v426 = vld [vmem:[%s387] sm:$0xf]
      %v427 = vld [vmem:[%s387 + $0x4] sm:$0x1]
      %v444 = vunpack.c.l.b16 %v408
      %v445 = vunpack.c.l.b16 %v409
      %v446 = vunpack.c.l.b16 %v410
      %v447 = vunpack.c.l.b16 %v411
      %v448 = vunpack.c.l.b16 %v412
      %v449 = vunpack.c.l.b16 %v413
      %v450 = vunpack.c.l.b16 %v414
      %v451 = vunpack.c.l.b16 %v415
      %v452 = vunpack.c.l.b16 %v416
      %v453 = vunpack.c.l.b16 %v417
      %v454 = vunpack.c.l.b16 %v418
      %v455 = vunpack.c.l.b16 %v419
      %v456 = vunpack.c.l.b16 %v420
      %v457 = vunpack.c.l.b16 %v421
      %v458 = vunpack.c.l.b16 %v422
      %v459 = vunpack.c.l.b16 %v423
      %v460 = vpack.c.b16 %v445, %v444
      %v461 = vpack.c.b16 %v447, %v446
      %v462 = vpack.c.b16 %v449, %v448
      %v463 = vpack.c.b16 %v451, %v450
      %v464 = vpack.c.b16 %v453, %v452
      %v465 = vpack.c.b16 %v455, %v454
      %v466 = vpack.c.b16 %v457, %v456
      %v467 = vpack.c.b16 %v459, %v458
      %v469 = vshrl.u32 %v460, 16
      %v471 = vshll.u32 %v460, 16
      %v473 = vrot.slane %v471, 1
      %v474 = vor.u32 %v469, %v473
      %v476 = vshrl.u32 %v461, 16
      %v478 = vshll.u32 %v461, 16
      %v480 = vrot.slane %v478, 1
      %v481 = vor.u32 %v476, %v480
      %v483 = vshrl.u32 %v462, 16
      %v485 = vshll.u32 %v462, 16
      %v487 = vrot.slane %v485, 1
      %v488 = vor.u32 %v483, %v487
      %v490 = vshrl.u32 %v463, 16
      %v492 = vshll.u32 %v463, 16
      %v494 = vrot.slane %v492, 1
      %v495 = vor.u32 %v490, %v494
      %v497 = vshrl.u32 %v464, 16
      %v499 = vshll.u32 %v464, 16
      %v501 = vrot.slane %v499, 1
      %v502 = vor.u32 %v497, %v501
      %v504 = vshrl.u32 %v465, 16
      %v506 = vshll.u32 %v465, 16
      %v508 = vrot.slane %v506, 1
      %v509 = vor.u32 %v504, %v508
      %v511 = vshrl.u32 %v466, 16
      %v513 = vshll.u32 %v466, 16
      %v515 = vrot.slane %v513, 1
      %v516 = vor.u32 %v511, %v515
      %v518 = vshrl.u32 %v467, 16
      %v520 = vshll.u32 %v467, 16
      %v522 = vrot.slane %v520, 1
      %v523 = vor.u32 %v518, %v522
      %524 = vrot.lane.b32.xlu0 %v474, 4
      %v525 = vpop.permute.xlu0 %524
      %526 = vrot.lane.b32.xlu0 %v481, 4
      %v527 = vpop.permute.xlu0 %526
      %528 = vrot.lane.b32.xlu0 %v488, 4
      %v529 = vpop.permute.xlu0 %528
      %530 = vrot.lane.b32.xlu0 %v495, 4
      %v531 = vpop.permute.xlu0 %530
      %532 = vrot.lane.b32.xlu0 %v502, 4
      %v533 = vpop.permute.xlu0 %532
      %534 = vrot.lane.b32.xlu0 %v509, 4
      %v535 = vpop.permute.xlu0 %534
      %536 = vrot.lane.b32.xlu0 %v516, 4
      %v537 = vpop.permute.xlu0 %536
      %538 = vrot.lane.b32.xlu0 %v523, 4
      %v539 = vpop.permute.xlu0 %538
      %v540 = vrot.slane %v460, 1
      %v541 = vrot.slane %v461, 1
      %v542 = vrot.slane %v462, 1
      %v543 = vrot.slane %v463, 1
      %v544 = vrot.slane %v464, 1
      %v545 = vrot.slane %v465, 1
      %v546 = vrot.slane %v466, 1
      %v547 = vrot.slane %v467, 1
      %548 = vrot.lane.b32.xlu0 %v540, 8
      %v549 = vpop.permute.xlu0 %548
      %550 = vrot.lane.b32.xlu0 %v541, 8
      %v551 = vpop.permute.xlu0 %550
      %552 = vrot.lane.b32.xlu0 %v542, 8
      %v553 = vpop.permute.xlu0 %552
      %554 = vrot.lane.b32.xlu0 %v543, 8
      %v555 = vpop.permute.xlu0 %554
      %556 = vrot.lane.b32.xlu0 %v544, 8
      %v557 = vpop.permute.xlu0 %556
      %558 = vrot.lane.b32.xlu0 %v545, 8
      %v559 = vpop.permute.xlu0 %558
      %560 = vrot.lane.b32.xlu0 %v546, 8
      %v561 = vpop.permute.xlu0 %560
      %562 = vrot.lane.b32.xlu0 %v547, 8
      %v563 = vpop.permute.xlu0 %562
      %v565 = vunpack.c.l.b16 %v424
      %v566 = vpack.c.b16 %v446, %v446
      %v567 = vpack.c.b16 %v448, %v448
      %v568 = vpack.c.b16 %v450, %v450
      %v569 = vpack.c.b16 %v452, %v452
      %v570 = vpack.c.b16 %v454, %v454
      %v571 = vpack.c.b16 %v456, %v456
      %v572 = vpack.c.b16 %v458, %v458
      %v573 = vpack.c.b16 %v565, %v565
      %574 = vrot.lane.b32.xlu0 %v566, 12
      %v575 = vpop.permute.xlu0 %574
      %576 = vrot.lane.b32.xlu0 %v567, 12
      %v577 = vpop.permute.xlu0 %576
      %578 = vrot.lane.b32.xlu0 %v568, 12
      %v579 = vpop.permute.xlu0 %578
      %580 = vrot.lane.b32.xlu0 %v569, 12
      %v581 = vpop.permute.xlu0 %580
      %582 = vrot.lane.b32.xlu0 %v570, 12
      %v583 = vpop.permute.xlu0 %582
      %584 = vrot.lane.b32.xlu0 %v571, 12
      %v585 = vpop.permute.xlu0 %584
      %586 = vrot.lane.b32.xlu0 %v572, 12
      %v587 = vpop.permute.xlu0 %586
      %588 = vrot.lane.b32.xlu0 %v573, 12
      %v589 = vpop.permute.xlu0 %588
      %v591 = vunpack.c.l.b16 %v425
      %v592 = vpack.c.b16 %v591, %v565
      %v594 = vshrl.u32 %v592, 16
      %v596 = vshll.u32 %v592, 16
      %v598 = vrot.slane %v596, 1
      %v599 = vor.u32 %v594, %v598
      %600 = vrot.lane.b32.xlu0 %v481, 16
      %v601 = vpop.permute.xlu0 %600
      %602 = vrot.lane.b32.xlu0 %v488, 16
      %v603 = vpop.permute.xlu0 %602
      %604 = vrot.lane.b32.xlu0 %v495, 16
      %v605 = vpop.permute.xlu0 %604
      %606 = vrot.lane.b32.xlu0 %v502, 16
      %v607 = vpop.permute.xlu0 %606
      %608 = vrot.lane.b32.xlu0 %v509, 16
      %v609 = vpop.permute.xlu0 %608
      %610 = vrot.lane.b32.xlu0 %v516, 16
      %v611 = vpop.permute.xlu0 %610
      %612 = vrot.lane.b32.xlu0 %v523, 16
      %v613 = vpop.permute.xlu0 %612
      %614 = vrot.lane.b32.xlu0 %v599, 16
      %v615 = vpop.permute.xlu0 %614
      %v616 = vrot.slane %v592, 1
      %617 = vrot.lane.b32.xlu0 %v541, 20
      %v618 = vpop.permute.xlu0 %617
      %619 = vrot.lane.b32.xlu0 %v542, 20
      %v620 = vpop.permute.xlu0 %619
      %621 = vrot.lane.b32.xlu0 %v543, 20
      %v622 = vpop.permute.xlu0 %621
      %623 = vrot.lane.b32.xlu0 %v544, 20
      %v624 = vpop.permute.xlu0 %623
      %625 = vrot.lane.b32.xlu0 %v545, 20
      %v626 = vpop.permute.xlu0 %625
      %627 = vrot.lane.b32.xlu0 %v546, 20
      %v628 = vpop.permute.xlu0 %627
      %629 = vrot.lane.b32.xlu0 %v547, 20
      %v630 = vpop.permute.xlu0 %629
      %631 = vrot.lane.b32.xlu0 %v616, 20
      %v632 = vpop.permute.xlu0 %631
      %v634 = vunpack.c.l.b16 %v426
      %v635 = vpack.c.b16 %v634, %v634
      %636 = vrot.lane.b32.xlu0 %v567, 24
      %v637 = vpop.permute.xlu0 %636
      %638 = vrot.lane.b32.xlu0 %v568, 24
      %v639 = vpop.permute.xlu0 %638
      %640 = vrot.lane.b32.xlu0 %v569, 24
      %v641 = vpop.permute.xlu0 %640
      %642 = vrot.lane.b32.xlu0 %v570, 24
      %v643 = vpop.permute.xlu0 %642
      %644 = vrot.lane.b32.xlu0 %v571, 24
      %v645 = vpop.permute.xlu0 %644
      %646 = vrot.lane.b32.xlu0 %v572, 24
      %v647 = vpop.permute.xlu0 %646
      %648 = vrot.lane.b32.xlu0 %v573, 24
      %v649 = vpop.permute.xlu0 %648
      %650 = vrot.lane.b32.xlu0 %v635, 24
      %v651 = vpop.permute.xlu0 %650
      %v653 = vunpack.c.l.b16 %v427
      %v654 = vpack.c.b16 %v653, %v634
      %v656 = vshrl.u32 %v654, 16
      %v658 = vshll.u32 %v654, 16
      %v660 = vrot.slane %v658, 1
      %v661 = vor.u32 %v656, %v660
      %662 = vrot.lane.b32.xlu0 %v488, 28
      %v663 = vpop.permute.xlu0 %662
      %664 = vrot.lane.b32.xlu0 %v495, 28
      %v665 = vpop.permute.xlu0 %664
      %666 = vrot.lane.b32.xlu0 %v502, 28
      %v667 = vpop.permute.xlu0 %666
      %668 = vrot.lane.b32.xlu0 %v509, 28
      %v669 = vpop.permute.xlu0 %668
      %670 = vrot.lane.b32.xlu0 %v516, 28
      %v671 = vpop.permute.xlu0 %670
      %672 = vrot.lane.b32.xlu0 %v523, 28
      %v673 = vpop.permute.xlu0 %672
      %674 = vrot.lane.b32.xlu0 %v599, 28
      %v675 = vpop.permute.xlu0 %674
      %676 = vrot.lane.b32.xlu0 %v661, 28
      %v677 = vpop.permute.xlu0 %676
      %v678 = vrot.slane %v654, 1
      %679 = vrot.lane.b32.xlu0 %v542, 32
      %v680 = vpop.permute.xlu0 %679
      %681 = vrot.lane.b32.xlu0 %v543, 32
      %v682 = vpop.permute.xlu0 %681
      %683 = vrot.lane.b32.xlu0 %v544, 32
      %v684 = vpop.permute.xlu0 %683
      %685 = vrot.lane.b32.xlu0 %v545, 32
      %v686 = vpop.permute.xlu0 %685
      %687 = vrot.lane.b32.xlu0 %v546, 32
      %v688 = vpop.permute.xlu0 %687
      %689 = vrot.lane.b32.xlu0 %v547, 32
      %v690 = vpop.permute.xlu0 %689
      %691 = vrot.lane.b32.xlu0 %v616, 32
      %v692 = vpop.permute.xlu0 %691
      %693 = vrot.lane.b32.xlu0 %v678, 32
      %v694 = vpop.permute.xlu0 %693
      %vm695 = vcmask 31744
      %v698 = vsel %vm695, %v408, %v525
      %v701 = vsel %vm695, %v410, %v527
      %v704 = vsel %vm695, %v412, %v529
      %v707 = vsel %vm695, %v414, %v531
      %v710 = vsel %vm695, %v416, %v533
      %v713 = vsel %vm695, %v418, %v535
      %v716 = vsel %vm695, %v420, %v537
      %v719 = vsel %vm695, %v422, %v539
      %vm720 = vcmask 64512
      %v722 = vsel %vm720, %v698, %v549
      %v724 = vsel %vm720, %v701, %v551
      %v726 = vsel %vm720, %v704, %v553
      %v728 = vsel %vm720, %v707, %v555
      %v730 = vsel %vm720, %v710, %v557
      %v732 = vsel %vm720, %v713, %v559
      %v734 = vsel %vm720, %v716, %v561
      %v736 = vsel %vm720, %v719, %v563
      %vm737 = vcmask 97280
      %v739 = vsel %vm737, %v722, %v575
      %v741 = vsel %vm737, %v724, %v577
      %v743 = vsel %vm737, %v726, %v579
      %v745 = vsel %vm737, %v728, %v581
      %v747 = vsel %vm737, %v730, %v583
      %v749 = vsel %vm737, %v732, %v585
      %v751 = vsel %vm737, %v734, %v587
      %v753 = vsel %vm737, %v736, %v589
      %vm754 = vcmask 130048
      %v756 = vsel %vm754, %v739, %v601
      %v758 = vsel %vm754, %v741, %v603
      %v760 = vsel %vm754, %v743, %v605
      %v762 = vsel %vm754, %v745, %v607
      %v764 = vsel %vm754, %v747, %v609
      %v766 = vsel %vm754, %v749, %v611
      %v768 = vsel %vm754, %v751, %v613
      %v770 = vsel %vm754, %v753, %v615
      %vm771 = vcmask 162816
      %v773 = vsel %vm771, %v756, %v618
      %v775 = vsel %vm771, %v758, %v620
      %v777 = vsel %vm771, %v760, %v622
      %v779 = vsel %vm771, %v762, %v624
      %v781 = vsel %vm771, %v764, %v626
      %v783 = vsel %vm771, %v766, %v628
      %v785 = vsel %vm771, %v768, %v630
      %v787 = vsel %vm771, %v770, %v632
      %vm788 = vcmask 195584
      %v790 = vsel %vm788, %v773, %v637
      %v792 = vsel %vm788, %v775, %v639
      %v794 = vsel %vm788, %v777, %v641
      %v796 = vsel %vm788, %v779, %v643
      %v798 = vsel %vm788, %v781, %v645
      %v800 = vsel %vm788, %v783, %v647
      %v802 = vsel %vm788, %v785, %v649
      %v804 = vsel %vm788, %v787, %v651
      %vm805 = vcmask 228352
      %v807 = vsel %vm805, %v790, %v663
      %v809 = vsel %vm805, %v792, %v665
      %v811 = vsel %vm805, %v794, %v667
      %v813 = vsel %vm805, %v796, %v669
      %v815 = vsel %vm805, %v798, %v671
      %v817 = vsel %vm805, %v800, %v673
      %v819 = vsel %vm805, %v802, %v675
      %v821 = vsel %vm805, %v804, %v677
      %vm822 = vcmask 261120
      %v824 = vsel %vm822, %v807, %v680
      %v826 = vsel %vm822, %v809, %v682
      %v828 = vsel %vm822, %v811, %v684
      %v830 = vsel %vm822, %v813, %v686
      %v832 = vsel %vm822, %v815, %v688
      %v834 = vsel %vm822, %v817, %v690
      %v836 = vsel %vm822, %v819, %v692
      %v838 = vsel %vm822, %v821, %v694
      %v839 = vld [vmem:[%s3] sm:$0xf]
      %v840 = vld [vmem:[%s3 + $0x4] sm:$0xf]
      %v841 = vld [vmem:[%s3 + $0x8] sm:$0xf]
      %v842 = vld [vmem:[%s3 + $0xc] sm:$0xf]
      %v843 = vld [vmem:[%s3 + $0x10] sm:$0x3]
      %v852 = vunpack.c.l.b16 %v824
      %v853 = vunpack.c.l.b16 %v826
      %v854 = vunpack.c.l.b16 %v828
      %v855 = vunpack.c.l.b16 %v830
      %v856 = vunpack.c.l.b16 %v832
      %v857 = vunpack.c.l.b16 %v834
      %v858 = vunpack.c.l.b16 %v836
      %v859 = vunpack.c.l.b16 %v838
      %v860 = vpack.c.b16 %v853, %v852
      %v861 = vpack.c.b16 %v855, %v854
      %v862 = vpack.c.b16 %v857, %v856
      %v863 = vpack.c.b16 %v859, %v858
      %v869 = vunpack.c.l.b16 %v839
      %v870 = vunpack.c.l.b16 %v840
      %v871 = vunpack.c.l.b16 %v841
      %v872 = vunpack.c.l.b16 %v842
      %v873 = vunpack.c.l.b16 %v843
      %v874 = vpack.c.b16 %v870, %v869
      %v875 = vpack.c.b16 %v872, %v871
      %v876 = vpack.c.b16 %v873, %v873
      %vm879 = vcmask 293888
      %v881 = vsel %vm879, %v860, 0
      %v884 = vsel %vm879, %v861, 0
      %v887 = vsel %vm879, %v862, 0
      %v890 = vsel %vm879, %v863, 0
      %vm892 = vcmask 1041408
      %v894 = vsel %vm892, %v876, 0
      %896 = vmatprep.subr.bf16.mxu0 0
      %897 = vmatpush1.bf16.msra.mxu0 0
      %898 = vmatprep.subr.bf16.mxu0 0
      %899 = vmatpush1.bf16.msra.mxu0 0
      %900 = vmatprep.subr.bf16.mxu0 0
      %901 = vmatpush1.bf16.msra.mxu0 0
      %902 = vmatprep.subr.bf16.mxu0 0
      %903 = vmatpush1.bf16.msra.mxu0 0
      %904 = vmatprep.subr.bf16.mxu0 0
      %905 = vmatpush1.bf16.msra.mxu0 0
      %906 = vmatprep.subr.bf16.mxu0 0
      %907 = vmatpush1.bf16.msra.mxu0 %v894
      %908 = vmatprep.subr.bf16.mxu0 0
      %909 = vmatpush1.bf16.msra.mxu0 %v875
      %910 = vmatprep.subr.bf16.mxu0 0
      %911 = vmatpush1.bf16.msra.mxu0 %v874
      %912 = vmatprep.subr.bf16.mxu0 0
      %913 = vmatpush2.bf16.msra.mxu0 0
      %914 = vmatprep.subr.bf16.mxu0 0
      %915 = vmatpush2.bf16.msra.mxu0 0
      %916 = vmatprep.subr.bf16.mxu0 0
      %917 = vmatpush2.bf16.msra.mxu0 0
      %918 = vmatprep.subr.bf16.mxu0 0
      %919 = vmatpush2.bf16.msra.mxu0 0
      %920 = vmatprep.subr.bf16.mxu0 0
      %921 = vmatpush2.bf16.msra.mxu0 0
      %922 = vmatprep.subr.bf16.mxu0 0
      %923 = vmatpush2.bf16.msra.mxu0 0
      %924 = vmatprep.subr.bf16.mxu0 0
      %925 = vmatpush2.bf16.msra.mxu0 0
      %926 = vmatprep.subr.bf16.mxu0 0
      %927 = vmatpush2.bf16.msra.mxu0 0
      %928 = vmatprep.mubr.bf16.mxu0 0
      %929 = vmatmul.mubr.bf16.gmra.mxu0 %v881
      %v930 = vpop.f32.mrf.mxu0
      %v931 = vadd.f32 0.0, %v930
      %v932 = vpop.f32.mrf.mxu0
      %v933 = vpop.f32.mrf.mxu0
      %v934 = vadd.f32 0.0, %v933
      %v935 = vpop.f32.mrf.mxu0
      %936 = vmatprep.mubr.bf16.mxu0 0
      %937 = vmatmul.mubr.bf16.gmra.mxu0 %v884
      %v938 = vpop.f32.mrf.mxu0
      %v939 = vadd.f32 0.0, %v938
      %v940 = vpop.f32.mrf.mxu0
      %v941 = vpop.f32.mrf.mxu0
      %v942 = vadd.f32 0.0, %v941
      %v943 = vpop.f32.mrf.mxu0
      %944 = vmatprep.mubr.bf16.mxu0 0
      %945 = vmatmul.mubr.bf16.gmra.mxu0 %v887
      %v946 = vpop.f32.mrf.mxu0
      %v947 = vadd.f32 0.0, %v946
      %v948 = vpop.f32.mrf.mxu0
      %v949 = vpop.f32.mrf.mxu0
      %v950 = vadd.f32 0.0, %v949
      %v951 = vpop.f32.mrf.mxu0
      %952 = vmatprep.mubr.bf16.mxu0 0
      %953 = vmatmul.mubr.bf16.gmra.mxu0 %v890
      %v954 = vpop.f32.mrf.mxu0
      %v955 = vadd.f32 0.0, %v954
      %v956 = vpop.f32.mrf.mxu0
      %v957 = vpop.f32.mrf.mxu0
      %v958 = vadd.f32 0.0, %v957
      %v959 = vpop.f32.mrf.mxu0
      %960 = vdwg.mxu0
      %v961 = vpack.c.bf16 %v931, %v931
      %v962 = vpack.c.bf16 %v934, %v934
      %v963 = vpack.c.bf16 %v939, %v939
      %v964 = vpack.c.bf16 %v942, %v942
      %v965 = vpack.c.bf16 %v947, %v947
      %v966 = vpack.c.bf16 %v950, %v950
      %v967 = vpack.c.bf16 %v955, %v955
      %v968 = vpack.c.bf16 %v958, %v958
      %969 = vst [vmem:[%s398] sm:$0xf] %v961
      %970 = vst [vmem:[%s398 + $0x4] sm:$0xf] %v962
      %971 = vst [vmem:[%s398 + $0x8] sm:$0xf] %v963
      %972 = vst [vmem:[%s398 + $0xc] sm:$0xf] %v964
      %973 = vst [vmem:[%s398 + $0x10] sm:$0xf] %v965
      %974 = vst [vmem:[%s398 + $0x14] sm:$0xf] %v966
      %975 = vst [vmem:[%s398 + $0x18] sm:$0xf] %v967
      %976 = vst [vmem:[%s398 + $0x1c] sm:$0xf] %v968
      %v977 = vadd.f32 %v931, %v934
      %v978 = vadd.f32 %v977, %v939
      %v979 = vadd.f32 %v978, %v942
      %v980 = vadd.f32 %v979, %v947
      %v981 = vadd.f32 %v980, %v950
      %v982 = vadd.f32 %v981, %v955
      %v983 = vadd.f32 %v982, %v958
      %v984 = vrot.slane %v983, 4
      %v985 = vadd.f32 %v983, %v984
      %v986 = vrot.slane %v985, 2
      %v987 = vadd.f32 %v985, %v986
      %v988 = vrot.slane %v987, 1
      %v989 = vadd.f32 %v987, %v988
      %v990 = vmul.f32 %v931, %v931
      %v991 = vmul.f32 %v934, %v934
      %v992 = vmul.f32 %v939, %v939
      %v993 = vmul.f32 %v942, %v942
      %v994 = vmul.f32 %v947, %v947
      %v995 = vmul.f32 %v950, %v950
      %v996 = vmul.f32 %v955, %v955
      %v997 = vmul.f32 %v958, %v958
      %v998 = vadd.f32 %v990, %v991
      %v999 = vadd.f32 %v998, %v992
      %v1000 = vadd.f32 %v999, %v993
      %v1001 = vadd.f32 %v1000, %v994
      %v1002 = vadd.f32 %v1001, %v995
      %v1003 = vadd.f32 %v1002, %v996
      %v1004 = vadd.f32 %v1003, %v997
      %v1005 = vrot.slane %v1004, 4
      %v1006 = vadd.f32 %v1004, %v1005
      %v1007 = vrot.slane %v1006, 2
      %v1008 = vadd.f32 %v1006, %v1007
      %v1009 = vrot.slane %v1008, 1
      %v1010 = vadd.f32 %v1008, %v1009
      %vm1011 = vcmask 1040384
      %v1012 = vsel %vm1011, %v989, %v1010
      %1013 = vst [vmem:[%s406] sm:$0x3] %v1012
      %s1014 = smul.u32 8, %s22
      %p1015 = scmp.lt.s32.totalorder %s21, 1
      %s1016 = scalar_select %p1015, %s21, 1
      %p1017 = scmp.lt.s32.totalorder %s1014, 7
      %s1018 = scalar_select %p1017, %s1014, 7
      %s1019 = smul.addr %s1016, 8
      %s1020 = sadd.s32 %s1018, %s1019
      %s1021 = smul.addr %s1020, 4
      %s1022 = scalar_lea.vmem %s4, %s1021
      %p1023 = scmp.lt.s32.totalorder %s21, 1
      %s1024 = scalar_select %p1023, %s21, 1
      %p1025 = scmp.lt.s32.totalorder %s22, 0
      %s1026 = scalar_select %p1025, %s22, 0
      %s1027 = sadd.s32 %s1026, %s1024
      %s1028 = smul.addr %s1027, 2
      %s1029 = scalar_lea.vmem %s5, %s1028
      // Predicated region
      $region37: #{down_forward.6} parent=35 // pred_check
        %p1030 = pneg %p162
      $region38: #{down_forward.6} parent=35 // pred_check_branch
        %1032 = sbr.rel (%p1030) target = $region40
      $region39: #{down_forward.6} parent=35 // pred_region
        %s1033 = smul.u32 8, %s22
      $region40: #{down_forward.6} parent=35 // pred_fallthru
        _
      // Predicated region
      $region41: #{down_forward.6} parent=35 // pred_check
        %p1034 = pneg %p190
      $region42: #{down_forward.6} parent=35 // pred_check_branch
        %1036 = sbr.rel (%p1034) target = $region44
      $region43: #{down_forward.6} parent=35 // pred_region
        _
      $region44: #{down_forward.6} parent=35 // pred_fallthru
        _
    $region36: #{down_forward.6} parent=5 // pred_fallthru
      _
    %p1037 = scmp.le.s32.totalorder 2, %s12
    // Predicated region
    $region45: #{down_forward.6} parent=5 // pred_check
      %p1038 = pneg %p1037
    $region46: #{down_forward.6} parent=5 // pred_check_branch
      %1040 = sbr.rel (%p1038) target = $region48
    $region47: #{down_forward.6} parent=5 // pred_region
      %s1041 = ssub.s32 %s12, 2
      // Predicated region
      $region49: #{down_forward.6} parent=47 // pred_check
        %p1042 = pneg %p168
      $region50: #{down_forward.6} parent=47 // pred_check_branch
        %1044 = sbr.rel (%p1042) target = $region52
      $region51: #{down_forward.6} parent=47 // pred_region
        %s1045 = smul.u32 8, %s24
        %p1046 = scmp.lt.s32.totalorder %s23, 1
        %s1047 = scalar_select %p1046, %s23, 1
        %p1048 = scmp.lt.s32.totalorder %s1045, 7
        %s1049 = scalar_select %p1048, %s1045, 7
        %s1050 = smul.addr %s1047, 8
        %s1051 = sadd.s32 %s1049, %s1050
        %s1052 = smul.addr %s1051, 4
        %s1053 = scalar_lea.vmem %s4, %s1052
      $region52: #{down_forward.6} parent=47 // pred_fallthru
        _
      // Predicated region
      $region53: #{down_forward.6} parent=47 // pred_check
        %p1054 = pneg %p196
      $region54: #{down_forward.6} parent=47 // pred_check_branch
        %1056 = sbr.rel (%p1054) target = $region56
      $region55: #{down_forward.6} parent=47 // pred_region
        %p1057 = scmp.lt.s32.totalorder %s23, 1
        %s1058 = scalar_select %p1057, %s23, 1
        %p1059 = scmp.lt.s32.totalorder %s24, 0
        %s1060 = scalar_select %p1059, %s24, 0
        %s1061 = sadd.s32 %s1060, %s1058
        %s1062 = smul.addr %s1061, 2
        %s1063 = scalar_lea.vmem %s5, %s1062
      $region56: #{down_forward.6} parent=47 // pred_fallthru
        _
    $region48: #{down_forward.6} parent=5 // pred_fallthru
      _
  $region6: #{down_forward.6} parent=0 // loop_footer
    %s16 = sadd.s32 1, %s12
  $region7: #{down_forward.6} parent=0 // loop_footer_branch
    %11 = sbr.rel target = $region3
  $region8: #{down_forward.6} parent=0 // loop_exit
    _

// kernel: down_forward.5
$region0: #{down_forward.5}
  #allocation0 [shape = 'u32[]', space=smem, size = 0x4, offset = 0x4, fixed_abs, tag = 'smem constant byte address 0x4 - core index']
  #allocation1 [shape = 'u32[144,128]{1,0:T(1,128)}', space=vmem, size = 0x12000, scoped, tag = 'internal scratch']
  %s0 = inlined_call_operand.vmem [shape: f32[2,16,16,4], index: 0, kind: input, shape index: {}]
  %s1 = inlined_call_operand.vmem [shape: bf16[2,8,8,4], index: 1, kind: output, shape index: {}]
  %s2 = sld [smem:[#allocation0]]
  $region37: #{down_forward.5} parent=0
    _
  %s4 = ssub.s32 1, %s2
  %s5 = scalar_select 0, %s4, %s2
  loop: start=0, step=1, limit=4
  $region2: #{down_forward.5} parent=0 // loop_pre_header
    _
  $region3: #{down_forward.5} parent=0 // loop_header
    %s7 = sphi 0, %s11
    %p8 = scmp.ge.s32.totalorder %s7, 4
    %s14 = sphi 0, %s26
    %s15 = sphi 0, %s22
    %s16 = sphi 0, %s14
    %s17 = sphi 0, %s15
    %s18 = sphi 0, %s16
    %s19 = sphi 0, %s17
    %s31 = sphi 0, %s33
    %s34 = sphi 0, %s31
    %s35 = sphi 0, %s34
    %s51 = sphi 0, %s35
    %s59 = sphi 0, %s61
    %s62 = sphi 0, %s59
    %s63 = sphi 0, %s62
    %s79 = sphi 0, %s63
  $region4: #{down_forward.5} parent=0 // loop_header_branch
    %10 = sbr.rel (%p8) target = $region8
  $region5: #{down_forward.5} parent=0 // loop_body
    %s12 = ssub.s32 %s7, 1
    %s13 = ssub.s32 %s7, 2
    %s20 = sadd.s32 1, %s15
    %p21 = scmp.ge.s32.totalorder %s20, 1
    %s22 = scalar_select %p21, 0, %s20
    %s23 = sadd.s32 1, %s14
    %s24 = scalar_select %p21, %s23, %s14
    %p25 = scmp.ge.s32.totalorder %s24, 2
    %s26 = scalar_select %p25, 0, %s24
    %s27 = ssub.s32 %s14, %s26
    %s28 = ssub.s32 %s15, %s22
    %s29 = sor.u32 %s27, %s28
    %p30 = scmp.eq.s32.totalorder %s29, 0
    %s32 = sadd.s32 %s31, 1
    %s33 = scalar_select %p30, %s31, %s32
    %p36 = pneg %p30
    %p37 = scmp.eq.s32.totalorder %s7, 1
    %p38 = por %p36, %p37
    %p39 = scmp.ne.s32.totalorder %s31, %s34
    %p40 = scmp.eq.s32.totalorder %s7, 0
    %p41 = por %p39, %p40
    %p42 = scmp.ne.s32.totalorder %s31, %s34
    %p43 = scmp.eq.s32.totalorder %s12, 1
    %p44 = por %p42, %p43
    %p45 = scmp.ne.s32.totalorder %s34, %s35
    %p46 = scmp.eq.s32.totalorder %s12, 0
    %p47 = por %p45, %p46
    %p48 = scmp.ne.s32.totalorder %s34, %s35
    %p49 = scmp.eq.s32.totalorder %s13, 1
    %p50 = por %p48, %p49
    %p52 = scmp.ne.s32.totalorder %s35, %s51
    %p53 = scmp.eq.s32.totalorder %s13, 0
    %p54 = por %p52, %p53
    %s55 = ssub.s32 %s14, %s26
    %s56 = ssub.s32 %s15, %s22
    %s57 = sor.u32 %s55, %s56
    %p58 = scmp.eq.s32.totalorder %s57, 0
    %s60 = sadd.s32 %s59, 1
    %s61 = scalar_select %p58, %s59, %s60
    %p64 = pneg %p58
    %p65 = scmp.eq.s32.totalorder %s7, 1
    %p66 = por %p64, %p65
    %p67 = scmp.ne.s32.totalorder %s59, %s62
    %p68 = scmp.eq.s32.totalorder %s7, 0
    %p69 = por %p67, %p68
    %p70 = scmp.ne.s32.totalorder %s59, %s62
    %p71 = scmp.eq.s32.totalorder %s12, 1
    %p72 = por %p70, %p71
    %p73 = scmp.ne.s32.totalorder %s62, %s63
    %p74 = scmp.eq.s32.totalorder %s12, 0
    %p75 = por %p73, %p74
    %p76 = scmp.ne.s32.totalorder %s62, %s63
    %p77 = scmp.eq.s32.totalorder %s13, 1
    %p78 = por %p76, %p77
    %p80 = scmp.ne.s32.totalorder %s63, %s79
    %p81 = scmp.eq.s32.totalorder %s13, 0
    %p82 = por %p80, %p81
    %p83 = scmp.le.s32.totalorder 1, %s7
    %p84 = scmp.lt.s32.totalorder %s7, 3
    %p85 = pnand %p83, %p84
    %p86 = pneg %p85
    // Predicated region
    $region9: #{down_forward.5} parent=5 // pred_check
      _
    $region10: #{down_forward.5} parent=5 // pred_check_branch
      %88 = sbr.rel (%p85) target = $region12
    $region11: #{down_forward.5} parent=5 // pred_region
      %s89 = ssub.s32 %s7, 1
    $region12: #{down_forward.5} parent=5 // pred_fallthru
      _
    %p90 = scmp.lt.s32.totalorder %s7, 2
    // Predicated region
    $region13: #{down_forward.5} parent=5 // pred_check
      %p91 = pneg %p90
    $region14: #{down_forward.5} parent=5 // pred_check_branch
      %93 = sbr.rel (%p91) target = $region16
    $region15: #{down_forward.5} parent=5 // pred_region
      // Predicated region
      $region17: #{down_forward.5} parent=15 // pred_check
        %p94 = pneg %p41
      $region18: #{down_forward.5} parent=15 // pred_check_branch
        %96 = sbr.rel (%p94) target = $region20
      $region19: #{down_forward.5} parent=15 // pred_region
        %s97 = smul.u32 16, %s15
        %p98 = scmp.lt.s32.totalorder %s14, 1
        %s99 = scalar_select %p98, %s14, 1
        %p100 = scmp.lt.s32.totalorder %s97, 15
        %s101 = scalar_select %p100, %s97, 15
        %s102 = smul.addr %s101, 2
        %s103 = smul.addr %s99, 32
        %s104 = sadd.s32 %s102, %s103
        %s105 = smul.addr %s104, 8
        %s106 = scalar_lea.vmem %s0, %s105
        %s107 = smul.u32 16, %s15
      $region20: #{down_forward.5} parent=15 // pred_fallthru
        _
    $region16: #{down_forward.5} parent=5 // pred_fallthru
      _
    %p108 = scmp.le.s32.totalorder 1, %s7
    %p109 = scmp.lt.s32.totalorder %s7, 3
    %p110 = pnand %p108, %p109
    %p111 = pneg %p110
    // Predicated region
    $region21: #{down_forward.5} parent=5 // pred_check
      _
    $region22: #{down_forward.5} parent=5 // pred_check_branch
      %113 = sbr.rel (%p110) target = $region24
    $region23: #{down_forward.5} parent=5 // pred_region
      %s114 = ssub.s32 %s7, 1
      %s115 = smul.u32 16, %s17
      %p116 = scmp.lt.s32.totalorder %s16, 1
      %s117 = scalar_select %p116, %s16, 1
      %p118 = scmp.lt.s32.totalorder %s115, 15
      %s119 = scalar_select %p118, %s115, 15
      %s120 = smul.addr %s119, 2
      %s121 = smul.addr %s117, 32
      %s122 = sadd.s32 %s120, %s121
      %s123 = smul.addr %s122, 8
      %s124 = scalar_lea.vmem %s0, %s123
      %p125 = pneg %p47
      %p126 = pneg %p44
      %p127 = pneg %p75
      %p128 = pneg %p72
      %s129 = smul.u32 8, %s17
      %p130 = scmp.lt.s32.totalorder %s16, 1
      %s131 = scalar_select %p130, %s16, 1
      %p132 = scmp.lt.s32.totalorder %s129, 7
      %s133 = scalar_select %p132, %s129, 7
      %s134 = smul.addr %s131, 8
      %s135 = sadd.s32 %s133, %s134
      %s136 = smul.addr %s135, 4
      %s137 = scalar_lea.vmem %s1, %s136
      %s138 = smul.u32 16, %s17
      %p139 = scmp.lt.s32.totalorder %s16, 1
      %s140 = scalar_select %p139, %s16, 1
      %p141 = scmp.lt.s32.totalorder %s138, 15
      %s142 = scalar_select %p141, %s138, 15
      %s143 = smul.addr %s142, 2
      %s144 = smul.addr %s140, 32
      %s145 = sadd.s32 %s143, %s144
      %s146 = smul.addr %s145, 8
      %s147 = scalar_lea.vmem %s0, %s146
      %s148 = smul.u32 16, %s17
      %s149 = smul.u32 8, %s17
      %p150 = scmp.lt.s32.totalorder %s16, 1
      %s151 = scalar_select %p150, %s16, 1
      %p152 = scmp.lt.s32.totalorder %s149, 7
      %s153 = scalar_select %p152, %s149, 7
      %s154 = smul.addr %s151, 8
      %s155 = sadd.s32 %s153, %s154
      %s156 = smul.addr %s155, 4
      %s157 = scalar_lea.vmem %s1, %s156
      %s158 = smul.u32 8, %s17
      %v159 = vld [vmem:[%s147] sm:$0xff]
      %v160 = vld [vmem:[%s147 + $0x8] sm:$0xff]
      %v161 = vld [vmem:[%s147 + $0x10] sm:$0xff]
      %v162 = vld [vmem:[%s147 + $0x18] sm:$0xff]
      %v163 = vld [vmem:[%s147 + $0x20] sm:$0xff]
      %v164 = vld [vmem:[%s147 + $0x28] sm:$0xff]
      %v165 = vld [vmem:[%s147 + $0x30] sm:$0xff]
      %v166 = vld [vmem:[%s147 + $0x38] sm:$0xff]
      %v167 = vld [vmem:[%s147 + $0x40] sm:$0xff]
      %v168 = vld [vmem:[%s147 + $0x48] sm:$0xff]
      %v169 = vld [vmem:[%s147 + $0x50] sm:$0xff]
      %v170 = vld [vmem:[%s147 + $0x58] sm:$0xff]
      %v171 = vld [vmem:[%s147 + $0x60] sm:$0xff]
      %v172 = vld [vmem:[%s147 + $0x68] sm:$0xff]
      %v173 = vld [vmem:[%s147 + $0x70] sm:$0xff]
      %v174 = vld [vmem:[%s147 + $0x78] sm:$0xff]
      %v175 = vld [vmem:[%s147 + $0x80] sm:$0xff]
      %v176 = vld [vmem:[%s147 + $0x88] sm:$0xff]
      %v177 = vld [vmem:[%s147 + $0x90] sm:$0xff]
      %v178 = vld [vmem:[%s147 + $0x98] sm:$0xff]
      %v179 = vld [vmem:[%s147 + $0xa0] sm:$0xff]
      %v180 = vld [vmem:[%s147 + $0xa8] sm:$0xff]
      %v181 = vld [vmem:[%s147 + $0xb0] sm:$0xff]
      %v182 = vld [vmem:[%s147 + $0xb8] sm:$0xff]
      %v183 = vld [vmem:[%s147 + $0xc0] sm:$0xff]
      %v184 = vld [vmem:[%s147 + $0xc8] sm:$0xff]
      %v185 = vld [vmem:[%s147 + $0xd0] sm:$0xff]
      %v186 = vld [vmem:[%s147 + $0xd8] sm:$0xff]
      %v187 = vld [vmem:[%s147 + $0xe0] sm:$0xff]
      %v188 = vld [vmem:[%s147 + $0xe8] sm:$0xff]
      %v189 = vld [vmem:[%s147 + $0xf0] sm:$0xff]
      %v190 = vld [vmem:[%s147 + $0xf8] sm:$0xff]
      %v223 = vcombine.high %v159, %v159
      %v225 = vunpack.c.l.s4 1983009808
      %v226 = vunpack.c.0.s8 %v225
      %v227 = vlaneseq
      %v228 = vshrl.u32 %v227, 7
      %v229 = vsub.s32 %v226, %v228
      %v230 = vrot.slane %v159, %v229
      %v232 = vunpack.c.l.s4 1983009808
      %v233 = vunpack.c.0.s8 %v232
      %v234 = vlaneseq
      %v235 = vshrl.u32 %v234, 7
      %v236 = vsub.s32 %v233, %v235
      %v237 = vrot.slane %v223, %v236
      %v238 = vcombine.high %v230, %v230
      %v239 = vcombine.high %v237, %v237
      %v240 = vcombine.high %v160, %v160
      %v242 = vunpack.c.l.s4 1983009808
      %v243 = vunpack.c.0.s8 %v242
      %v244 = vlaneseq
      %v245 = vshrl.u32 %v244, 7
      %v246 = vsub.s32 %v243, %v245
      %v247 = vrot.slane %v160, %v246
      %v249 = vunpack.c.l.s4 1983009808
      %v250 = vunpack.c.0.s8 %v249
      %v251 = vlaneseq
      %v252 = vshrl.u32 %v251, 7
      %v253 = vsub.s32 %v250, %v252
      %v254 = vrot.slane %v240, %v253
      %v255 = vcombine.high %v247, %v247
      %v256 = vcombine.high %v254, %v254
      %v257 = vcombine.high %v161, %v161
      %v259 = vunpack.c.l.s4 1983009808
      %v260 = vunpack.c.0.s8 %v259
      %v261 = vlaneseq
      %v262 = vshrl.u32 %v261, 7
      %v263 = vsub.s32 %v260, %v262
      %v264 = vrot.slane %v161, %v263
      %v266 = vunpack.c.l.s4 1983009808
      %v267 = vunpack.c.0.s8 %v266
      %v268 = vlaneseq
      %v269 = vshrl.u32 %v268, 7
      %v270 = vsub.s32 %v267, %v269
      %v271 = vrot.slane %v257, %v270
      %v272 = vcombine.high %v264, %v264
      %v273 = vcombine.high %v271, %v271
      %v274 = vcombine.high %v162, %v162
      %v276 = vunpack.c.l.s4 1983009808
      %v277 = vunpack.c.0.s8 %v276
      %v278 = vlaneseq
      %v279 = vshrl.u32 %v278, 7
      %v280 = vsub.s32 %v277, %v279
      %v281 = vrot.slane %v162, %v280
      %v283 = vunpack.c.l.s4 1983009808
      %v284 = vunpack.c.0.s8 %v283
      %v285 = vlaneseq
      %v286 = vshrl.u32 %v285, 7
      %v287 = vsub.s32 %v284, %v286
      %v288 = vrot.slane %v274, %v287
      %v289 = vcombine.high %v281, %v281
      %v290 = vcombine.high %v288, %v288
      %v291 = vcombine.high %v163, %v163
      %v293 = vunpack.c.l.s4 1983009808
      %v294 = vunpack.c.0.s8 %v293
      %v295 = vlaneseq
      %v296 = vshrl.u32 %v295, 7
      %v297 = vsub.s32 %v294, %v296
      %v298 = vrot.slane %v163, %v297
      %v300 = vunpack.c.l.s4 1983009808
      %v301 = vunpack.c.0.s8 %v300
      %v302 = vlaneseq
      %v303 = vshrl.u32 %v302, 7
      %v304 = vsub.s32 %v301, %v303
      %v305 = vrot.slane %v291, %v304
      %v306 = vcombine.high %v298, %v298
      %v307 = vcombine.high %v305, %v305
      %v308 = vcombine.high %v164, %v164
      %v310 = vunpack.c.l.s4 1983009808
      %v311 = vunpack.c.0.s8 %v310
      %v312 = vlaneseq
      %v313 = vshrl.u32 %v312, 7
      %v314 = vsub.s32 %v311, %v313
      %v315 = vrot.slane %v164, %v314
      %v317 = vunpack.c.l.s4 1983009808
      %v318 = vunpack.c.0.s8 %v317
      %v319 = vlaneseq
      %v320 = vshrl.u32 %v319, 7
      %v321 = vsub.s32 %v318, %v320
      %v322 = vrot.slane %v308, %v321
      %v323 = vcombine.high %v315, %v315
      %v324 = vcombine.high %v322, %v322
      %v325 = vcombine.high %v165, %v165
      %v327 = vunpack.c.l.s4 1983009808
      %v328 = vunpack.c.0.s8 %v327
      %v329 = vlaneseq
      %v330 = vshrl.u32 %v329, 7
      %v331 = vsub.s32 %v328, %v330
      %v332 = vrot.slane %v165, %v331
      %v334 = vunpack.c.l.s4 1983009808
      %v335 = vunpack.c.0.s8 %v334
      %v336 = vlaneseq
      %v337 = vshrl.u32 %v336, 7
      %v338 = vsub.s32 %v335, %v337
      %v339 = vrot.slane %v325, %v338
      %v340 = vcombine.high %v332, %v332
      %v341 = vcombine.high %v339, %v339
      %v342 = vcombine.high %v166, %v166
      %v344 = vunpack.c.l.s4 1983009808
      %v345 = vunpack.c.0.s8 %v344
      %v346 = vlaneseq
      %v347 = vshrl.u32 %v346, 7
      %v348 = vsub.s32 %v345, %v347
      %v349 = vrot.slane %v166, %v348
      %v351 = vunpack.c.l.s4 1983009808
      %v352 = vunpack.c.0.s8 %v351
      %v353 = vlaneseq
      %v354 = vshrl.u32 %v353, 7
      %v355 = vsub.s32 %v352, %v354
      %v356 = vrot.slane %v342, %v355
      %v357 = vcombine.high %v349, %v349
      %v358 = vcombine.high %v356, %v356
      %v359 = vcombine.high %v167, %v167
      %v361 = vunpack.c.l.s4 1983009808
      %v362 = vunpack.c.0.s8 %v361
      %v363 = vlaneseq
      %v364 = vshrl.u32 %v363, 7
      %v365 = vsub.s32 %v362, %v364
      %v366 = vrot.slane %v167, %v365
      %v368 = vunpack.c.l.s4 1983009808
      %v369 = vunpack.c.0.s8 %v368
      %v370 = vlaneseq
      %v371 = vshrl.u32 %v370, 7
      %v372 = vsub.s32 %v369, %v371
      %v373 = vrot.slane %v359, %v372
      %v374 = vcombine.high %v366, %v366
      %v375 = vcombine.high %v373, %v373
      %v376 = vcombine.high %v168, %v168
      %v378 = vunpack.c.l.s4 1983009808
      %v379 = vunpack.c.0.s8 %v378
      %v380 = vlaneseq
      %v381 = vshrl.u32 %v380, 7
      %v382 = vsub.s32 %v379, %v381
      %v383 = vrot.slane %v168, %v382
      %v385 = vunpack.c.l.s4 1983009808
      %v386 = vunpack.c.0.s8 %v385
      %v387 = vlaneseq
      %v388 = vshrl.u32 %v387, 7
      %v389 = vsub.s32 %v386, %v388
      %v390 = vrot.slane %v376, %v389
      %v391 = vcombine.high %v383, %v383
      %v392 = vcombine.high %v390, %v390
      %v393 = vcombine.high %v169, %v169
      %v395 = vunpack.c.l.s4 1983009808
      %v396 = vunpack.c.0.s8 %v395
      %v397 = vlaneseq
      %v398 = vshrl.u32 %v397, 7
      %v399 = vsub.s32 %v396, %v398
      %v400 = vrot.slane %v169, %v399
      %v402 = vunpack.c.l.s4 1983009808
      %v403 = vunpack.c.0.s8 %v402
      %v404 = vlaneseq
      %v405 = vshrl.u32 %v404, 7
      %v406 = vsub.s32 %v403, %v405
      %v407 = vrot.slane %v393, %v406
      %v408 = vcombine.high %v400, %v400
      %v409 = vcombine.high %v407, %v407
      %v410 = vcombine.high %v170, %v170
      %v412 = vunpack.c.l.s4 1983009808
      %v413 = vunpack.c.0.s8 %v412
      %v414 = vlaneseq
      %v415 = vshrl.u32 %v414, 7
      %v416 = vsub.s32 %v413, %v415
      %v417 = vrot.slane %v170, %v416
      %v419 = vunpack.c.l.s4 1983009808
      %v420 = vunpack.c.0.s8 %v419
      %v421 = vlaneseq
      %v422 = vshrl.u32 %v421, 7
      %v423 = vsub.s32 %v420, %v422
      %v424 = vrot.slane %v410, %v423
      %v425 = vcombine.high %v417, %v417
      %v426 = vcombine.high %v424, %v424
      %v427 = vcombine.high %v171, %v171
      %v429 = vunpack.c.l.s4 1983009808
      %v430 = vunpack.c.0.s8 %v429
      %v431 = vlaneseq
      %v432 = vshrl.u32 %v431, 7
      %v433 = vsub.s32 %v430, %v432
      %v434 = vrot.slane %v171, %v433
      %v436 = vunpack.c.l.s4 1983009808
      %v437 = vunpack.c.0.s8 %v436
      %v438 = vlaneseq
      %v439 = vshrl.u32 %v438, 7
      %v440 = vsub.s32 %v437, %v439
      %v441 = vrot.slane %v427, %v440
      %v442 = vcombine.high %v434, %v434
      %v443 = vcombine.high %v441, %v441
      %v444 = vcombine.high %v172, %v172
      %v446 = vunpack.c.l.s4 1983009808
      %v447 = vunpack.c.0.s8 %v446
      %v448 = vlaneseq
      %v449 = vshrl.u32 %v448, 7
      %v450 = vsub.s32 %v447, %v449
      %v451 = vrot.slane %v172, %v450
      %v453 = vunpack.c.l.s4 1983009808
      %v454 = vunpack.c.0.s8 %v453
      %v455 = vlaneseq
      %v456 = vshrl.u32 %v455, 7
      %v457 = vsub.s32 %v454, %v456
      %v458 = vrot.slane %v444, %v457
      %v459 = vcombine.high %v451, %v451
      %v460 = vcombine.high %v458, %v458
      %v461 = vcombine.high %v173, %v173
      %v463 = vunpack.c.l.s4 1983009808
      %v464 = vunpack.c.0.s8 %v463
      %v465 = vlaneseq
      %v466 = vshrl.u32 %v465, 7
      %v467 = vsub.s32 %v464, %v466
      %v468 = vrot.slane %v173, %v467
      %v470 = vunpack.c.l.s4 1983009808
      %v471 = vunpack.c.0.s8 %v470
      %v472 = vlaneseq
      %v473 = vshrl.u32 %v472, 7
      %v474 = vsub.s32 %v471, %v473
      %v475 = vrot.slane %v461, %v474
      %v476 = vcombine.high %v468, %v468
      %v477 = vcombine.high %v475, %v475
      %v478 = vcombine.high %v174, %v174
      %v480 = vunpack.c.l.s4 1983009808
      %v481 = vunpack.c.0.s8 %v480
      %v482 = vlaneseq
      %v483 = vshrl.u32 %v482, 7
      %v484 = vsub.s32 %v481, %v483
      %v485 = vrot.slane %v174, %v484
      %v487 = vunpack.c.l.s4 1983009808
      %v488 = vunpack.c.0.s8 %v487
      %v489 = vlaneseq
      %v490 = vshrl.u32 %v489, 7
      %v491 = vsub.s32 %v488, %v490
      %v492 = vrot.slane %v478, %v491
      %v493 = vcombine.high %v485, %v485
      %v494 = vcombine.high %v492, %v492
      %v495 = vcombine.high %v175, %v175
      %v497 = vunpack.c.l.s4 1983009808
      %v498 = vunpack.c.0.s8 %v497
      %v499 = vlaneseq
      %v500 = vshrl.u32 %v499, 7
      %v501 = vsub.s32 %v498, %v500
      %v502 = vrot.slane %v175, %v501
      %v504 = vunpack.c.l.s4 1983009808
      %v505 = vunpack.c.0.s8 %v504
      %v506 = vlaneseq
      %v507 = vshrl.u32 %v506, 7
      %v508 = vsub.s32 %v505, %v507
      %v509 = vrot.slane %v495, %v508
      %v510 = vcombine.high %v502, %v502
      %v511 = vcombine.high %v509, %v509
      %v512 = vcombine.high %v176, %v176
      %v514 = vunpack.c.l.s4 1983009808
      %v515 = vunpack.c.0.s8 %v514
      %v516 = vlaneseq
      %v517 = vshrl.u32 %v516, 7
      %v518 = vsub.s32 %v515, %v517
      %v519 = vrot.slane %v176, %v518
      %v521 = vunpack.c.l.s4 1983009808
      %v522 = vunpack.c.0.s8 %v521
      %v523 = vlaneseq
      %v524 = vshrl.u32 %v523, 7
      %v525 = vsub.s32 %v522, %v524
      %v526 = vrot.slane %v512, %v525
      %v527 = vcombine.high %v519, %v519
      %v528 = vcombine.high %v526, %v526
      %v529 = vcombine.high %v177, %v177
      %v531 = vunpack.c.l.s4 1983009808
      %v532 = vunpack.c.0.s8 %v531
      %v533 = vlaneseq
      %v534 = vshrl.u32 %v533, 7
      %v535 = vsub.s32 %v532, %v534
      %v536 = vrot.slane %v177, %v535
      %v538 = vunpack.c.l.s4 1983009808
      %v539 = vunpack.c.0.s8 %v538
      %v540 = vlaneseq
      %v541 = vshrl.u32 %v540, 7
      %v542 = vsub.s32 %v539, %v541
      %v543 = vrot.slane %v529, %v542
      %v544 = vcombine.high %v536, %v536
      %v545 = vcombine.high %v543, %v543
      %v546 = vcombine.high %v178, %v178
      %v548 = vunpack.c.l.s4 1983009808
      %v549 = vunpack.c.0.s8 %v548
      %v550 = vlaneseq
      %v551 = vshrl.u32 %v550, 7
      %v552 = vsub.s32 %v549, %v551
      %v553 = vrot.slane %v178, %v552
      %v555 = vunpack.c.l.s4 1983009808
      %v556 = vunpack.c.0.s8 %v555
      %v557 = vlaneseq
      %v558 = vshrl.u32 %v557, 7
      %v559 = vsub.s32 %v556, %v558
      %v560 = vrot.slane %v546, %v559
      %v561 = vcombine.high %v553, %v553
      %v562 = vcombine.high %v560, %v560
      %v563 = vcombine.high %v179, %v179
      %v565 = vunpack.c.l.s4 1983009808
      %v566 = vunpack.c.0.s8 %v565
      %v567 = vlaneseq
      %v568 = vshrl.u32 %v567, 7
      %v569 = vsub.s32 %v566, %v568
      %v570 = vrot.slane %v179, %v569
      %v572 = vunpack.c.l.s4 1983009808
      %v573 = vunpack.c.0.s8 %v572
      %v574 = vlaneseq
      %v575 = vshrl.u32 %v574, 7
      %v576 = vsub.s32 %v573, %v575
      %v577 = vrot.slane %v563, %v576
      %v578 = vcombine.high %v570, %v570
      %v579 = vcombine.high %v577, %v577
      %v580 = vcombine.high %v180, %v180
      %v582 = vunpack.c.l.s4 1983009808
      %v583 = vunpack.c.0.s8 %v582
      %v584 = vlaneseq
      %v585 = vshrl.u32 %v584, 7
      %v586 = vsub.s32 %v583, %v585
      %v587 = vrot.slane %v180, %v586
      %v589 = vunpack.c.l.s4 1983009808
      %v590 = vunpack.c.0.s8 %v589
      %v591 = vlaneseq
      %v592 = vshrl.u32 %v591, 7
      %v593 = vsub.s32 %v590, %v592
      %v594 = vrot.slane %v580, %v593
      %v595 = vcombine.high %v587, %v587
      %v596 = vcombine.high %v594, %v594
      %v597 = vcombine.high %v181, %v181
      %v599 = vunpack.c.l.s4 1983009808
      %v600 = vunpack.c.0.s8 %v599
      %v601 = vlaneseq
      %v602 = vshrl.u32 %v601, 7
      %v603 = vsub.s32 %v600, %v602
      %v604 = vrot.slane %v181, %v603
      %v606 = vunpack.c.l.s4 1983009808
      %v607 = vunpack.c.0.s8 %v606
      %v608 = vlaneseq
      %v609 = vshrl.u32 %v608, 7
      %v610 = vsub.s32 %v607, %v609
      %v611 = vrot.slane %v597, %v610
      %v612 = vcombine.high %v604, %v604
      %v613 = vcombine.high %v611, %v611
      %v614 = vcombine.high %v182, %v182
      %v616 = vunpack.c.l.s4 1983009808
      %v617 = vunpack.c.0.s8 %v616
      %v618 = vlaneseq
      %v619 = vshrl.u32 %v618, 7
      %v620 = vsub.s32 %v617, %v619
      %v621 = vrot.slane %v182, %v620
      %v623 = vunpack.c.l.s4 1983009808
      %v624 = vunpack.c.0.s8 %v623
      %v625 = vlaneseq
      %v626 = vshrl.u32 %v625, 7
      %v627 = vsub.s32 %v624, %v626
      %v628 = vrot.slane %v614, %v627
      %v629 = vcombine.high %v621, %v621
      %v630 = vcombine.high %v628, %v628
      %v631 = vcombine.high %v183, %v183
      %v633 = vunpack.c.l.s4 1983009808
      %v634 = vunpack.c.0.s8 %v633
      %v635 = vlaneseq
      %v636 = vshrl.u32 %v635, 7
      %v637 = vsub.s32 %v634, %v636
      %v638 = vrot.slane %v183, %v637
      %v640 = vunpack.c.l.s4 1983009808
      %v641 = vunpack.c.0.s8 %v640
      %v642 = vlaneseq
      %v643 = vshrl.u32 %v642, 7
      %v644 = vsub.s32 %v641, %v643
      %v645 = vrot.slane %v631, %v644
      %v646 = vcombine.high %v638, %v638
      %v647 = vcombine.high %v645, %v645
      %v648 = vcombine.high %v184, %v184
      %v650 = vunpack.c.l.s4 1983009808
      %v651 = vunpack.c.0.s8 %v650
      %v652 = vlaneseq
      %v653 = vshrl.u32 %v652, 7
      %v654 = vsub.s32 %v651, %v653
      %v655 = vrot.slane %v184, %v654
      %v657 = vunpack.c.l.s4 1983009808
      %v658 = vunpack.c.0.s8 %v657
      %v659 = vlaneseq
      %v660 = vshrl.u32 %v659, 7
      %v661 = vsub.s32 %v658, %v660
      %v662 = vrot.slane %v648, %v661
      %v663 = vcombine.high %v655, %v655
      %v664 = vcombine.high %v662, %v662
      %v665 = vcombine.high %v185, %v185
      %v667 = vunpack.c.l.s4 1983009808
      %v668 = vunpack.c.0.s8 %v667
      %v669 = vlaneseq
      %v670 = vshrl.u32 %v669, 7
      %v671 = vsub.s32 %v668, %v670
      %v672 = vrot.slane %v185, %v671
      %v674 = vunpack.c.l.s4 1983009808
      %v675 = vunpack.c.0.s8 %v674
      %v676 = vlaneseq
      %v677 = vshrl.u32 %v676, 7
      %v678 = vsub.s32 %v675, %v677
      %v679 = vrot.slane %v665, %v678
      %v680 = vcombine.high %v672, %v672
      %v681 = vcombine.high %v679, %v679
      %v682 = vcombine.high %v186, %v186
      %v684 = vunpack.c.l.s4 1983009808
      %v685 = vunpack.c.0.s8 %v684
      %v686 = vlaneseq
      %v687 = vshrl.u32 %v686, 7
      %v688 = vsub.s32 %v685, %v687
      %v689 = vrot.slane %v186, %v688
      %v691 = vunpack.c.l.s4 1983009808
      %v692 = vunpack.c.0.s8 %v691
      %v693 = vlaneseq
      %v694 = vshrl.u32 %v693, 7
      %v695 = vsub.s32 %v692, %v694
      %v696 = vrot.slane %v682, %v695
      %v697 = vcombine.high %v689, %v689
      %v698 = vcombine.high %v696, %v696
      %v699 = vcombine.high %v187, %v187
      %v701 = vunpack.c.l.s4 1983009808
      %v702 = vunpack.c.0.s8 %v701
      %v703 = vlaneseq
      %v704 = vshrl.u32 %v703, 7
      %v705 = vsub.s32 %v702, %v704
      %v706 = vrot.slane %v187, %v705
      %v708 = vunpack.c.l.s4 1983009808
      %v709 = vunpack.c.0.s8 %v708
      %v710 = vlaneseq
      %v711 = vshrl.u32 %v710, 7
      %v712 = vsub.s32 %v709, %v711
      %v713 = vrot.slane %v699, %v712
      %v714 = vcombine.high %v706, %v706
      %v715 = vcombine.high %v713, %v713
      %v716 = vcombine.high %v188, %v188
      %v718 = vunpack.c.l.s4 1983009808
      %v719 = vunpack.c.0.s8 %v718
      %v720 = vlaneseq
      %v721 = vshrl.u32 %v720, 7
      %v722 = vsub.s32 %v719, %v721
      %v723 = vrot.slane %v188, %v722
      %v725 = vunpack.c.l.s4 1983009808
      %v726 = vunpack.c.0.s8 %v725
      %v727 = vlaneseq
      %v728 = vshrl.u32 %v727, 7
      %v729 = vsub.s32 %v726, %v728
      %v730 = vrot.slane %v716, %v729
      %v731 = vcombine.high %v723, %v723
      %v732 = vcombine.high %v730, %v730
      %v733 = vcombine.high %v189, %v189
      %v735 = vunpack.c.l.s4 1983009808
      %v736 = vunpack.c.0.s8 %v735
      %v737 = vlaneseq
      %v738 = vshrl.u32 %v737, 7
      %v739 = vsub.s32 %v736, %v738
      %v740 = vrot.slane %v189, %v739
      %v742 = vunpack.c.l.s4 1983009808
      %v743 = vunpack.c.0.s8 %v742
      %v744 = vlaneseq
      %v745 = vshrl.u32 %v744, 7
      %v746 = vsub.s32 %v743, %v745
      %v747 = vrot.slane %v733, %v746
      %v748 = vcombine.high %v740, %v740
      %v749 = vcombine.high %v747, %v747
      %v750 = vcombine.high %v190, %v190
      %v752 = vunpack.c.l.s4 1983009808
      %v753 = vunpack.c.0.s8 %v752
      %v754 = vlaneseq
      %v755 = vshrl.u32 %v754, 7
      %v756 = vsub.s32 %v753, %v755
      %v757 = vrot.slane %v190, %v756
      %v759 = vunpack.c.l.s4 1983009808
      %v760 = vunpack.c.0.s8 %v759
      %v761 = vlaneseq
      %v762 = vshrl.u32 %v761, 7
      %v763 = vsub.s32 %v760, %v762
      %v764 = vrot.slane %v750, %v763
      %v765 = vcombine.high %v757, %v757
      %v766 = vcombine.high %v764, %v764
      %v895 = vmax.f32 %v230, %v264
      %v896 = vmax.f32 %v238, %v272
      %v897 = vmax.f32 %v237, %v271
      %v898 = vmax.f32 %v239, %v273
      %v899 = vmax.f32 %v247, %v281
      %v900 = vmax.f32 %v255, %v289
      %v901 = vmax.f32 %v254, %v288
      %v902 = vmax.f32 %v256, %v290
      %v903 = vmax.f32 %v298, %v332
      %v904 = vmax.f32 %v306, %v340
      %v905 = vmax.f32 %v305, %v339
      %v906 = vmax.f32 %v307, %v341
      %v907 = vmax.f32 %v315, %v349
      %v908 = vmax.f32 %v323, %v357
      %v909 = vmax.f32 %v322, %v356
      %v910 = vmax.f32 %v324, %v358
      %v911 = vmax.f32 %v366, %v400
      %v912 = vmax.f32 %v374, %v408
      %v913 = vmax.f32 %v373, %v407
      %v914 = vmax.f32 %v375, %v409
      %v915 = vmax.f32 %v383, %v417
      %v916 = vmax.f32 %v391, %v425
      %v917 = vmax.f32 %v390, %v424
      %v918 = vmax.f32 %v392, %v426
      %v919 = vmax.f32 %v434, %v468
      %v920 = vmax.f32 %v442, %v476
      %v921 = vmax.f32 %v441, %v475
      %v922 = vmax.f32 %v443, %v477
      %v923 = vmax.f32 %v451, %v485
      %v924 = vmax.f32 %v459, %v493
      %v925 = vmax.f32 %v458, %v492
      %v926 = vmax.f32 %v460, %v494
      %v927 = vmax.f32 %v502, %v536
      %v928 = vmax.f32 %v510, %v544
      %v929 = vmax.f32 %v509, %v543
      %v930 = vmax.f32 %v511, %v545
      %v931 = vmax.f32 %v519, %v553
      %v932 = vmax.f32 %v527, %v561
      %v933 = vmax.f32 %v526, %v560
      %v934 = vmax.f32 %v528, %v562
      %v935 = vmax.f32 %v570, %v604
      %v936 = vmax.f32 %v578, %v612
      %v937 = vmax.f32 %v577, %v611
      %v938 = vmax.f32 %v579, %v613
      %v939 = vmax.f32 %v587, %v621
      %v940 = vmax.f32 %v595, %v629
      %v941 = vmax.f32 %v594, %v628
      %v942 = vmax.f32 %v596, %v630
      %v943 = vmax.f32 %v638, %v672
      %v944 = vmax.f32 %v646, %v680
      %v945 = vmax.f32 %v645, %v679
      %v946 = vmax.f32 %v647, %v681
      %v947 = vmax.f32 %v655, %v689
      %v948 = vmax.f32 %v663, %v697
      %v949 = vmax.f32 %v662, %v696
      %v950 = vmax.f32 %v664, %v698
      %v951 = vmax.f32 %v706, %v740
      %v952 = vmax.f32 %v714, %v748
      %v953 = vmax.f32 %v713, %v747
      %v954 = vmax.f32 %v715, %v749
      %v955 = vmax.f32 %v723, %v757
      %v956 = vmax.f32 %v731, %v765
      %v957 = vmax.f32 %v730, %v764
      %v958 = vmax.f32 %v732, %v766
      %v1023 = vrot.slane %v895, 7
      %v1024 = vrot.slane %v1023, 2
      %v1025 = vrot.slane %v896, 7
      %v1026 = vrot.slane %v1025, 2
      %v1027 = vrot.slane %v897, 7
      %v1028 = vrot.slane %v1027, 2
      %v1029 = vrot.slane %v898, 7
      %v1030 = vrot.slane %v1029, 2
      %v1031 = vrot.slane %v899, 7
      %v1032 = vrot.slane %v1031, 2
      %v1033 = vrot.slane %v900, 7
      %v1034 = vrot.slane %v1033, 2
      %v1035 = vrot.slane %v901, 7
      %v1036 = vrot.slane %v1035, 2
      %v1037 = vrot.slane %v902, 7
      %v1038 = vrot.slane %v1037, 2
      %v1039 = vrot.slane %v903, 7
      %v1040 = vrot.slane %v1039, 2
      %v1041 = vrot.slane %v904, 7
      %v1042 = vrot.slane %v1041, 2
      %v1043 = vrot.slane %v905, 7
      %v1044 = vrot.slane %v1043, 2
      %v1045 = vrot.slane %v906, 7
      %v1046 = vrot.slane %v1045, 2
      %v1047 = vrot.slane %v907, 7
      %v1048 = vrot.slane %v1047, 2
      %v1049 = vrot.slane %v908, 7
      %v1050 = vrot.slane %v1049, 2
      %v1051 = vrot.slane %v909, 7
      %v1052 = vrot.slane %v1051, 2
      %v1053 = vrot.slane %v910, 7
      %v1054 = vrot.slane %v1053, 2
      %v1055 = vrot.slane %v911, 7
      %v1056 = vrot.slane %v1055, 2
      %v1057 = vrot.slane %v912, 7
      %v1058 = vrot.slane %v1057, 2
      %v1059 = vrot.slane %v913, 7
      %v1060 = vrot.slane %v1059, 2
      %v1061 = vrot.slane %v914, 7
      %v1062 = vrot.slane %v1061, 2
      %v1063 = vrot.slane %v915, 7
      %v1064 = vrot.slane %v1063, 2
      %v1065 = vrot.slane %v916, 7
      %v1066 = vrot.slane %v1065, 2
      %v1067 = vrot.slane %v917, 7
      %v1068 = vrot.slane %v1067, 2
      %v1069 = vrot.slane %v918, 7
      %v1070 = vrot.slane %v1069, 2
      %v1071 = vrot.slane %v919, 7
      %v1072 = vrot.slane %v1071, 2
      %v1073 = vrot.slane %v920, 7
      %v1074 = vrot.slane %v1073, 2
      %v1075 = vrot.slane %v921, 7
      %v1076 = vrot.slane %v1075, 2
      %v1077 = vrot.slane %v922, 7
      %v1078 = vrot.slane %v1077, 2
      %v1079 = vrot.slane %v923, 7
      %v1080 = vrot.slane %v1079, 2
      %v1081 = vrot.slane %v924, 7
      %v1082 = vrot.slane %v1081, 2
      %v1083 = vrot.slane %v925, 7
      %v1084 = vrot.slane %v1083, 2
      %v1085 = vrot.slane %v926, 7
      %v1086 = vrot.slane %v1085, 2
      %v1087 = vrot.slane %v927, 7
      %v1088 = vrot.slane %v1087, 2
      %v1089 = vrot.slane %v928, 7
      %v1090 = vrot.slane %v1089, 2
      %v1091 = vrot.slane %v929, 7
      %v1092 = vrot.slane %v1091, 2
      %v1093 = vrot.slane %v930, 7
      %v1094 = vrot.slane %v1093, 2
      %v1095 = vrot.slane %v931, 7
      %v1096 = vrot.slane %v1095, 2
      %v1097 = vrot.slane %v932, 7
      %v1098 = vrot.slane %v1097, 2
      %v1099 = vrot.slane %v933, 7
      %v1100 = vrot.slane %v1099, 2
      %v1101 = vrot.slane %v934, 7
      %v1102 = vrot.slane %v1101, 2
      %v1103 = vrot.slane %v935, 7
      %v1104 = vrot.slane %v1103, 2
      %v1105 = vrot.slane %v936, 7
      %v1106 = vrot.slane %v1105, 2
      %v1107 = vrot.slane %v937, 7
      %v1108 = vrot.slane %v1107, 2
      %v1109 = vrot.slane %v938, 7
      %v1110 = vrot.slane %v1109, 2
      %v1111 = vrot.slane %v939, 7
      %v1112 = vrot.slane %v1111, 2
      %v1113 = vrot.slane %v940, 7
      %v1114 = vrot.slane %v1113, 2
      %v1115 = vrot.slane %v941, 7
      %v1116 = vrot.slane %v1115, 2
      %v1117 = vrot.slane %v942, 7
      %v1118 = vrot.slane %v1117, 2
      %v1119 = vrot.slane %v943, 7
      %v1120 = vrot.slane %v1119, 2
      %v1121 = vrot.slane %v944, 7
      %v1122 = vrot.slane %v1121, 2
      %v1123 = vrot.slane %v945, 7
      %v1124 = vrot.slane %v1123, 2
      %v1125 = vrot.slane %v946, 7
      %v1126 = vrot.slane %v1125, 2
      %v1127 = vrot.slane %v947, 7
      %v1128 = vrot.slane %v1127, 2
      %v1129 = vrot.slane %v948, 7
      %v1130 = vrot.slane %v1129, 2
      %v1131 = vrot.slane %v949, 7
      %v1132 = vrot.slane %v1131, 2
      %v1133 = vrot.slane %v950, 7
      %v1134 = vrot.slane %v1133, 2
      %v1135 = vrot.slane %v951, 7
      %v1136 = vrot.slane %v1135, 2
      %v1137 = vrot.slane %v952, 7
      %v1138 = vrot.slane %v1137, 2
      %v1139 = vrot.slane %v953, 7
      %v1140 = vrot.slane %v1139, 2
      %v1141 = vrot.slane %v954, 7
      %v1142 = vrot.slane %v1141, 2
      %v1143 = vrot.slane %v955, 7
      %v1144 = vrot.slane %v1143, 2
      %v1145 = vrot.slane %v956, 7
      %v1146 = vrot.slane %v1145, 2
      %v1147 = vrot.slane %v957, 7
      %v1148 = vrot.slane %v1147, 2
      %v1149 = vrot.slane %v958, 7
      %v1150 = vrot.slane %v1149, 2
      %v1215 = vmax.f32 %v895, %v1024
      %v1216 = vmax.f32 %v896, %v1026
      %v1217 = vmax.f32 %v897, %v1028
      %v1218 = vmax.f32 %v898, %v1030
      %v1219 = vmax.f32 %v899, %v1032
      %v1220 = vmax.f32 %v900, %v1034
      %v1221 = vmax.f32 %v901, %v1036
      %v1222 = vmax.f32 %v902, %v1038
      %v1223 = vmax.f32 %v903, %v1040
      %v1224 = vmax.f32 %v904, %v1042
      %v1225 = vmax.f32 %v905, %v1044
      %v1226 = vmax.f32 %v906, %v1046
      %v1227 = vmax.f32 %v907, %v1048
      %v1228 = vmax.f32 %v908, %v1050
      %v1229 = vmax.f32 %v909, %v1052
      %v1230 = vmax.f32 %v910, %v1054
      %v1231 = vmax.f32 %v911, %v1056
      %v1232 = vmax.f32 %v912, %v1058
      %v1233 = vmax.f32 %v913, %v1060
      %v1234 = vmax.f32 %v914, %v1062
      %v1235 = vmax.f32 %v915, %v1064
      %v1236 = vmax.f32 %v916, %v1066
      %v1237 = vmax.f32 %v917, %v1068
      %v1238 = vmax.f32 %v918, %v1070
      %v1239 = vmax.f32 %v919, %v1072
      %v1240 = vmax.f32 %v920, %v1074
      %v1241 = vmax.f32 %v921, %v1076
      %v1242 = vmax.f32 %v922, %v1078
      %v1243 = vmax.f32 %v923, %v1080
      %v1244 = vmax.f32 %v924, %v1082
      %v1245 = vmax.f32 %v925, %v1084
      %v1246 = vmax.f32 %v926, %v1086
      %v1247 = vmax.f32 %v927, %v1088
      %v1248 = vmax.f32 %v928, %v1090
      %v1249 = vmax.f32 %v929, %v1092
      %v1250 = vmax.f32 %v930, %v1094
      %v1251 = vmax.f32 %v931, %v1096
      %v1252 = vmax.f32 %v932, %v1098
      %v1253 = vmax.f32 %v933, %v1100
      %v1254 = vmax.f32 %v934, %v1102
      %v1255 = vmax.f32 %v935, %v1104
      %v1256 = vmax.f32 %v936, %v1106
      %v1257 = vmax.f32 %v937, %v1108
      %v1258 = vmax.f32 %v938, %v1110
      %v1259 = vmax.f32 %v939, %v1112
      %v1260 = vmax.f32 %v940, %v1114
      %v1261 = vmax.f32 %v941, %v1116
      %v1262 = vmax.f32 %v942, %v1118
      %v1263 = vmax.f32 %v943, %v1120
      %v1264 = vmax.f32 %v944, %v1122
      %v1265 = vmax.f32 %v945, %v1124
      %v1266 = vmax.f32 %v946, %v1126
      %v1267 = vmax.f32 %v947, %v1128
      %v1268 = vmax.f32 %v948, %v1130
      %v1269 = vmax.f32 %v949, %v1132
      %v1270 = vmax.f32 %v950, %v1134
      %v1271 = vmax.f32 %v951, %v1136
      %v1272 = vmax.f32 %v952, %v1138
      %v1273 = vmax.f32 %v953, %v1140
      %v1274 = vmax.f32 %v954, %v1142
      %v1275 = vmax.f32 %v955, %v1144
      %v1276 = vmax.f32 %v956, %v1146
      %v1277 = vmax.f32 %v957, %v1148
      %v1278 = vmax.f32 %v958, %v1150
      %v1279 = vpack.c.bf16 %v1215, %v1215
      %v1280 = vpack.c.bf16 %v1216, %v1216
      %v1281 = vpack.c.bf16 %v1217, %v1217
      %v1282 = vpack.c.bf16 %v1218, %v1218
      %v1283 = vpack.c.bf16 %v1219, %v1219
      %v1284 = vpack.c.bf16 %v1220, %v1220
      %v1285 = vpack.c.bf16 %v1221, %v1221
      %v1286 = vpack.c.bf16 %v1222, %v1222
      %v1287 = vpack.c.bf16 %v1223, %v1223
      %v1288 = vpack.c.bf16 %v1224, %v1224
      %v1289 = vpack.c.bf16 %v1225, %v1225
      %v1290 = vpack.c.bf16 %v1226, %v1226
      %v1291 = vpack.c.bf16 %v1227, %v1227
      %v1292 = vpack.c.bf16 %v1228, %v1228
      %v1293 = vpack.c.bf16 %v1229, %v1229
      %v1294 = vpack.c.bf16 %v1230, %v1230
      %v1295 = vpack.c.bf16 %v1231, %v1231
      %v1296 = vpack.c.bf16 %v1232, %v1232
      %v1297 = vpack.c.bf16 %v1233, %v1233
      %v1298 = vpack.c.bf16 %v1234, %v1234
      %v1299 = vpack.c.bf16 %v1235, %v1235
      %v1300 = vpack.c.bf16 %v1236, %v1236
      %v1301 = vpack.c.bf16 %v1237, %v1237
      %v1302 = vpack.c.bf16 %v1238, %v1238
      %v1303 = vpack.c.bf16 %v1239, %v1239
      %v1304 = vpack.c.bf16 %v1240, %v1240
      %v1305 = vpack.c.bf16 %v1241, %v1241
      %v1306 = vpack.c.bf16 %v1242, %v1242
      %v1307 = vpack.c.bf16 %v1243, %v1243
      %v1308 = vpack.c.bf16 %v1244, %v1244
      %v1309 = vpack.c.bf16 %v1245, %v1245
      %v1310 = vpack.c.bf16 %v1246, %v1246
      %v1311 = vpack.c.bf16 %v1247, %v1247
      %v1312 = vpack.c.bf16 %v1248, %v1248
      %v1313 = vpack.c.bf16 %v1249, %v1249
      %v1314 = vpack.c.bf16 %v1250, %v1250
      %v1315 = vpack.c.bf16 %v1251, %v1251
      %v1316 = vpack.c.bf16 %v1252, %v1252
      %v1317 = vpack.c.bf16 %v1253, %v1253
      %v1318 = vpack.c.bf16 %v1254, %v1254
      %v1319 = vpack.c.bf16 %v1255, %v1255
      %v1320 = vpack.c.bf16 %v1256, %v1256
      %v1321 = vpack.c.bf16 %v1257, %v1257
      %v1322 = vpack.c.bf16 %v1258, %v1258
      %v1323 = vpack.c.bf16 %v1259, %v1259
      %v1324 = vpack.c.bf16 %v1260, %v1260
      %v1325 = vpack.c.bf16 %v1261, %v1261
      %v1326 = vpack.c.bf16 %v1262, %v1262
      %v1327 = vpack.c.bf16 %v1263, %v1263
      %v1328 = vpack.c.bf16 %v1264, %v1264
      %v1329 = vpack.c.bf16 %v1265, %v1265
      %v1330 = vpack.c.bf16 %v1266, %v1266
      %v1331 = vpack.c.bf16 %v1267, %v1267
      %v1332 = vpack.c.bf16 %v1268, %v1268
      %v1333 = vpack.c.bf16 %v1269, %v1269
      %v1334 = vpack.c.bf16 %v1270, %v1270
      %v1335 = vpack.c.bf16 %v1271, %v1271
      %v1336 = vpack.c.bf16 %v1272, %v1272
      %v1337 = vpack.c.bf16 %v1273, %v1273
      %v1338 = vpack.c.bf16 %v1274, %v1274
      %v1339 = vpack.c.bf16 %v1275, %v1275
      %v1340 = vpack.c.bf16 %v1276, %v1276
      %v1341 = vpack.c.bf16 %v1277, %v1277
      %v1342 = vpack.c.bf16 %v1278, %v1278
      %v1407 = vunpack.c.l.b16 %v1279
      %v1408 = vunpack.c.l.b16 %v1280
      %v1409 = vunpack.c.l.b16 %v1281
      %v1410 = vunpack.c.l.b16 %v1282
      %v1411 = vunpack.c.l.b16 %v1283
      %v1412 = vunpack.c.l.b16 %v1284
      %v1413 = vunpack.c.l.b16 %v1285
      %v1414 = vunpack.c.l.b16 %v1286
      %v1415 = vunpack.c.l.b16 %v1287
      %v1416 = vunpack.c.l.b16 %v1288
      %v1417 = vunpack.c.l.b16 %v1289
      %v1418 = vunpack.c.l.b16 %v1290
      %v1419 = vunpack.c.l.b16 %v1291
      %v1420 = vunpack.c.l.b16 %v1292
      %v1421 = vunpack.c.l.b16 %v1293
      %v1422 = vunpack.c.l.b16 %v1294
      %v1423 = vunpack.c.l.b16 %v1295
      %v1424 = vunpack.c.l.b16 %v1296
      %v1425 = vunpack.c.l.b16 %v1297
      %v1426 = vunpack.c.l.b16 %v1298
      %v1427 = vunpack.c.l.b16 %v1299
      %v1428 = vunpack.c.l.b16 %v1300
      %v1429 = vunpack.c.l.b16 %v1301
      %v1430 = vunpack.c.l.b16 %v1302
      %v1431 = vunpack.c.l.b16 %v1303
      %v1432 = vunpack.c.l.b16 %v1304
      %v1433 = vunpack.c.l.b16 %v1305
      %v1434 = vunpack.c.l.b16 %v1306
      %v1435 = vunpack.c.l.b16 %v1307
      %v1436 = vunpack.c.l.b16 %v1308
      %v1437 = vunpack.c.l.b16 %v1309
      %v1438 = vunpack.c.l.b16 %v1310
      %v1439 = vunpack.c.l.b16 %v1311
      %v1440 = vunpack.c.l.b16 %v1312
      %v1441 = vunpack.c.l.b16 %v1313
      %v1442 = vunpack.c.l.b16 %v1314
      %v1443 = vunpack.c.l.b16 %v1315
      %v1444 = vunpack.c.l.b16 %v1316
      %v1445 = vunpack.c.l.b16 %v1317
      %v1446 = vunpack.c.l.b16 %v1318
      %v1447 = vunpack.c.l.b16 %v1319
      %v1448 = vunpack.c.l.b16 %v1320
      %v1449 = vunpack.c.l.b16 %v1321
      %v1450 = vunpack.c.l.b16 %v1322
      %v1451 = vunpack.c.l.b16 %v1323
      %v1452 = vunpack.c.l.b16 %v1324
      %v1453 = vunpack.c.l.b16 %v1325
      %v1454 = vunpack.c.l.b16 %v1326
      %v1455 = vunpack.c.l.b16 %v1327
      %v1456 = vunpack.c.l.b16 %v1328
      %v1457 = vunpack.c.l.b16 %v1329
      %v1458 = vunpack.c.l.b16 %v1330
      %v1459 = vunpack.c.l.b16 %v1331
      %v1460 = vunpack.c.l.b16 %v1332
      %v1461 = vunpack.c.l.b16 %v1333
      %v1462 = vunpack.c.l.b16 %v1334
      %v1463 = vunpack.c.l.b16 %v1335
      %v1464 = vunpack.c.l.b16 %v1336
      %v1465 = vunpack.c.l.b16 %v1337
      %v1466 = vunpack.c.l.b16 %v1338
      %v1467 = vunpack.c.l.b16 %v1339
      %v1468 = vunpack.c.l.b16 %v1340
      %v1469 = vunpack.c.l.b16 %v1341
      %v1470 = vunpack.c.l.b16 %v1342
      %v1471 = vpack.c.b16 %v1407, %v1407
      %v1472 = vpack.c.b16 %v1408, %v1408
      %v1473 = vpack.c.b16 %v1409, %v1409
      %v1474 = vpack.c.b16 %v1410, %v1410
      %v1475 = vpack.c.b16 %v1411, %v1411
      %v1476 = vpack.c.b16 %v1412, %v1412
      %v1477 = vpack.c.b16 %v1413, %v1413
      %v1478 = vpack.c.b16 %v1414, %v1414
      %v1479 = vpack.c.b16 %v1415, %v1415
      %v1480 = vpack.c.b16 %v1416, %v1416
      %v1481 = vpack.c.b16 %v1417, %v1417
      %v1482 = vpack.c.b16 %v1418, %v1418
      %v1483 = vpack.c.b16 %v1419, %v1419
      %v1484 = vpack.c.b16 %v1420, %v1420
      %v1485 = vpack.c.b16 %v1421, %v1421
      %v1486 = vpack.c.b16 %v1422, %v1422
      %v1487 = vpack.c.b16 %v1423, %v1423
      %v1488 = vpack.c.b16 %v1424, %v1424
      %v1489 = vpack.c.b16 %v1425, %v1425
      %v1490 = vpack.c.b16 %v1426, %v1426
      %v1491 = vpack.c.b16 %v1427, %v1427
      %v1492 = vpack.c.b16 %v1428, %v1428
      %v1493 = vpack.c.b16 %v1429, %v1429
      %v1494 = vpack.c.b16 %v1430, %v1430
      %v1495 = vpack.c.b16 %v1431, %v1431
      %v1496 = vpack.c.b16 %v1432, %v1432
      %v1497 = vpack.c.b16 %v1433, %v1433
      %v1498 = vpack.c.b16 %v1434, %v1434
      %v1499 = vpack.c.b16 %v1435, %v1435
      %v1500 = vpack.c.b16 %v1436, %v1436
      %v1501 = vpack.c.b16 %v1437, %v1437
      %v1502 = vpack.c.b16 %v1438, %v1438
      %v1503 = vpack.c.b16 %v1439, %v1439
      %v1504 = vpack.c.b16 %v1440, %v1440
      %v1505 = vpack.c.b16 %v1441, %v1441
      %v1506 = vpack.c.b16 %v1442, %v1442
      %v1507 = vpack.c.b16 %v1443, %v1443
      %v1508 = vpack.c.b16 %v1444, %v1444
      %v1509 = vpack.c.b16 %v1445, %v1445
      %v1510 = vpack.c.b16 %v1446, %v1446
      %v1511 = vpack.c.b16 %v1447, %v1447
      %v1512 = vpack.c.b16 %v1448, %v1448
      %v1513 = vpack.c.b16 %v1449, %v1449
      %v1514 = vpack.c.b16 %v1450, %v1450
      %v1515 = vpack.c.b16 %v1451, %v1451
      %v1516 = vpack.c.b16 %v1452, %v1452
      %v1517 = vpack.c.b16 %v1453, %v1453
      %v1518 = vpack.c.b16 %v1454, %v1454
      %v1519 = vpack.c.b16 %v1455, %v1455
      %v1520 = vpack.c.b16 %v1456, %v1456
      %v1521 = vpack.c.b16 %v1457, %v1457
      %v1522 = vpack.c.b16 %v1458, %v1458
      %v1523 = vpack.c.b16 %v1459, %v1459
      %v1524 = vpack.c.b16 %v1460, %v1460
      %v1525 = vpack.c.b16 %v1461, %v1461
      %v1526 = vpack.c.b16 %v1462, %v1462
      %v1527 = vpack.c.b16 %v1463, %v1463
      %v1528 = vpack.c.b16 %v1464, %v1464
      %v1529 = vpack.c.b16 %v1465, %v1465
      %v1530 = vpack.c.b16 %v1466, %v1466
      %v1531 = vpack.c.b16 %v1467, %v1467
      %v1532 = vpack.c.b16 %v1468, %v1468
      %v1533 = vpack.c.b16 %v1469, %v1469
      %v1534 = vpack.c.b16 %v1470, %v1470
      %v1535 = vunpack.c.l.b16 %v1471
      %v1536 = vunpack.c.l.b16 %v1472
      %v1537 = vunpack.c.l.b16 %v1473
      %v1538 = vunpack.c.l.b16 %v1474
      %v1539 = vunpack.c.l.b16 %v1475
      %v1540 = vunpack.c.l.b16 %v1476
      %v1541 = vunpack.c.l.b16 %v1477
      %v1542 = vunpack.c.l.b16 %v1478
      %v1543 = vunpack.c.l.b16 %v1479
      %v1544 = vunpack.c.l.b16 %v1480
      %v1545 = vunpack.c.l.b16 %v1481
      %v1546 = vunpack.c.l.b16 %v1482
      %v1547 = vunpack.c.l.b16 %v1483
      %v1548 = vunpack.c.l.b16 %v1484
      %v1549 = vunpack.c.l.b16 %v1485
      %v1550 = vunpack.c.l.b16 %v1486
      %v1551 = vunpack.c.l.b16 %v1487
      %v1552 = vunpack.c.l.b16 %v1488
      %v1553 = vunpack.c.l.b16 %v1489
      %v1554 = vunpack.c.l.b16 %v1490
      %v1555 = vunpack.c.l.b16 %v1491
      %v1556 = vunpack.c.l.b16 %v1492
      %v1557 = vunpack.c.l.b16 %v1493
      %v1558 = vunpack.c.l.b16 %v1494
      %v1559 = vunpack.c.l.b16 %v1495
      %v1560 = vunpack.c.l.b16 %v1496
      %v1561 = vunpack.c.l.b16 %v1497
      %v1562 = vunpack.c.l.b16 %v1498
      %v1563 = vunpack.c.l.b16 %v1499
      %v1564 = vunpack.c.l.b16 %v1500
      %v1565 = vunpack.c.l.b16 %v1501
      %v1566 = vunpack.c.l.b16 %v1502
      %v1567 = vunpack.c.l.b16 %v1503
      %v1568 = vunpack.c.l.b16 %v1504
      %v1569 = vunpack.c.l.b16 %v1505
      %v1570 = vunpack.c.l.b16 %v1506
      %v1571 = vunpack.c.l.b16 %v1507
      %v1572 = vunpack.c.l.b16 %v1508
      %v1573 = vunpack.c.l.b16 %v1509
      %v1574 = vunpack.c.l.b16 %v1510
      %v1575 = vunpack.c.l.b16 %v1511
      %v1576 = vunpack.c.l.b16 %v1512
      %v1577 = vunpack.c.l.b16 %v1513
      %v1578 = vunpack.c.l.b16 %v1514
      %v1579 = vunpack.c.l.b16 %v1515
      %v1580 = vunpack.c.l.b16 %v1516
      %v1581 = vunpack.c.l.b16 %v1517
      %v1582 = vunpack.c.l.b16 %v1518
      %v1583 = vunpack.c.l.b16 %v1519
      %v1584 = vunpack.c.l.b16 %v1520
      %v1585 = vunpack.c.l.b16 %v1521
      %v1586 = vunpack.c.l.b16 %v1522
      %v1587 = vunpack.c.l.b16 %v1523
      %v1588 = vunpack.c.l.b16 %v1524
      %v1589 = vunpack.c.l.b16 %v1525
      %v1590 = vunpack.c.l.b16 %v1526
      %v1591 = vunpack.c.l.b16 %v1527
      %v1592 = vunpack.c.l.b16 %v1528
      %v1593 = vunpack.c.l.b16 %v1529
      %v1594 = vunpack.c.l.b16 %v1530
      %v1595 = vunpack.c.l.b16 %v1531
      %v1596 = vunpack.c.l.b16 %v1532
      %v1597 = vunpack.c.l.b16 %v1533
      %v1598 = vunpack.c.l.b16 %v1534
      %v1599 = vrot.slane %v1536, 7
      %vm1600 = vcmask 1041409
      %v1601 = vsel %vm1600, %v1599, %v1535
      %v1602 = vrot.slane %v1537, 6
      %vm1603 = vcmask 1042434
      %v1604 = vsel %vm1603, %v1602, %v1601
      %v1605 = vrot.slane %v1538, 5
      %vm1606 = vcmask 1043459
      %v1607 = vsel %vm1606, %v1605, %v1604
      %v1608 = vrot.slane %v1539, 4
      %vm1609 = vcmask 1044484
      %v1610 = vsel %vm1609, %v1608, %v1607
      %v1611 = vrot.slane %v1540, 3
      %vm1612 = vcmask 1045509
      %v1613 = vsel %vm1612, %v1611, %v1610
      %v1614 = vrot.slane %v1541, 2
      %vm1615 = vcmask 1046534
      %v1616 = vsel %vm1615, %v1614, %v1613
      %v1617 = vrot.slane %v1542, 1
      %vm1618 = vcmask 1047559
      %v1619 = vsel %vm1618, %v1617, %v1616
      %v1620 = vrot.slane %v1544, 7
      %v1621 = vsel %vm1600, %v1620, %v1543
      %v1622 = vrot.slane %v1545, 6
      %v1623 = vsel %vm1603, %v1622, %v1621
      %v1624 = vrot.slane %v1546, 5
      %v1625 = vsel %vm1606, %v1624, %v1623
      %v1626 = vrot.slane %v1547, 4
      %v1627 = vsel %vm1609, %v1626, %v1625
      %v1628 = vrot.slane %v1548, 3
      %v1629 = vsel %vm1612, %v1628, %v1627
      %v1630 = vrot.slane %v1549, 2
      %v1631 = vsel %vm1615, %v1630, %v1629
      %v1632 = vrot.slane %v1550, 1
      %v1633 = vsel %vm1618, %v1632, %v1631
      %v1634 = vrot.slane %v1552, 7
      %v1635 = vsel %vm1600, %v1634, %v1551
      %v1636 = vrot.slane %v1553, 6
      %v1637 = vsel %vm1603, %v1636, %v1635
      %v1638 = vrot.slane %v1554, 5
      %v1639 = vsel %vm1606, %v1638, %v1637
      %v1640 = vrot.slane %v1555, 4
      %v1641 = vsel %vm1609, %v1640, %v1639
      %v1642 = vrot.slane %v1556, 3
      %v1643 = vsel %vm1612, %v1642, %v1641
      %v1644 = vrot.slane %v1557, 2
      %v1645 = vsel %vm1615, %v1644, %v1643
      %v1646 = vrot.slane %v1558, 1
      %v1647 = vsel %vm1618, %v1646, %v1645
      %v1648 = vrot.slane %v1560, 7
      %v1649 = vsel %vm1600, %v1648, %v1559
      %v1650 = vrot.slane %v1561, 6
      %v1651 = vsel %vm1603, %v1650, %v1649
      %v1652 = vrot.slane %v1562, 5
      %v1653 = vsel %vm1606, %v1652, %v1651
      %v1654 = vrot.slane %v1563, 4
      %v1655 = vsel %vm1609, %v1654, %v1653
      %v1656 = vrot.slane %v1564, 3
      %v1657 = vsel %vm1612, %v1656, %v1655
      %v1658 = vrot.slane %v1565, 2
      %v1659 = vsel %vm1615, %v1658, %v1657
      %v1660 = vrot.slane %v1566, 1
      %v1661 = vsel %vm1618, %v1660, %v1659
      %v1662 = vrot.slane %v1568, 7
      %v1663 = vsel %vm1600, %v1662, %v1567
      %v1664 = vrot.slane %v1569, 6
      %v1665 = vsel %vm1603, %v1664, %v1663
      %v1666 = vrot.slane %v1570, 5
      %v1667 = vsel %vm1606, %v1666, %v1665
      %v1668 = vrot.slane %v1571, 4
      %v1669 = vsel %vm1609, %v1668, %v1667
      %v1670 = vrot.slane %v1572, 3
      %v1671 = vsel %vm1612, %v1670, %v1669
      %v1672 = vrot.slane %v1573, 2
      %v1673 = vsel %vm1615, %v1672, %v1671
      %v1674 = vrot.slane %v1574, 1
      %v1675 = vsel %vm1618, %v1674, %v1673
      %v1676 = vrot.slane %v1576, 7
      %v1677 = vsel %vm1600, %v1676, %v1575
      %v1678 = vrot.slane %v1577, 6
      %v1679 = vsel %vm1603, %v1678, %v1677
      %v1680 = vrot.slane %v1578, 5
      %v1681 = vsel %vm1606, %v1680, %v1679
      %v1682 = vrot.slane %v1579, 4
      %v1683 = vsel %vm1609, %v1682, %v1681
      %v1684 = vrot.slane %v1580, 3
      %v1685 = vsel %vm1612, %v1684, %v1683
      %v1686 = vrot.slane %v1581, 2
      %v1687 = vsel %vm1615, %v1686, %v1685
      %v1688 = vrot.slane %v1582, 1
      %v1689 = vsel %vm1618, %v1688, %v1687
      %v1690 = vrot.slane %v1584, 7
      %v1691 = vsel %vm1600, %v1690, %v1583
      %v1692 = vrot.slane %v1585, 6
      %v1693 = vsel %vm1603, %v1692, %v1691
      %v1694 = vrot.slane %v1586, 5
      %v1695 = vsel %vm1606, %v1694, %v1693
      %v1696 = vrot.slane %v1587, 4
      %v1697 = vsel %vm1609, %v1696, %v1695
      %v1698 = vrot.slane %v1588, 3
      %v1699 = vsel %vm1612, %v1698, %v1697
      %v1700 = vrot.slane %v1589, 2
      %v1701 = vsel %vm1615, %v1700, %v1699
      %v1702 = vrot.slane %v1590, 1
      %v1703 = vsel %vm1618, %v1702, %v1701
      %v1704 = vrot.slane %v1592, 7
      %v1705 = vsel %vm1600, %v1704, %v1591
      %v1706 = vrot.slane %v1593, 6
      %v1707 = vsel %vm1603, %v1706, %v1705
      %v1708 = vrot.slane %v1594, 5
      %v1709 = vsel %vm1606, %v1708, %v1707
      %v1710 = vrot.slane %v1595, 4
      %v1711 = vsel %vm1609, %v1710, %v1709
      %v1712 = vrot.slane %v1596, 3
      %v1713 = vsel %vm1612, %v1712, %v1711
      %v1714 = vrot.slane %v1597, 2
      %v1715 = vsel %vm1615, %v1714, %v1713
      %v1716 = vrot.slane %v1598, 1
      %v1717 = vsel %vm1618, %v1716, %v1715
      %v1718 = vpack.c.b16 %v1619, %v1619
      %v1719 = vpack.c.b16 %v1633, %v1633
      %v1720 = vpack.c.b16 %v1647, %v1647
      %v1721 = vpack.c.b16 %v1661, %v1661
      %v1722 = vpack.c.b16 %v1675, %v1675
      %v1723 = vpack.c.b16 %v1689, %v1689
      %v1724 = vpack.c.b16 %v1703, %v1703
      %v1725 = vpack.c.b16 %v1717, %v1717
      %vm1734 = vcmask 27648
      %1735 = vst.msk [vmem:[%s157] sm:$0xf] %vm1734, %v1718
      %1736 = vst.msk [vmem:[%s157 + $0x4] sm:$0xf] %vm1734, %v1719
      %1737 = vst.msk [vmem:[%s157 + $0x8] sm:$0xf] %vm1734, %v1720
      %1738 = vst.msk [vmem:[%s157 + $0xc] sm:$0xf] %vm1734, %v1721
      %1739 = vst.msk [vmem:[%s157 + $0x10] sm:$0xf] %vm1734, %v1722
      %1740 = vst.msk [vmem:[%s157 + $0x14] sm:$0xf] %vm1734, %v1723
      %1741 = vst.msk [vmem:[%s157 + $0x18] sm:$0xf] %vm1734, %v1724
      %1742 = vst.msk [vmem:[%s157 + $0x1c] sm:$0xf] %vm1734, %v1725
      %s1743 = smul.u32 8, %s17
      %p1744 = scmp.lt.s32.totalorder %s16, 1
      %s1745 = scalar_select %p1744, %s16, 1
      %p1746 = scmp.lt.s32.totalorder %s1743, 7
      %s1747 = scalar_select %p1746, %s1743, 7
      %s1748 = smul.addr %s1745, 8
      %s1749 = sadd.s32 %s1747, %s1748
      %s1750 = smul.addr %s1749, 4
      %s1751 = scalar_lea.vmem %s1, %s1750
      // Predicated region
      $region25: #{down_forward.5} parent=23 // pred_check
        %p1752 = pneg %p72
      $region26: #{down_forward.5} parent=23 // pred_check_branch
        %1754 = sbr.rel (%p1752) target = $region28
      $region27: #{down_forward.5} parent=23 // pred_region
        %s1755 = smul.u32 8, %s17
      $region28: #{down_forward.5} parent=23 // pred_fallthru
        _
    $region24: #{down_forward.5} parent=5 // pred_fallthru
      _
    %p1756 = scmp.le.s32.totalorder 2, %s7
    // Predicated region
    $region29: #{down_forward.5} parent=5 // pred_check
      %p1757 = pneg %p1756
    $region30: #{down_forward.5} parent=5 // pred_check_branch
      %1759 = sbr.rel (%p1757) target = $region32
    $region31: #{down_forward.5} parent=5 // pred_region
      %s1760 = ssub.s32 %s7, 2
      // Predicated region
      $region33: #{down_forward.5} parent=31 // pred_check
        %p1761 = pneg %p78
      $region34: #{down_forward.5} parent=31 // pred_check_branch
        %1763 = sbr.rel (%p1761) target = $region36
      $region35: #{down_forward.5} parent=31 // pred_region
        %s1764 = smul.u32 8, %s19
        %p1765 = scmp.lt.s32.totalorder %s18, 1
        %s1766 = scalar_select %p1765, %s18, 1
        %p1767 = scmp.lt.s32.totalorder %s1764, 7
        %s1768 = scalar_select %p1767, %s1764, 7
        %s1769 = smul.addr %s1766, 8
        %s1770 = sadd.s32 %s1768, %s1769
        %s1771 = smul.addr %s1770, 4
        %s1772 = scalar_lea.vmem %s1, %s1771
      $region36: #{down_forward.5} parent=31 // pred_fallthru
        _
    $region32: #{down_forward.5} parent=5 // pred_fallthru
      _
  $region6: #{down_forward.5} parent=0 // loop_footer
    %s11 = sadd.s32 1, %s7
  $region7: #{down_forward.5} parent=0 // loop_footer_branch
    %6 = sbr.rel target = $region3
  $region8: #{down_forward.5} parent=0 // loop_exit
    _

// kernel: down_forward.9
$region0: #{down_forward.9}
  #allocation0 [shape = 'u32[]', space=smem, size = 0x4, offset = 0x4, fixed_abs, tag = 'smem constant byte address 0x4 - core index']
  #allocation1 [shape = 'u32[144,128]{1,0:T(1,128)}', space=vmem, size = 0x12000, scoped, tag = 'internal scratch']
  %s0 = inlined_call_operand.vmem [shape: bf16[16,8,128], index: 0, kind: input, shape index: {}]
  %s1 = inlined_call_operand.vmem [shape: f32[1,128], index: 1, kind: input, shape index: {}]
  %s2 = inlined_call_operand.vmem [shape: f32[1,128], index: 2, kind: input, shape index: {}]
  %s3 = inlined_call_operand.vmem [shape: f32[16,8,128], index: 3, kind: output, shape index: {}]
  %s4 = sld [smem:[#allocation0]]
  $region22: #{down_forward.9} parent=0
    _
  %s6 = ssub.s32 1, %s4
  %s7 = scalar_select 0, %s6, %s4
  // Predicated region
  $region2: #{down_forward.9} parent=0 // pred_check
    _
  $region3: #{down_forward.9} parent=0 // pred_check_branch
    %9 = sbr.rel (0) target = $region5
  $region4: #{down_forward.9} parent=0 // pred_region
    _
  $region5: #{down_forward.9} parent=0 // pred_fallthru
    _
  // Predicated region
  $region6: #{down_forward.9} parent=0 // pred_check
    _
  $region7: #{down_forward.9} parent=0 // pred_check_branch
    %11 = sbr.rel (0) target = $region9
  $region8: #{down_forward.9} parent=0 // pred_region
    _
  $region9: #{down_forward.9} parent=0 // pred_fallthru
    _
  // Predicated region
  $region10: #{down_forward.9} parent=0 // pred_check
    _
  $region11: #{down_forward.9} parent=0 // pred_check_branch
    %13 = sbr.rel (0) target = $region13
  $region12: #{down_forward.9} parent=0 // pred_region
    _
  $region13: #{down_forward.9} parent=0 // pred_fallthru
    _
  %v14 = vld [vmem:[%s0] sm:$0xf]
  %v15 = vld [vmem:[%s0 + $0x4] sm:$0xf]
  %v16 = vld [vmem:[%s0 + $0x8] sm:$0xf]
  %v17 = vld [vmem:[%s0 + $0xc] sm:$0xf]
  %v18 = vld [vmem:[%s0 + $0x10] sm:$0xf]
  %v19 = vld [vmem:[%s0 + $0x14] sm:$0xf]
  %v20 = vld [vmem:[%s0 + $0x18] sm:$0xf]
  %v21 = vld [vmem:[%s0 + $0x1c] sm:$0xf]
  %v22 = vld [vmem:[%s0 + $0x20] sm:$0xf]
  %v23 = vld [vmem:[%s0 + $0x24] sm:$0xf]
  %v24 = vld [vmem:[%s0 + $0x28] sm:$0xf]
  %v25 = vld [vmem:[%s0 + $0x2c] sm:$0xf]
  %v26 = vld [vmem:[%s0 + $0x30] sm:$0xf]
  %v27 = vld [vmem:[%s0 + $0x34] sm:$0xf]
  %v28 = vld [vmem:[%s0 + $0x38] sm:$0xf]
  %v29 = vld [vmem:[%s0 + $0x3c] sm:$0xf]
  %v30 = vunpack.c.l.bf16 %v14
  %v31 = vunpack.c.l.bf16 %v15
  %v32 = vunpack.c.l.bf16 %v16
  %v33 = vunpack.c.l.bf16 %v17
  %v34 = vunpack.c.l.bf16 %v18
  %v35 = vunpack.c.l.bf16 %v19
  %v36 = vunpack.c.l.bf16 %v20
  %v37 = vunpack.c.l.bf16 %v21
  %v38 = vunpack.c.l.bf16 %v22
  %v39 = vunpack.c.l.bf16 %v23
  %v40 = vunpack.c.l.bf16 %v24
  %v41 = vunpack.c.l.bf16 %v25
  %v42 = vunpack.c.l.bf16 %v26
  %v43 = vunpack.c.l.bf16 %v27
  %v44 = vunpack.c.l.bf16 %v28
  %v45 = vunpack.c.l.bf16 %v29
  %v46 = vld [vmem:[%s1] sm:$0x1]
  %v48 = vlaneseq
  %v49 = vshrl.u32 %v48, 7
  %v50 = vsub.s32 0, %v49
  %v51 = vrot.slane %v46, %v50
  %v53 = vmul.f32 %v30, %v51
  %v54 = vmul.f32 %v31, %v51
  %v55 = vmul.f32 %v32, %v51
  %v56 = vmul.f32 %v33, %v51
  %v57 = vmul.f32 %v34, %v51
  %v58 = vmul.f32 %v35, %v51
  %v59 = vmul.f32 %v36, %v51
  %v60 = vmul.f32 %v37, %v51
  %v61 = vmul.f32 %v38, %v51
  %v62 = vmul.f32 %v39, %v51
  %v63 = vmul.f32 %v40, %v51
  %v64 = vmul.f32 %v41, %v51
  %v65 = vmul.f32 %v42, %v51
  %v66 = vmul.f32 %v43, %v51
  %v67 = vmul.f32 %v44, %v51
  %v68 = vmul.f32 %v45, %v51
  %v69 = vld [vmem:[%s2] sm:$0x1]
  %v71 = vlaneseq
  %v72 = vshrl.u32 %v71, 7
  %v73 = vsub.s32 0, %v72
  %v74 = vrot.slane %v69, %v73
  %v76 = vadd.f32 %v53, %v74
  %v77 = vadd.f32 %v54, %v74
  %v78 = vadd.f32 %v55, %v74
  %v79 = vadd.f32 %v56, %v74
  %v80 = vadd.f32 %v57, %v74
  %v81 = vadd.f32 %v58, %v74
  %v82 = vadd.f32 %v59, %v74
  %v83 = vadd.f32 %v60, %v74
  %v84 = vadd.f32 %v61, %v74
  %v85 = vadd.f32 %v62, %v74
  %v86 = vadd.f32 %v63, %v74
  %v87 = vadd.f32 %v64, %v74
  %v88 = vadd.f32 %v65, %v74
  %v89 = vadd.f32 %v66, %v74
  %v90 = vadd.f32 %v67, %v74
  %v91 = vadd.f32 %v68, %v74
  %v92 = vmax.f32 %v76, 0.0
  %v93 = vmax.f32 %v77, 0.0
  %v94 = vmax.f32 %v78, 0.0
  %v95 = vmax.f32 %v79, 0.0
  %v96 = vmax.f32 %v80, 0.0
  %v97 = vmax.f32 %v81, 0.0
  %v98 = vmax.f32 %v82, 0.0
  %v99 = vmax.f32 %v83, 0.0
  %v100 = vmax.f32 %v84, 0.0
  %v101 = vmax.f32 %v85, 0.0
  %v102 = vmax.f32 %v86, 0.0
  %v103 = vmax.f32 %v87, 0.0
  %v104 = vmax.f32 %v88, 0.0
  %v105 = vmax.f32 %v89, 0.0
  %v106 = vmax.f32 %v90, 0.0
  %v107 = vmax.f32 %v91, 0.0
  %108 = vst [vmem:[%s3] sm:$0xff] %v92
  %109 = vst [vmem:[%s3 + $0x8] sm:$0xff] %v93
  %110 = vst [vmem:[%s3 + $0x10] sm:$0xff] %v94
  %111 = vst [vmem:[%s3 + $0x18] sm:$0xff] %v95
  %112 = vst [vmem:[%s3 + $0x20] sm:$0xff] %v96
  %113 = vst [vmem:[%s3 + $0x28] sm:$0xff] %v97
  %114 = vst [vmem:[%s3 + $0x30] sm:$0xff] %v98
  %115 = vst [vmem:[%s3 + $0x38] sm:$0xff] %v99
  %116 = vst [vmem:[%s3 + $0x40] sm:$0xff] %v100
  %117 = vst [vmem:[%s3 + $0x48] sm:$0xff] %v101
  %118 = vst [vmem:[%s3 + $0x50] sm:$0xff] %v102
  %119 = vst [vmem:[%s3 + $0x58] sm:$0xff] %v103
  %120 = vst [vmem:[%s3 + $0x60] sm:$0xff] %v104
  %121 = vst [vmem:[%s3 + $0x68] sm:$0xff] %v105
  %122 = vst [vmem:[%s3 + $0x70] sm:$0xff] %v106
  %123 = vst [vmem:[%s3 + $0x78] sm:$0xff] %v107
  // Predicated region
  $region14: #{down_forward.9} parent=0 // pred_check
    _
  $region15: #{down_forward.9} parent=0 // pred_check_branch
    %125 = sbr.rel (0) target = $region17
  $region16: #{down_forward.9} parent=0 // pred_region
    _
  $region17: #{down_forward.9} parent=0 // pred_fallthru
    _
  // Predicated region
  $region18: #{down_forward.9} parent=0 // pred_check
    _
  $region19: #{down_forward.9} parent=0 // pred_check_branch
    %127 = sbr.rel (0) target = $region21
  $region20: #{down_forward.9} parent=0 // pred_region
    _
  $region21: #{down_forward.9} parent=0 // pred_fallthru
    _

// kernel: down_forward.8
$region0: #{down_forward.8}
  #allocation0 [shape = 'u32[]', space=smem, size = 0x4, offset = 0x4, fixed_abs, tag = 'smem constant byte address 0x4 - core index']
  #allocation1 [shape = 'u32[144,128]{1,0:T(1,128)}', space=vmem, size = 0x12000, scoped, tag = 'internal scratch']
  %s0 = inlined_call_operand.vmem [shape: bf16[2,10,10,128], index: 0, kind: input, shape index: {}, may-alias: {0,1,2}]
  %s1 = inlined_call_operand.vmem [shape: bf16[2,10,10,128], index: 1, kind: input, shape index: {}, may-alias: {0,1,2}]
  %s2 = inlined_call_operand.vmem [shape: bf16[2,10,10,128], index: 2, kind: input, shape index: {}, may-alias: {0,1,2}]
  %s3 = inlined_call_operand.vmem [shape: bf16[1152,128], index: 3, kind: input, shape index: {}]
  %s4 = inlined_call_operand.vmem [shape: bf16[2,8,8,128], index: 4, kind: output, shape index: {0}]
  %s5 = inlined_call_operand.vmem [shape: f32[2,1,2,128], index: 5, kind: output, shape index: {1}]
  %6 = xla_tuple %s4, %s5
  %s7 = sld [smem:[#allocation0]]
  $region57: #{down_forward.8} parent=0
    _
  %s9 = ssub.s32 1, %s7
  %s10 = scalar_select 0, %s9, %s7
  loop: start=0, step=1, limit=4
  $region2: #{down_forward.8} parent=0 // loop_pre_header
    _
  $region3: #{down_forward.8} parent=0 // loop_header
    %s12 = sphi 0, %s16
    %p13 = scmp.ge.s32.totalorder %s12, 4
    %s19 = sphi 0, %s31
    %s20 = sphi 0, %s27
    %s21 = sphi 0, %s19
    %s22 = sphi 0, %s20
    %s23 = sphi 0, %s21
    %s24 = sphi 0, %s22
    %s36 = sphi 0, %s38
    %s39 = sphi 0, %s36
    %s40 = sphi 0, %s39
    %s56 = sphi 0, %s40
    %s68 = sphi 0, %s70
    %s71 = sphi 0, %s68
    %s72 = sphi 0, %s71
    %s88 = sphi 0, %s72
    %s100 = sphi 0, %s102
    %s103 = sphi 0, %s100
    %s104 = sphi 0, %s103
    %s120 = sphi 0, %s104
    %s124 = sphi 0, %s124
    %s126 = sphi 0, %s124
    %s127 = sphi 0, %s126
    %s141 = sphi 0, %s127
    %s149 = sphi 0, %s151
    %s152 = sphi 0, %s149
    %s153 = sphi 0, %s152
    %s169 = sphi 0, %s153
    %s177 = sphi 0, %s179
    %s180 = sphi 0, %s177
    %s181 = sphi 0, %s180
    %s197 = sphi 0, %s181
  $region4: #{down_forward.8} parent=0 // loop_header_branch
    %15 = sbr.rel (%p13) target = $region8
  $region5: #{down_forward.8} parent=0 // loop_body
    %s17 = ssub.s32 %s12, 1
    %s18 = ssub.s32 %s12, 2
    %s25 = sadd.s32 1, %s20
    %p26 = scmp.ge.s32.totalorder %s25, 1
    %s27 = scalar_select %p26, 0, %s25
    %s28 = sadd.s32 1, %s19
    %s29 = scalar_select %p26, %s28, %s19
    %p30 = scmp.ge.s32.totalorder %s29, 2
    %s31 = scalar_select %p30, 0, %s29
    %s32 = ssub.s32 %s19, %s31
    %s33 = ssub.s32 %s20, %s27
    %s34 = sor.u32 %s32, %s33
    %p35 = scmp.eq.s32.totalorder %s34, 0
    %s37 = sadd.s32 %s36, 1
    %s38 = scalar_select %p35, %s36, %s37
    %p41 = pneg %p35
    %p42 = scmp.eq.s32.totalorder %s12, 1
    %p43 = por %p41, %p42
    %p44 = scmp.ne.s32.totalorder %s36, %s39
    %p45 = scmp.eq.s32.totalorder %s12, 0
    %p46 = por %p44, %p45
    %p47 = scmp.ne.s32.totalorder %s36, %s39
    %p48 = scmp.eq.s32.totalorder %s17, 1
    %p49 = por %p47, %p48
    %p50 = scmp.ne.s32.totalorder %s39, %s40
    %p51 = scmp.eq.s32.totalorder %s17, 0
    %p52 = por %p50, %p51
    %p53 = scmp.ne.s32.totalorder %s39, %s40
    %p54 = scmp.eq.s32.totalorder %s18, 1
    %p55 = por %p53, %p54
    %p57 = scmp.ne.s32.totalorder %s40, %s56
    %p58 = scmp.eq.s32.totalorder %s18, 0
    %p59 = por %p57, %p58
    %s60 = smul.u32 %s20, 8
    %s61 = sadd.s32 %s60, 8
    %s62 = smul.u32 %s27, 8
    %s63 = sadd.s32 %s62, 8
    %s64 = ssub.s32 %s19, %s31
    %s65 = ssub.s32 %s61, %s63
    %s66 = sor.u32 %s64, %s65
    %p67 = scmp.eq.s32.totalorder %s66, 0
    %s69 = sadd.s32 %s68, 1
    %s70 = scalar_select %p67, %s68, %s69
    %p73 = pneg %p67
    %p74 = scmp.eq.s32.totalorder %s12, 1
    %p75 = por %p73, %p74
    %p76 = scmp.ne.s32.totalorder %s68, %s71
    %p77 = scmp.eq.s32.totalorder %s12, 0
    %p78 = por %p76, %p77
    %p79 = scmp.ne.s32.totalorder %s68, %s71
    %p80 = scmp.eq.s32.totalorder %s17, 1
    %p81 = por %p79, %p80
    %p82 = scmp.ne.s32.totalorder %s71, %s72
    %p83 = scmp.eq.s32.totalorder %s17, 0
    %p84 = por %p82, %p83
    %p85 = scmp.ne.s32.totalorder %s71, %s72
    %p86 = scmp.eq.s32.totalorder %s18, 1
    %p87 = por %p85, %p86
    %p89 = scmp.ne.s32.totalorder %s72, %s88
    %p90 = scmp.eq.s32.totalorder %s18, 0
    %p91 = por %p89, %p90
    %s92 = smul.u32 %s20, 8
    %s93 = sadd.s32 %s92, 9
    %s94 = smul.u32 %s27, 8
    %s95 = sadd.s32 %s94, 9
    %s96 = ssub.s32 %s19, %s31
    %s97 = ssub.s32 %s93, %s95
    %s98 = sor.u32 %s96, %s97
    %p99 = scmp.eq.s32.totalorder %s98, 0
    %s101 = sadd.s32 %s100, 1
    %s102 = scalar_select %p99, %s100, %s101
    %p105 = pneg %p99
    %p106 = scmp.eq.s32.totalorder %s12, 1
    %p107 = por %p105, %p106
    %p108 = scmp.ne.s32.totalorder %s100, %s103
    %p109 = scmp.eq.s32.totalorder %s12, 0
    %p110 = por %p108, %p109
    %p111 = scmp.ne.s32.totalorder %s100, %s103
    %p112 = scmp.eq.s32.totalorder %s17, 1
    %p113 = por %p111, %p112
    %p114 = scmp.ne.s32.totalorder %s103, %s104
    %p115 = scmp.eq.s32.totalorder %s17, 0
    %p116 = por %p114, %p115
    %p117 = scmp.ne.s32.totalorder %s103, %s104
    %p118 = scmp.eq.s32.totalorder %s18, 1
    %p119 = por %p117, %p118
    %p121 = scmp.ne.s32.totalorder %s104, %s120
    %p122 = scmp.eq.s32.totalorder %s18, 0
    %p123 = por %p121, %p122
    %s125 = sadd.s32 %s124, 1
    %p128 = scmp.eq.s32.totalorder %s12, 1
    %p129 = scmp.ne.s32.totalorder %s124, %s126
    %p130 = scmp.eq.s32.totalorder %s12, 0
    %p131 = por %p129, %p130
    %p132 = scmp.ne.s32.totalorder %s124, %s126
    %p133 = scmp.eq.s32.totalorder %s17, 1
    %p134 = por %p132, %p133
    %p135 = scmp.ne.s32.totalorder %s126, %s127
    %p136 = scmp.eq.s32.totalorder %s17, 0
    %p137 = por %p135, %p136
    %p138 = scmp.ne.s32.totalorder %s126, %s127
    %p139 = scmp.eq.s32.totalorder %s18, 1
    %p140 = por %p138, %p139
    %p142 = scmp.ne.s32.totalorder %s127, %s141
    %p143 = scmp.eq.s32.totalorder %s18, 0
    %p144 = por %p142, %p143
    %s145 = ssub.s32 %s19, %s31
    %s146 = ssub.s32 %s20, %s27
    %s147 = sor.u32 %s145, %s146
    %p148 = scmp.eq.s32.totalorder %s147, 0
    %s150 = sadd.s32 %s149, 1
    %s151 = scalar_select %p148, %s149, %s150
    %p154 = pneg %p148
    %p155 = scmp.eq.s32.totalorder %s12, 1
    %p156 = por %p154, %p155
    %p157 = scmp.ne.s32.totalorder %s149, %s152
    %p158 = scmp.eq.s32.totalorder %s12, 0
    %p159 = por %p157, %p158
    %p160 = scmp.ne.s32.totalorder %s149, %s152
    %p161 = scmp.eq.s32.totalorder %s17, 1
    %p162 = por %p160, %p161
    %p163 = scmp.ne.s32.totalorder %s152, %s153
    %p164 = scmp.eq.s32.totalorder %s17, 0
    %p165 = por %p163, %p164
    %p166 = scmp.ne.s32.totalorder %s152, %s153
    %p167 = scmp.eq.s32.totalorder %s18, 1
    %p168 = por %p166, %p167
    %p170 = scmp.ne.s32.totalorder %s153, %s169
    %p171 = scmp.eq.s32.totalorder %s18, 0
    %p172 = por %p170, %p171
    %s173 = ssub.s32 %s19, %s31
    %s174 = ssub.s32 %s20, %s27
    %s175 = sor.u32 %s173, %s174
    %p176 = scmp.eq.s32.totalorder %s175, 0
    %s178 = sadd.s32 %s177, 1
    %s179 = scalar_select %p176, %s177, %s178
    %p182 = pneg %p176
    %p183 = scmp.eq.s32.totalorder %s12, 1
    %p184 = por %p182, %p183
    %p185 = scmp.ne.s32.totalorder %s177, %s180
    %p186 = scmp.eq.s32.totalorder %s12, 0
    %p187 = por %p185, %p186
    %p188 = scmp.ne.s32.totalorder %s177, %s180
    %p189 = scmp.eq.s32.totalorder %s17, 1
    %p190 = por %p188, %p189
    %p191 = scmp.ne.s32.totalorder %s180, %s181
    %p192 = scmp.eq.s32.totalorder %s17, 0
    %p193 = por %p191, %p192
    %p194 = scmp.ne.s32.totalorder %s180, %s181
    %p195 = scmp.eq.s32.totalorder %s18, 1
    %p196 = por %p194, %p195
    %p198 = scmp.ne.s32.totalorder %s181, %s197
    %p199 = scmp.eq.s32.totalorder %s18, 0
    %p200 = por %p198, %p199
    %p201 = scmp.le.s32.totalorder 1, %s12
    %p202 = scmp.lt.s32.totalorder %s12, 3
    %p203 = pnand %p201, %p202
    %p204 = pneg %p203
    // Predicated region
    $region9: #{down_forward.8} parent=5 // pred_check
      _
    $region10: #{down_forward.8} parent=5 // pred_check_branch
      %206 = sbr.rel (%p203) target = $region12
    $region11: #{down_forward.8} parent=5 // pred_region
      %s207 = ssub.s32 %s12, 1
      // Predicated region
      $region13: #{down_forward.8} parent=11 // pred_check
        %p208 = pneg %p137
      $region14: #{down_forward.8} parent=11 // pred_check_branch
        %210 = sbr.rel (%p208) target = $region16
      $region15: #{down_forward.8} parent=11 // pred_region
        _
      $region16: #{down_forward.8} parent=11 // pred_fallthru
        _
    $region12: #{down_forward.8} parent=5 // pred_fallthru
      _
    %p211 = scmp.lt.s32.totalorder %s12, 2
    // Predicated region
    $region17: #{down_forward.8} parent=5 // pred_check
      %p212 = pneg %p211
    $region18: #{down_forward.8} parent=5 // pred_check_branch
      %214 = sbr.rel (%p212) target = $region20
    $region19: #{down_forward.8} parent=5 // pred_region
      // Predicated region
      $region21: #{down_forward.8} parent=19 // pred_check
        %p215 = pneg %p46
      $region22: #{down_forward.8} parent=19 // pred_check_branch
        %217 = sbr.rel (%p215) target = $region24
      $region23: #{down_forward.8} parent=19 // pred_region
        %s218 = smul.u32 8, %s20
        %s219 = ssub.s32 10, %s218
        %p220 = scmp.lt.s32.totalorder %s219, 8
        %s221 = scalar_select %p220, %s219, 8
        %s222 = smul.u32 64, %s221
        %s223 = smul.u32 %s222, 2
        %p224 = scmp.lt.s32.totalorder %s19, 1
        %s225 = scalar_select %p224, %s19, 1
        %p226 = scmp.lt.s32.totalorder %s218, 9
        %s227 = scalar_select %p226, %s218, 9
        %s228 = smul.addr %s227, 2
        %s229 = smul.addr %s225, 20
        %s230 = sadd.s32 %s228, %s229
        %s231 = smul.addr %s230, 4
        %s232 = scalar_lea.vmem %s0, %s231
        %s233 = smul.u32 8, %s20
        %s234 = ssub.s32 10, %s233
        %p235 = scmp.lt.s32.totalorder %s234, 8
        %s236 = scalar_select %p235, %s234, 8
        %s237 = smul.u32 64, %s236
        %s238 = smul.u32 %s237, 2
      $region24: #{down_forward.8} parent=19 // pred_fallthru
        _
      // Predicated region
      $region25: #{down_forward.8} parent=19 // pred_check
        %p239 = pneg %p78
      $region26: #{down_forward.8} parent=19 // pred_check_branch
        %241 = sbr.rel (%p239) target = $region28
      $region27: #{down_forward.8} parent=19 // pred_region
        %s242 = smul.u32 %s20, 8
        %s243 = sadd.s32 %s242, 8
        %p244 = scmp.lt.s32.totalorder %s19, 1
        %s245 = scalar_select %p244, %s19, 1
        %p246 = scmp.lt.s32.totalorder %s243, 9
        %s247 = scalar_select %p246, %s243, 9
        %s248 = smul.addr %s247, 2
        %s249 = smul.addr %s245, 20
        %s250 = sadd.s32 %s248, %s249
        %s251 = smul.addr %s250, 4
        %s252 = scalar_lea.vmem %s1, %s251
        %s253 = smul.u32 %s20, 8
        %s254 = sadd.s32 %s253, 8
      $region28: #{down_forward.8} parent=19 // pred_fallthru
        _
      // Predicated region
      $region29: #{down_forward.8} parent=19 // pred_check
        %p255 = pneg %p110
      $region30: #{down_forward.8} parent=19 // pred_check_branch
        %257 = sbr.rel (%p255) target = $region32
      $region31: #{down_forward.8} parent=19 // pred_region
        %s258 = smul.u32 %s20, 8
        %s259 = sadd.s32 %s258, 9
        %p260 = scmp.lt.s32.totalorder %s19, 1
        %s261 = scalar_select %p260, %s19, 1
        %p262 = scmp.lt.s32.totalorder %s259, 9
        %s263 = scalar_select %p262, %s259, 9
        %s264 = smul.addr %s263, 2
        %s265 = smul.addr %s261, 20
        %s266 = sadd.s32 %s264, %s265
        %s267 = smul.addr %s266, 4
        %s268 = scalar_lea.vmem %s2, %s267
        %s269 = smul.u32 %s20, 8
        %s270 = sadd.s32 %s269, 9
      $region32: #{down_forward.8} parent=19 // pred_fallthru
        _
    $region20: #{down_forward.8} parent=5 // pred_fallthru
      _
    %p271 = scmp.le.s32.totalorder 1, %s12
    %p272 = scmp.lt.s32.totalorder %s12, 3
    %p273 = pnand %p271, %p272
    %p274 = pneg %p273
    // Predicated region
    $region33: #{down_forward.8} parent=5 // pred_check
      _
    $region34: #{down_forward.8} parent=5 // pred_check_branch
      %276 = sbr.rel (%p273) target = $region36
    $region35: #{down_forward.8} parent=5 // pred_region
      %s277 = ssub.s32 %s12, 1
      %s278 = smul.u32 8, %s22
      %s279 = ssub.s32 10, %s278
      %p280 = scmp.lt.s32.totalorder %s279, 8
      %s281 = scalar_select %p280, %s279, 8
      %s282 = smul.u32 64, %s281
      %s283 = smul.u32 %s282, 2
      %p284 = scmp.lt.s32.totalorder %s21, 1
      %s285 = scalar_select %p284, %s21, 1
      %p286 = scmp.lt.s32.totalorder %s278, 9
      %s287 = scalar_select %p286, %s278, 9
      %s288 = smul.addr %s287, 2
      %s289 = smul.addr %s285, 20
      %s290 = sadd.s32 %s288, %s289
      %s291 = smul.addr %s290, 4
      %s292 = scalar_lea.vmem %s0, %s291
      %p293 = pneg %p52
      %p294 = pneg %p49
      %s295 = smul.u32 %s22, 8
      %s296 = sadd.s32 %s295, 8
      %p297 = scmp.lt.s32.totalorder %s21, 1
      %s298 = scalar_select %p297, %s21, 1
      %p299 = scmp.lt.s32.totalorder %s296, 9
      %s300 = scalar_select %p299, %s296, 9
      %s301 = smul.addr %s300, 2
      %s302 = smul.addr %s298, 20
      %s303 = sadd.s32 %s301, %s302
      %s304 = smul.addr %s303, 4
      %s305 = scalar_lea.vmem %s1, %s304
      %p306 = pneg %p84
      %p307 = pneg %p81
      %s308 = smul.u32 %s22, 8
      %s309 = sadd.s32 %s308, 9
      %p310 = scmp.lt.s32.totalorder %s21, 1
      %s311 = scalar_select %p310, %s21, 1
      %p312 = scmp.lt.s32.totalorder %s309, 9
      %s313 = scalar_select %p312, %s309, 9
      %s314 = smul.addr %s313, 2
      %s315 = smul.addr %s311, 20
      %s316 = sadd.s32 %s314, %s315
      %s317 = smul.addr %s316, 4
      %s318 = scalar_lea.vmem %s2, %s317
      %p319 = pneg %p116
      %p320 = pneg %p113
      %p321 = pneg %p137
      %p322 = pneg %p134
      %p323 = pneg %p165
      %p324 = pneg %p162
      %s325 = smul.u32 8, %s22
      %p326 = scmp.lt.s32.totalorder %s21, 1
      %s327 = scalar_select %p326, %s21, 1
      %p328 = scmp.lt.s32.totalorder %s325, 7
      %s329 = scalar_select %p328, %s325, 7
      %s330 = smul.addr %s327, 8
      %s331 = sadd.s32 %s329, %s330
      %s332 = smul.addr %s331, 4
      %s333 = scalar_lea.vmem %s4, %s332
      %p334 = pneg %p193
      %p335 = pneg %p190
      %p336 = scmp.lt.s32.totalorder %s21, 1
      %s337 = scalar_select %p336, %s21, 1
      %p338 = scmp.lt.s32.totalorder %s22, 0
      %s339 = scalar_select %p338, %s22, 0
      %s340 = sadd.s32 %s339, %s337
      %s341 = smul.addr %s340, 2
      %s342 = scalar_lea.vmem %s5, %s341
      %s343 = smul.u32 8, %s22
      %s344 = ssub.s32 10, %s343
      %p345 = scmp.lt.s32.totalorder %s344, 8
      %s346 = scalar_select %p345, %s344, 8
      %s347 = smul.u32 64, %s346
      %s348 = smul.u32 %s347, 2
      %p349 = scmp.lt.s32.totalorder %s21, 1
      %s350 = scalar_select %p349, %s21, 1
      %p351 = scmp.lt.s32.totalorder %s343, 9
      %s352 = scalar_select %p351, %s343, 9
      %s353 = smul.addr %s352, 2
      %s354 = smul.addr %s350, 20
      %s355 = sadd.s32 %s353, %s354
      %s356 = smul.addr %s355, 4
      %s357 = scalar_lea.vmem %s0, %s356
      %s358 = smul.u32 8, %s22
      %s359 = ssub.s32 10, %s358
      %p360 = scmp.lt.s32.totalorder %s359, 8
      %s361 = scalar_select %p360, %s359, 8
      %s362 = smul.u32 64, %s361
      %s363 = smul.u32 %s362, 2
      %s364 = smul.u32 %s22, 8
      %s365 = sadd.s32 %s364, 8
      %p366 = scmp.lt.s32.totalorder %s21, 1
      %s367 = scalar_select %p366, %s21, 1
      %p368 = scmp.lt.s32.totalorder %s365, 9
      %s369 = scalar_select %p368, %s365, 9
      %s370 = smul.addr %s369, 2
      %s371 = smul.addr %s367, 20
      %s372 = sadd.s32 %s370, %s371
      %s373 = smul.addr %s372, 4
      %s374 = scalar_lea.vmem %s1, %s373
      %s375 = smul.u32 %s22, 8
      %s376 = sadd.s32 %s375, 8
      %s377 = smul.u32 %s22, 8
      %s378 = sadd.s32 %s377, 9
      %p379 = scmp.lt.s32.totalorder %s21, 1
      %s380 = scalar_select %p379, %s21, 1
      %p381 = scmp.lt.s32.totalorder %s378, 9
      %s382 = scalar_select %p381, %s378, 9
      %s383 = smul.addr %s382, 2
      %s384 = smul.addr %s380, 20
      %s385 = sadd.s32 %s383, %s384
      %s386 = smul.addr %s385, 4
      %s387 = scalar_lea.vmem %s2, %s386
      %s388 = smul.u32 %s22, 8
      %s389 = sadd.s32 %s388, 9
      %s390 = smul.u32 8, %s22
      %p391 = scmp.lt.s32.totalorder %s21, 1
      %s392 = scalar_select %p391, %s21, 1
      %p393 = scmp.lt.s32.totalorder %s390, 7
      %s394 = scalar_select %p393, %s390, 7
      %s395 = smul.addr %s392, 8
      %s396 = sadd.s32 %s394, %s395
      %s397 = smul.addr %s396, 4
      %s398 = scalar_lea.vmem %s4, %s397
      %s399 = smul.u32 8, %s22
      %p400 = scmp.lt.s32.totalorder %s21, 1
      %s401 = scalar_select %p400, %s21, 1
      %p402 = scmp.lt.s32.totalorder %s22, 0
      %s403 = scalar_select %p402, %s22, 0
      %s404 = sadd.s32 %s403, %s401
      %s405 = smul.addr %s404, 2
      %s406 = scalar_lea.vmem %s5, %s405
      %v408 = vld [vmem:[%s357] sm:$0xf]
      %v409 = vld [vmem:[%s357 + $0x4] sm:$0x1]
      %v410 = vld [vmem:[%s357 + $0x8] sm:$0xf]
      %v411 = vld [vmem:[%s357 + $0xc] sm:$0x1]
      %v412 = vld [vmem:[%s357 + $0x10] sm:$0xf]
      %v413 = vld [vmem:[%s357 + $0x14] sm:$0x1]
      %v414 = vld [vmem:[%s357 + $0x18] sm:$0xf]
      %v415 = vld [vmem:[%s357 + $0x1c] sm:$0x1]
      %v416 = vld [vmem:[%s357 + $0x20] sm:$0xf]
      %v417 = vld [vmem:[%s357 + $0x24] sm:$0x1]
      %v418 = vld [vmem:[%s357 + $0x28] sm:$0xf]
      %v419 = vld [vmem:[%s357 + $0x2c] sm:$0x1]
      %v420 = vld [vmem:[%s357 + $0x30] sm:$0xf]
      %v421 = vld [vmem:[%s357 + $0x34] sm:$0x1]
      %v422 = vld [vmem:[%s357 + $0x38] sm:$0xf]
      %v423 = vld [vmem:[%s357 + $0x3c] sm:$0x1]
      %v424 = vld [vmem:[%s374] sm:$0xf]
      %v425 = vld [vmem:[%s374 + $0x4] sm:$0x1]
      %v426 = vld [vmem:[%s387] sm:$0xf]
      %v427 = vld [vmem:[%s387 + $0x4] sm:$0x1]
      %v444 = vunpack.c.l.b16 %v408
      %v445 = vunpack.c.l.b16 %v409
      %v446 = vunpack.c.l.b16 %v410
      %v447 = vunpack.c.l.b16 %v411
      %v448 = vunpack.c.l.b16 %v412
      %v449 = vunpack.c.l.b16 %v413
      %v450 = vunpack.c.l.b16 %v414
      %v451 = vunpack.c.l.b16 %v415
      %v452 = vunpack.c.l.b16 %v416
      %v453 = vunpack.c.l.b16 %v417
      %v454 = vunpack.c.l.b16 %v418
      %v455 = vunpack.c.l.b16 %v419
      %v456 = vunpack.c.l.b16 %v420
      %v457 = vunpack.c.l.b16 %v421
      %v458 = vunpack.c.l.b16 %v422
      %v459 = vunpack.c.l.b16 %v423
      %v460 = vpack.c.b16 %v445, %v444
      %v461 = vpack.c.b16 %v447, %v446
      %v462 = vpack.c.b16 %v449, %v448
      %v463 = vpack.c.b16 %v451, %v450
      %v464 = vpack.c.b16 %v453, %v452
      %v465 = vpack.c.b16 %v455, %v454
      %v466 = vpack.c.b16 %v457, %v456
      %v467 = vpack.c.b16 %v459, %v458
      %v469 = vshrl.u32 %v460, 16
      %v471 = vshll.u32 %v460, 16
      %v473 = vrot.slane %v471, 1
      %v474 = vor.u32 %v469, %v473
      %v476 = vshrl.u32 %v461, 16
      %v478 = vshll.u32 %v461, 16
      %v480 = vrot.slane %v478, 1
      %v481 = vor.u32 %v476, %v480
      %v483 = vshrl.u32 %v462, 16
      %v485 = vshll.u32 %v462, 16
      %v487 = vrot.slane %v485, 1
      %v488 = vor.u32 %v483, %v487
      %v490 = vshrl.u32 %v463, 16
      %v492 = vshll.u32 %v463, 16
      %v494 = vrot.slane %v492, 1
      %v495 = vor.u32 %v490, %v494
      %v497 = vshrl.u32 %v464, 16
      %v499 = vshll.u32 %v464, 16
      %v501 = vrot.slane %v499, 1
      %v502 = vor.u32 %v497, %v501
      %v504 = vshrl.u32 %v465, 16
      %v506 = vshll.u32 %v465, 16
      %v508 = vrot.slane %v506, 1
      %v509 = vor.u32 %v504, %v508
      %v511 = vshrl.u32 %v466, 16
      %v513 = vshll.u32 %v466, 16
      %v515 = vrot.slane %v513, 1
      %v516 = vor.u32 %v511, %v515
      %v518 = vshrl.u32 %v467, 16
      %v520 = vshll.u32 %v467, 16
      %v522 = vrot.slane %v520, 1
      %v523 = vor.u32 %v518, %v522
      %v524 = vrot.slane %v460, 1
      %v525 = vrot.slane %v461, 1
      %v526 = vrot.slane %v462, 1
      %v527 = vrot.slane %v463, 1
      %v528 = vrot.slane %v464, 1
      %v529 = vrot.slane %v465, 1
      %v530 = vrot.slane %v466, 1
      %v531 = vrot.slane %v467, 1
      %v534 = vunpack.c.l.b16 %v424
      %v535 = vunpack.c.l.b16 %v425
      %v536 = vpack.c.b16 %v535, %v534
      %v538 = vshrl.u32 %v536, 16
      %v540 = vshll.u32 %v536, 16
      %v542 = vrot.slane %v540, 1
      %v543 = vor.u32 %v538, %v542
      %v544 = vrot.slane %v536, 1
      %v547 = vunpack.c.l.b16 %v426
      %v548 = vunpack.c.l.b16 %v427
      %v549 = vpack.c.b16 %v548, %v547
      %v551 = vshrl.u32 %v549, 16
      %v553 = vshll.u32 %v549, 16
      %v555 = vrot.slane %v553, 1
      %v556 = vor.u32 %v551, %v555
      %v557 = vrot.slane %v549, 1
      %v558 = vunpack.c.l.b16 %v474
      %v559 = vunpack.c.l.b16 %v524
      %v560 = vunpack.c.l.b16 %v481
      %v561 = vunpack.c.l.b16 %v525
      %v562 = vunpack.c.l.b16 %v488
      %v563 = vunpack.c.l.b16 %v526
      %v564 = vunpack.c.l.b16 %v495
      %v565 = vunpack.c.l.b16 %v527
      %v566 = vunpack.c.l.b16 %v502
      %v567 = vunpack.c.l.b16 %v528
      %v568 = vunpack.c.l.b16 %v509
      %v569 = vunpack.c.l.b16 %v529
      %v570 = vunpack.c.l.b16 %v516
      %v571 = vunpack.c.l.b16 %v530
      %v572 = vunpack.c.l.b16 %v523
      %v573 = vunpack.c.l.b16 %v531
      %v574 = vunpack.c.l.b16 %v543
      %v575 = vunpack.c.l.b16 %v544
      %v576 = vunpack.c.l.b16 %v556
      %v577 = vunpack.c.l.b16 %v557
      %v578 = vld [vmem:[%s3] sm:$0xf]
      %v579 = vld [vmem:[%s3 + $0x4] sm:$0xf]
      %v580 = vld [vmem:[%s3 + $0x8] sm:$0xf]
      %v581 = vld [vmem:[%s3 + $0xc] sm:$0xf]
      %v582 = vld [vmem:[%s3 + $0x10] sm:$0xf]
      %v583 = vld [vmem:[%s3 + $0x14] sm:$0xf]
      %v584 = vld [vmem:[%s3 + $0x18] sm:$0xf]
      %v585 = vld [vmem:[%s3 + $0x1c] sm:$0xf]
      %v586 = vld [vmem:[%s3 + $0x20] sm:$0xf]
      %v587 = vld [vmem:[%s3 + $0x24] sm:$0xf]
      %v588 = vld [vmem:[%s3 + $0x28] sm:$0xf]
      %v589 = vld [vmem:[%s3 + $0x2c] sm:$0xf]
      %v590 = vld [vmem:[%s3 + $0x30] sm:$0xf]
      %v591 = vld [vmem:[%s3 + $0x34] sm:$0xf]
      %v592 = vld [vmem:[%s3 + $0x38] sm:$0xf]
      %v593 = vld [vmem:[%s3 + $0x3c] sm:$0xf]
      %v594 = vld [vmem:[%s3 + $0x40] sm:$0xf]
      %v595 = vld [vmem:[%s3 + $0x44] sm:$0xf]
      %v596 = vld [vmem:[%s3 + $0x48] sm:$0xf]
      %v597 = vld [vmem:[%s3 + $0x4c] sm:$0xf]
      %v598 = vld [vmem:[%s3 + $0x50] sm:$0xf]
      %v599 = vld [vmem:[%s3 + $0x54] sm:$0xf]
      %v600 = vld [vmem:[%s3 + $0x58] sm:$0xf]
      %v601 = vld [vmem:[%s3 + $0x5c] sm:$0xf]
      %v602 = vld [vmem:[%s3 + $0x60] sm:$0xf]
      %v603 = vld [vmem:[%s3 + $0x64] sm:$0xf]
      %v604 = vld [vmem:[%s3 + $0x68] sm:$0xf]
      %v605 = vld [vmem:[%s3 + $0x6c] sm:$0xf]
      %v606 = vld [vmem:[%s3 + $0x70] sm:$0xf]
      %v607 = vld [vmem:[%s3 + $0x74] sm:$0xf]
      %v608 = vld [vmem:[%s3 + $0x78] sm:$0xf]
      %v609 = vld [vmem:[%s3 + $0x7c] sm:$0xf]
      %v610 = vld [vmem:[%s3 + $0x80] sm:$0xf]
      %v611 = vld [vmem:[%s3 + $0x84] sm:$0xf]
      %v612 = vld [vmem:[%s3 + $0x88] sm:$0xf]
      %v613 = vld [vmem:[%s3 + $0x8c] sm:$0xf]
      %v614 = vld [vmem:[%s3 + $0x90] sm:$0xf]
      %v615 = vld [vmem:[%s3 + $0x94] sm:$0xf]
      %v616 = vld [vmem:[%s3 + $0x98] sm:$0xf]
      %v617 = vld [vmem:[%s3 + $0x9c] sm:$0xf]
      %v618 = vld [vmem:[%s3 + $0xa0] sm:$0xf]
      %v619 = vld [vmem:[%s3 + $0xa4] sm:$0xf]
      %v620 = vld [vmem:[%s3 + $0xa8] sm:$0xf]
      %v621 = vld [vmem:[%s3 + $0xac] sm:$0xf]
      %v622 = vld [vmem:[%s3 + $0xb0] sm:$0xf]
      %v623 = vld [vmem:[%s3 + $0xb4] sm:$0xf]
      %v624 = vld [vmem:[%s3 + $0xb8] sm:$0xf]
      %v625 = vld [vmem:[%s3 + $0xbc] sm:$0xf]
      %v626 = vld [vmem:[%s3 + $0xc0] sm:$0xf]
      %v627 = vld [vmem:[%s3 + $0xc4] sm:$0xf]
      %v628 = vld [vmem:[%s3 + $0xc8] sm:$0xf]
      %v629 = vld [vmem:[%s3 + $0xcc] sm:$0xf]
      %v630 = vld [vmem:[%s3 + $0xd0] sm:$0xf]
      %v631 = vld [vmem:[%s3 + $0xd4] sm:$0xf]
      %v632 = vld [vmem:[%s3 + $0xd8] sm:$0xf]
      %v633 = vld [vmem:[%s3 + $0xdc] sm:$0xf]
      %v634 = vld [vmem:[%s3 + $0xe0] sm:$0xf]
      %v635 = vld [vmem:[%s3 + $0xe4] sm:$0xf]
      %v636 = vld [vmem:[%s3 + $0xe8] sm:$0xf]
      %v637 = vld [vmem:[%s3 + $0xec] sm:$0xf]
      %v638 = vld [vmem:[%s3 + $0xf0] sm:$0xf]
      %v639 = vld [vmem:[%s3 + $0xf4] sm:$0xf]
      %v640 = vld [vmem:[%s3 + $0xf8] sm:$0xf]
      %v641 = vld [vmem:[%s3 + $0xfc] sm:$0xf]
      %v642 = vld [vmem:[%s3 + $0x100] sm:$0xf]
      %v643 = vld [vmem:[%s3 + $0x104] sm:$0xf]
      %v644 = vld [vmem:[%s3 + $0x108] sm:$0xf]
      %v645 = vld [vmem:[%s3 + $0x10c] sm:$0xf]
      %v646 = vld [vmem:[%s3 + $0x110] sm:$0xf]
      %v647 = vld [vmem:[%s3 + $0x114] sm:$0xf]
      %v648 = vld [vmem:[%s3 + $0x118] sm:$0xf]
      %v649 = vld [vmem:[%s3 + $0x11c] sm:$0xf]
      %v650 = vld [vmem:[%s3 + $0x120] sm:$0xf]
      %v651 = vld [vmem:[%s3 + $0x124] sm:$0xf]
      %v652 = vld [vmem:[%s3 + $0x128] sm:$0xf]
      %v653 = vld [vmem:[%s3 + $0x12c] sm:$0xf]
      %v654 = vld [vmem:[%s3 + $0x130] sm:$0xf]
      %v655 = vld [vmem:[%s3 + $0x134] sm:$0xf]
      %v656 = vld [vmem:[%s3 + $0x138] sm:$0xf]
      %v657 = vld [vmem:[%s3 + $0x13c] sm:$0xf]
      %v658 = vld [vmem:[%s3 + $0x140] sm:$0xf]
      %v659 = vld [vmem:[%s3 + $0x144] sm:$0xf]
      %v660 = vld [vmem:[%s3 + $0x148] sm:$0xf]
      %v661 = vld [vmem:[%s3 + $0x14c] sm:$0xf]
      %v662 = vld [vmem:[%s3 + $0x150] sm:$0xf]
      %v663 = vld [vmem:[%s3 + $0x154] sm:$0xf]
      %v664 = vld [vmem:[%s3 + $0x158] sm:$0xf]
      %v665 = vld [vmem:[%s3 + $0x15c] sm:$0xf]
      %v666 = vld [vmem:[%s3 + $0x160] sm:$0xf]
      %v667 = vld [vmem:[%s3 + $0x164] sm:$0xf]
      %v668 = vld [vmem:[%s3 + $0x168] sm:$0xf]
      %v669 = vld [vmem:[%s3 + $0x16c] sm:$0xf]
      %v670 = vld [vmem:[%s3 + $0x170] sm:$0xf]
      %v671 = vld [vmem:[%s3 + $0x174] sm:$0xf]
      %v672 = vld [vmem:[%s3 + $0x178] sm:$0xf]
      %v673 = vld [vmem:[%s3 + $0x17c] sm:$0xf]
      %v674 = vld [vmem:[%s3 + $0x180] sm:$0xf]
      %v675 = vld [vmem:[%s3 + $0x184] sm:$0xf]
      %v676 = vld [vmem:[%s3 + $0x188] sm:$0xf]
      %v677 = vld [vmem:[%s3 + $0x18c] sm:$0xf]
      %v678 = vld [vmem:[%s3 + $0x190] sm:$0xf]
      %v679 = vld [vmem:[%s3 + $0x194] sm:$0xf]
      %v680 = vld [vmem:[%s3 + $0x198] sm:$0xf]
      %v681 = vld [vmem:[%s3 + $0x19c] sm:$0xf]
      %v682 = vld [vmem:[%s3 + $0x1a0] sm:$0xf]
      %v683 = vld [vmem:[%s3 + $0x1a4] sm:$0xf]
      %v684 = vld [vmem:[%s3 + $0x1a8] sm:$0xf]
      %v685 = vld [vmem:[%s3 + $0x1ac] sm:$0xf]
      %v686 = vld [vmem:[%s3 + $0x1b0] sm:$0xf]
      %v687 = vld [vmem:[%s3 + $0x1b4] sm:$0xf]
      %v688 = vld [vmem:[%s3 + $0x1b8] sm:$0xf]
      %v689 = vld [vmem:[%s3 + $0x1bc] sm:$0xf]
      %v690 = vld [vmem:[%s3 + $0x1c0] sm:$0xf]
      %v691 = vld [vmem:[%s3 + $0x1c4] sm:$0xf]
      %v692 = vld [vmem:[%s3 + $0x1c8] sm:$0xf]
      %v693 = vld [vmem:[%s3 + $0x1cc] sm:$0xf]
      %v694 = vld [vmem:[%s3 + $0x1d0] sm:$0xf]
      %v695 = vld [vmem:[%s3 + $0x1d4] sm:$0xf]
      %v696 = vld [vmem:[%s3 + $0x1d8] sm:$0xf]
      %v697 = vld [vmem:[%s3 + $0x1dc] sm:$0xf]
      %v698 = vld [vmem:[%s3 + $0x1e0] sm:$0xf]
      %v699 = vld [vmem:[%s3 + $0x1e4] sm:$0xf]
      %v700 = vld [vmem:[%s3 + $0x1e8] sm:$0xf]
      %v701 = vld [vmem:[%s3 + $0x1ec] sm:$0xf]
      %v702 = vld [vmem:[%s3 + $0x1f0] sm:$0xf]
      %v703 = vld [vmem:[%s3 + $0x1f4] sm:$0xf]
      %v704 = vld [vmem:[%s3 + $0x1f8] sm:$0xf]
      %v705 = vld [vmem:[%s3 + $0x1fc] sm:$0xf]
      %v706 = vld [vmem:[%s3 + $0x200] sm:$0xf]
      %v707 = vld [vmem:[%s3 + $0x204] sm:$0xf]
      %v708 = vld [vmem:[%s3 + $0x208] sm:$0xf]
      %v709 = vld [vmem:[%s3 + $0x20c] sm:$0xf]
      %v710 = vld [vmem:[%s3 + $0x210] sm:$0xf]
      %v711 = vld [vmem:[%s3 + $0x214] sm:$0xf]
      %v712 = vld [vmem:[%s3 + $0x218] sm:$0xf]
      %v713 = vld [vmem:[%s3 + $0x21c] sm:$0xf]
      %v714 = vld [vmem:[%s3 + $0x220] sm:$0xf]
      %v715 = vld [vmem:[%s3 + $0x224] sm:$0xf]
      %v716 = vld [vmem:[%s3 + $0x228] sm:$0xf]
      %v717 = vld [vmem:[%s3 + $0x22c] sm:$0xf]
      %v718 = vld [vmem:[%s3 + $0x230] sm:$0xf]
      %v719 = vld [vmem:[%s3 + $0x234] sm:$0xf]
      %v720 = vld [vmem:[%s3 + $0x238] sm:$0xf]
      %v721 = vld [vmem:[%s3 + $0x23c] sm:$0xf]
      %v722 = vpack.c.b16 %v446, %v444
      %v723 = vpack.c.b16 %v560, %v558
      %v724 = vpack.c.b16 %v561, %v559
      %v725 = vpack.c.b16 %v448, %v446
      %v726 = vpack.c.b16 %v562, %v560
      %v727 = vpack.c.b16 %v563, %v561
      %v728 = vpack.c.b16 %v450, %v448
      %v729 = vpack.c.b16 %v564, %v562
      %v730 = vpack.c.b16 %v565, %v563
      %v731 = vpack.c.b16 %v452, %v450
      %v732 = vpack.c.b16 %v566, %v564
      %v733 = vpack.c.b16 %v567, %v565
      %v734 = vpack.c.b16 %v454, %v452
      %v735 = vpack.c.b16 %v568, %v566
      %v736 = vpack.c.b16 %v569, %v567
      %v737 = vpack.c.b16 %v456, %v454
      %v738 = vpack.c.b16 %v570, %v568
      %v739 = vpack.c.b16 %v571, %v569
      %v740 = vpack.c.b16 %v458, %v456
      %v741 = vpack.c.b16 %v572, %v570
      %v742 = vpack.c.b16 %v573, %v571
      %v743 = vpack.c.b16 %v534, %v458
      %v744 = vpack.c.b16 %v574, %v572
      %v745 = vpack.c.b16 %v575, %v573
      %v746 = vpack.c.b16 %v547, %v534
      %v747 = vpack.c.b16 %v576, %v574
      %v748 = vpack.c.b16 %v577, %v575
      %v920 = vunpack.c.l.b16 %v578
      %v921 = vunpack.c.l.b16 %v579
      %v922 = vunpack.c.l.b16 %v580
      %v923 = vunpack.c.l.b16 %v581
      %v924 = vunpack.c.l.b16 %v582
      %v925 = vunpack.c.l.b16 %v583
      %v926 = vunpack.c.l.b16 %v584
      %v927 = vunpack.c.l.b16 %v585
      %v928 = vunpack.c.l.b16 %v586
      %v929 = vunpack.c.l.b16 %v587
      %v930 = vunpack.c.l.b16 %v588
      %v931 = vunpack.c.l.b16 %v589
      %v932 = vunpack.c.l.b16 %v590
      %v933 = vunpack.c.l.b16 %v591
      %v934 = vunpack.c.l.b16 %v592
      %v935 = vunpack.c.l.b16 %v593
      %v936 = vunpack.c.l.b16 %v594
      %v937 = vunpack.c.l.b16 %v595
      %v938 = vunpack.c.l.b16 %v596
      %v939 = vunpack.c.l.b16 %v597
      %v940 = vunpack.c.l.b16 %v598
      %v941 = vunpack.c.l.b16 %v599
      %v942 = vunpack.c.l.b16 %v600
      %v943 = vunpack.c.l.b16 %v601
      %v944 = vunpack.c.l.b16 %v602
      %v945 = vunpack.c.l.b16 %v603
      %v946 = vunpack.c.l.b16 %v604
      %v947 = vunpack.c.l.b16 %v605
      %v948 = vunpack.c.l.b16 %v606
      %v949 = vunpack.c.l.b16 %v607
      %v950 = vunpack.c.l.b16 %v608
      %v951 = vunpack.c.l.b16 %v609
      %v952 = vunpack.c.l.b16 %v610
      %v953 = vunpack.c.l.b16 %v611
      %v954 = vunpack.c.l.b16 %v612
      %v955 = vunpack.c.l.b16 %v613
      %v956 = vunpack.c.l.b16 %v614
      %v957 = vunpack.c.l.b16 %v615
      %v958 = vunpack.c.l.b16 %v616
      %v959 = vunpack.c.l.b16 %v617
      %v960 = vunpack.c.l.b16 %v618
      %v961 = vunpack.c.l.b16 %v619
      %v962 = vunpack.c.l.b16 %v620
      %v963 = vunpack.c.l.b16 %v621
      %v964 = vunpack.c.l.b16 %v622
      %v965 = vunpack.c.l.b16 %v623
      %v966 = vunpack.c.l.b16 %v624
      %v967 = vunpack.c.l.b16 %v625
      %v968 = vunpack.c.l.b16 %v626
      %v969 = vunpack.c.l.b16 %v627
      %v970 = vunpack.c.l.b16 %v628
      %v971 = vunpack.c.l.b16 %v629
      %v972 = vunpack.c.l.b16 %v630
      %v973 = vunpack.c.l.b16 %v631
      %v974 = vunpack.c.l.b16 %v632
      %v975 = vunpack.c.l.b16 %v633
      %v976 = vunpack.c.l.b16 %v634
      %v977 = vunpack.c.l.b16 %v635
      %v978 = vunpack.c.l.b16 %v636
      %v979 = vunpack.c.l.b16 %v637
      %v980 = vunpack.c.l.b16 %v638
      %v981 = vunpack.c.l.b16 %v639
      %v982 = vunpack.c.l.b16 %v640
      %v983 = vunpack.c.l.b16 %v641
      %v984 = vunpack.c.l.b16 %v642
      %v985 = vunpack.c.l.b16 %v643
      %v986 = vunpack.c.l.b16 %v644
      %v987 = vunpack.c.l.b16 %v645
      %v988 = vunpack.c.l.b16 %v646
      %v989 = vunpack.c.l.b16 %v647
      %v990 = vunpack.c.l.b16 %v648
      %v991 = vunpack.c.l.b16 %v649
      %v992 = vunpack.c.l.b16 %v650
      %v993 = vunpack.c.l.b16 %v651
      %v994 = vunpack.c.l.b16 %v652
      %v995 = vunpack.c.l.b16 %v653
      %v996 = vunpack.c.l.b16 %v654
      %v997 = vunpack.c.l.b16 %v655
      %v998 = vunpack.c.l.b16 %v656
      %v999 = vunpack.c.l.b16 %v657
      %v1000 = vunpack.c.l.b16 %v658
      %v1001 = vunpack.c.l.b16 %v659
      %v1002 = vunpack.c.l.b16 %v660
      %v1003 = vunpack.c.l.b16 %v661
      %v1004 = vunpack.c.l.b16 %v662
      %v1005 = vunpack.c.l.b16 %v663
      %v1006 = vunpack.c.l.b16 %v664
      %v1007 = vunpack.c.l.b16 %v665
      %v1008 = vunpack.c.l.b16 %v666
      %v1009 = vunpack.c.l.b16 %v667
      %v1010 = vunpack.c.l.b16 %v668
      %v1011 = vunpack.c.l.b16 %v669
      %v1012 = vunpack.c.l.b16 %v670
      %v1013 = vunpack.c.l.b16 %v671
      %v1014 = vunpack.c.l.b16 %v672
      %v1015 = vunpack.c.l.b16 %v673
      %v1016 = vunpack.c.l.b16 %v674
      %v1017 = vunpack.c.l.b16 %v675
      %v1018 = vunpack.c.l.b16 %v676
      %v1019 = vunpack.c.l.b16 %v677
      %v1020 = vunpack.c.l.b16 %v678
      %v1021 = vunpack.c.l.b16 %v679
      %v1022 = vunpack.c.l.b16 %v680
      %v1023 = vunpack.c.l.b16 %v681
      %v1024 = vunpack.c.l.b16 %v682
      %v1025 = vunpack.c.l.b16 %v683
      %v1026 = vunpack.c.l.b16 %v684
      %v1027 = vunpack.c.l.b16 %v685
      %v1028 = vunpack.c.l.b16 %v686
      %v1029 = vunpack.c.l.b16 %v687
      %v1030 = vunpack.c.l.b16 %v688
      %v1031 = vunpack.c.l.b16 %v689
      %v1032 = vunpack.c.l.b16 %v690
      %v1033 = vunpack.c.l.b16 %v691
      %v1034 = vunpack.c.l.b16 %v692
      %v1035 = vunpack.c.l.b16 %v693
      %v1036 = vunpack.c.l.b16 %v694
      %v1037 = vunpack.c.l.b16 %v695
      %v1038 = vunpack.c.l.b16 %v696
      %v1039 = vunpack.c.l.b16 %v697
      %v1040 = vunpack.c.l.b16 %v698
      %v1041 = vunpack.c.l.b16 %v699
      %v1042 = vunpack.c.l.b16 %v700
      %v1043 = vunpack.c.l.b16 %v701
      %v1044 = vunpack.c.l.b16 %v702
      %v1045 = vunpack.c.l.b16 %v703
      %v1046 = vunpack.c.l.b16 %v704
      %v1047 = vunpack.c.l.b16 %v705
      %v1048 = vunpack.c.l.b16 %v706
      %v1049 = vunpack.c.l.b16 %v707
      %v1050 = vunpack.c.l.b16 %v708
      %v1051 = vunpack.c.l.b16 %v709
      %v1052 = vunpack.c.l.b16 %v710
      %v1053 = vunpack.c.l.b16 %v711
      %v1054 = vunpack.c.l.b16 %v712
      %v1055 = vunpack.c.l.b16 %v713
      %v1056 = vunpack.c.l.b16 %v714
      %v1057 = vunpack.c.l.b16 %v715
      %v1058 = vunpack.c.l.b16 %v716
      %v1059 = vunpack.c.l.b16 %v717
      %v1060 = vunpack.c.l.b16 %v718
      %v1061 = vunpack.c.l.b16 %v719
      %v1062 = vunpack.c.l.b16 %v720
      %v1063 = vunpack.c.l.b16 %v721
      %v1064 = vpack.c.b16 %v921, %v920
      %v1065 = vpack.c.b16 %v923, %v922
      %v1066 = vpack.c.b16 %v925, %v924
      %v1067 = vpack.c.b16 %v927, %v926
      %v1068 = vpack.c.b16 %v929, %v928
      %v1069 = vpack.c.b16 %v931, %v930
      %v1070 = vpack.c.b16 %v933, %v932
      %v1071 = vpack.c.b16 %v935, %v934
      %v1072 = vpack.c.b16 %v937, %v936
      %v1073 = vpack.c.b16 %v939, %v938
      %v1074 = vpack.c.b16 %v941, %v940
      %v1075 = vpack.c.b16 %v943, %v942
      %v1076 = vpack.c.b16 %v945, %v944
      %v1077 = vpack.c.b16 %v947, %v946
      %v1078 = vpack.c.b16 %v949, %v948
      %v1079 = vpack.c.b16 %v951, %v950
      %v1080 = vpack.c.b16 %v953, %v952
      %v1081 = vpack.c.b16 %v955, %v954
      %v1082 = vpack.c.b16 %v957, %v956
      %v1083 = vpack.c.b16 %v959, %v958
      %v1084 = vpack.c.b16 %v961, %v960
      %v1085 = vpack.c.b16 %v963, %v962
      %v1086 = vpack.c.b16 %v965, %v964
      %v1087 = vpack.c.b16 %v967, %v966
      %v1088 = vpack.c.b16 %v969, %v968
      %v1089 = vpack.c.b16 %v971, %v970
      %v1090 = vpack.c.b16 %v973, %v972
      %v1091 = vpack.c.b16 %v975, %v974
      %v1092 = vpack.c.b16 %v977, %v976
      %v1093 = vpack.c.b16 %v979, %v978
      %v1094 = vpack.c.b16 %v981, %v980
      %v1095 = vpack.c.b16 %v983, %v982
      %v1096 = vpack.c.b16 %v985, %v984
      %v1097 = vpack.c.b16 %v987, %v986
      %v1098 = vpack.c.b16 %v989, %v988
      %v1099 = vpack.c.b16 %v991, %v990
      %v1100 = vpack.c.b16 %v993, %v992
      %v1101 = vpack.c.b16 %v995, %v994
      %v1102 = vpack.c.b16 %v997, %v996
      %v1103 = vpack.c.b16 %v999, %v998
      %v1104 = vpack.c.b16 %v1001, %v1000
      %v1105 = vpack.c.b16 %v1003, %v1002
      %v1106 = vpack.c.b16 %v1005, %v1004
      %v1107 = vpack.c.b16 %v1007, %v1006
      %v1108 = vpack.c.b16 %v1009, %v1008
      %v1109 = vpack.c.b16 %v1011, %v1010
      %v1110 = vpack.c.b16 %v1013, %v1012
      %v1111 = vpack.c.b16 %v1015, %v1014
      %v1112 = vpack.c.b16 %v1017, %v1016
      %v1113 = vpack.c.b16 %v1019, %v1018
      %v1114 = vpack.c.b16 %v1021, %v1020
      %v1115 = vpack.c.b16 %v1023, %v1022
      %v1116 = vpack.c.b16 %v1025, %v1024
      %v1117 = vpack.c.b16 %v1027, %v1026
      %v1118 = vpack.c.b16 %v1029, %v1028
      %v1119 = vpack.c.b16 %v1031, %v1030
      %v1120 = vpack.c.b16 %v1033, %v1032
      %v1121 = vpack.c.b16 %v1035, %v1034
      %v1122 = vpack.c.b16 %v1037, %v1036
      %v1123 = vpack.c.b16 %v1039, %v1038
      %v1124 = vpack.c.b16 %v1041, %v1040
      %v1125 = vpack.c.b16 %v1043, %v1042
      %v1126 = vpack.c.b16 %v1045, %v1044
      %v1127 = vpack.c.b16 %v1047, %v1046
      %v1128 = vpack.c.b16 %v1049, %v1048
      %v1129 = vpack.c.b16 %v1051, %v1050
      %v1130 = vpack.c.b16 %v1053, %v1052
      %v1131 = vpack.c.b16 %v1055, %v1054
      %v1132 = vpack.c.b16 %v1057, %v1056
      %v1133 = vpack.c.b16 %v1059, %v1058
      %v1134 = vpack.c.b16 %v1061, %v1060
      %v1135 = vpack.c.b16 %v1063, %v1062
      %1208 = vmatprep.subr.bf16.mxu0 0
      %1209 = vmatpush1.bf16.msra.mxu0 %v1071
      %1210 = vmatprep.subr.bf16.mxu0 0
      %1211 = vmatpush1.bf16.msra.mxu0 %v1070
      %1212 = vmatprep.subr.bf16.mxu0 0
      %1213 = vmatpush1.bf16.msra.mxu0 %v1069
      %1214 = vmatprep.subr.bf16.mxu0 0
      %1215 = vmatpush1.bf16.msra.mxu0 %v1068
      %1216 = vmatprep.subr.bf16.mxu0 0
      %1217 = vmatpush1.bf16.msra.mxu0 %v1067
      %1218 = vmatprep.subr.bf16.mxu0 0
      %1219 = vmatpush1.bf16.msra.mxu0 %v1066
      %1220 = vmatprep.subr.bf16.mxu0 0
      %1221 = vmatpush1.bf16.msra.mxu0 %v1065
      %1222 = vmatprep.subr.bf16.mxu0 0
      %1223 = vmatpush1.bf16.msra.mxu0 %v1064
      %1224 = vmatprep.subr.bf16.mxu0 0
      %1225 = vmatpush2.bf16.msra.mxu0 %v1079
      %1226 = vmatprep.subr.bf16.mxu0 0
      %1227 = vmatpush2.bf16.msra.mxu0 %v1078
      %1228 = vmatprep.subr.bf16.mxu0 0
      %1229 = vmatpush2.bf16.msra.mxu0 %v1077
      %1230 = vmatprep.subr.bf16.mxu0 0
      %1231 = vmatpush2.bf16.msra.mxu0 %v1076
      %1232 = vmatprep.subr.bf16.mxu0 0
      %1233 = vmatpush2.bf16.msra.mxu0 %v1075
      %1234 = vmatprep.subr.bf16.mxu0 0
      %1235 = vmatpush2.bf16.msra.mxu0 %v1074
      %1236 = vmatprep.subr.bf16.mxu0 0
      %1237 = vmatpush2.bf16.msra.mxu0 %v1073
      %1238 = vmatprep.subr.bf16.mxu0 0
      %1239 = vmatpush2.bf16.msra.mxu0 %v1072
      %1240 = vmatprep.mubr.bf16.mxu0 %v723
      %1241 = vmatmul.mubr.bf16.gmra.mxu0 %v722
      %v1242 = vpop.f32.mrf.mxu0
      %v1243 = vadd.f32 0.0, %v1242
      %v1244 = vpop.f32.mrf.mxu0
      %v1245 = vpop.f32.mrf.mxu0
      %v1246 = vadd.f32 0.0, %v1245
      %v1247 = vpop.f32.mrf.mxu0
      %1248 = vmatprep.mubr.bf16.mxu0 %v729
      %1249 = vmatmul.mubr.bf16.gmra.mxu0 %v728
      %v1250 = vpop.f32.mrf.mxu0
      %v1251 = vadd.f32 0.0, %v1250
      %v1252 = vpop.f32.mrf.mxu0
      %v1253 = vpop.f32.mrf.mxu0
      %v1254 = vadd.f32 0.0, %v1253
      %v1255 = vpop.f32.mrf.mxu0
      %1256 = vmatprep.mubr.bf16.mxu0 %v735
      %1257 = vmatmul.mubr.bf16.gmra.mxu0 %v734
      %v1258 = vpop.f32.mrf.mxu0
      %v1259 = vadd.f32 0.0, %v1258
      %v1260 = vpop.f32.mrf.mxu0
      %v1261 = vpop.f32.mrf.mxu0
      %v1262 = vadd.f32 0.0, %v1261
      %v1263 = vpop.f32.mrf.mxu0
      %1264 = vmatprep.mubr.bf16.mxu0 %v741
      %1265 = vmatmul.mubr.bf16.gmra.mxu0 %v740
      %v1266 = vpop.f32.mrf.mxu0
      %v1267 = vadd.f32 0.0, %v1266
      %v1268 = vpop.f32.mrf.mxu0
      %v1269 = vpop.f32.mrf.mxu0
      %v1270 = vadd.f32 0.0, %v1269
      %v1271 = vpop.f32.mrf.mxu0
      %1272 = vdwg.mxu0
      %1273 = vmatprep.subr.bf16.mxu0 0
      %1274 = vmatpush1.bf16.msra.mxu0 %v1087
      %1275 = vmatprep.subr.bf16.mxu0 0
      %1276 = vmatpush1.bf16.msra.mxu0 %v1086
      %1277 = vmatprep.subr.bf16.mxu0 0
      %1278 = vmatpush1.bf16.msra.mxu0 %v1085
      %1279 = vmatprep.subr.bf16.mxu0 0
      %1280 = vmatpush1.bf16.msra.mxu0 %v1084
      %1281 = vmatprep.subr.bf16.mxu0 0
      %1282 = vmatpush1.bf16.msra.mxu0 %v1083
      %1283 = vmatprep.subr.bf16.mxu0 0
      %1284 = vmatpush1.bf16.msra.mxu0 %v1082
      %1285 = vmatprep.subr.bf16.mxu0 0
      %1286 = vmatpush1.bf16.msra.mxu0 %v1081
      %1287 = vmatprep.subr.bf16.mxu0 0
      %1288 = vmatpush1.bf16.msra.mxu0 %v1080
      %1289 = vmatprep.subr.bf16.mxu0 0
      %1290 = vmatpush2.bf16.msra.mxu0 %v1095
      %1291 = vmatprep.subr.bf16.mxu0 0
      %1292 = vmatpush2.bf16.msra.mxu0 %v1094
      %1293 = vmatprep.subr.bf16.mxu0 0
      %1294 = vmatpush2.bf16.msra.mxu0 %v1093
      %1295 = vmatprep.subr.bf16.mxu0 0
      %1296 = vmatpush2.bf16.msra.mxu0 %v1092
      %1297 = vmatprep.subr.bf16.mxu0 0
      %1298 = vmatpush2.bf16.msra.mxu0 %v1091
      %1299 = vmatprep.subr.bf16.mxu0 0
      %1300 = vmatpush2.bf16.msra.mxu0 %v1090
      %1301 = vmatprep.subr.bf16.mxu0 0
      %1302 = vmatpush2.bf16.msra.mxu0 %v1089
      %1303 = vmatprep.subr.bf16.mxu0 0
      %1304 = vmatpush2.bf16.msra.mxu0 %v1088
      %1305 = vmatprep.mubr.bf16.mxu0 %v725
      %1306 = vmatmul.mubr.bf16.gmra.mxu0 %v724
      %v1307 = vpop.f32.mrf.mxu0
      %v1308 = vadd.f32 %v1243, %v1307
      %v1309 = vpop.f32.mrf.mxu0
      %v1310 = vpop.f32.mrf.mxu0
      %v1311 = vadd.f32 %v1246, %v1310
      %v1312 = vpop.f32.mrf.mxu0
      %1313 = vmatprep.mubr.bf16.mxu0 %v731
      %1314 = vmatmul.mubr.bf16.gmra.mxu0 %v730
      %v1315 = vpop.f32.mrf.mxu0
      %v1316 = vadd.f32 %v1251, %v1315
      %v1317 = vpop.f32.mrf.mxu0
      %v1318 = vpop.f32.mrf.mxu0
      %v1319 = vadd.f32 %v1254, %v1318
      %v1320 = vpop.f32.mrf.mxu0
      %1321 = vmatprep.mubr.bf16.mxu0 %v737
      %1322 = vmatmul.mubr.bf16.gmra.mxu0 %v736
      %v1323 = vpop.f32.mrf.mxu0
      %v1324 = vadd.f32 %v1259, %v1323
      %v1325 = vpop.f32.mrf.mxu0
      %v1326 = vpop.f32.mrf.mxu0
      %v1327 = vadd.f32 %v1262, %v1326
      %v1328 = vpop.f32.mrf.mxu0
      %1329 = vmatprep.mubr.bf16.mxu0 %v743
      %1330 = vmatmul.mubr.bf16.gmra.mxu0 %v742
      %v1331 = vpop.f32.mrf.mxu0
      %v1332 = vadd.f32 %v1267, %v1331
      %v1333 = vpop.f32.mrf.mxu0
      %v1334 = vpop.f32.mrf.mxu0
      %v1335 = vadd.f32 %v1270, %v1334
      %v1336 = vpop.f32.mrf.mxu0
      %1337 = vdwg.mxu0
      %1338 = vmatprep.subr.bf16.mxu0 0
      %1339 = vmatpush1.bf16.msra.mxu0 %v1103
      %1340 = vmatprep.subr.bf16.mxu0 0
      %1341 = vmatpush1.bf16.msra.mxu0 %v1102
      %1342 = vmatprep.subr.bf16.mxu0 0
      %1343 = vmatpush1.bf16.msra.mxu0 %v1101
      %1344 = vmatprep.subr.bf16.mxu0 0
      %1345 = vmatpush1.bf16.msra.mxu0 %v1100
      %1346 = vmatprep.subr.bf16.mxu0 0
      %1347 = vmatpush1.bf16.msra.mxu0 %v1099
      %1348 = vmatprep.subr.bf16.mxu0 0
      %1349 = vmatpush1.bf16.msra.mxu0 %v1098
      %1350 = vmatprep.subr.bf16.mxu0 0
      %1351 = vmatpush1.bf16.msra.mxu0 %v1097
      %1352 = vmatprep.subr.bf16.mxu0 0
      %1353 = vmatpush1.bf16.msra.mxu0 %v1096
      %1354 = vmatprep.subr.bf16.mxu0 0
      %1355 = vmatpush2.bf16.msra.mxu0 %v1111
      %1356 = vmatprep.subr.bf16.mxu0 0
      %1357 = vmatpush2.bf16.msra.mxu0 %v1110
      %1358 = vmatprep.subr.bf16.mxu0 0
      %1359 = vmatpush2.bf16.msra.mxu0 %v1109
      %1360 = vmatprep.subr.bf16.mxu0 0
      %1361 = vmatpush2.bf16.msra.mxu0 %v1108
      %1362 = vmatprep.subr.bf16.mxu0 0
      %1363 = vmatpush2.bf16.msra.mxu0 %v1107
      %1364 = vmatprep.subr.bf16.mxu0 0
      %1365 = vmatpush2.bf16.msra.mxu0 %v1106
      %1366 = vmatprep.subr.bf16.mxu0 0
      %1367 = vmatpush2.bf16.msra.mxu0 %v1105
      %1368 = vmatprep.subr.bf16.mxu0 0
      %1369 = vmatpush2.bf16.msra.mxu0 %v1104
      %1370 = vmatprep.mubr.bf16.mxu0 %v727
      %1371 = vmatmul.mubr.bf16.gmra.mxu0 %v726
      %v1372 = vpop.f32.mrf.mxu0
      %v1373 = vadd.f32 %v1308, %v1372
      %v1374 = vpop.f32.mrf.mxu0
      %v1375 = vpop.f32.mrf.mxu0
      %v1376 = vadd.f32 %v1311, %v1375
      %v1377 = vpop.f32.mrf.mxu0
      %1378 = vmatprep.mubr.bf16.mxu0 %v733
      %1379 = vmatmul.mubr.bf16.gmra.mxu0 %v732
      %v1380 = vpop.f32.mrf.mxu0
      %v1381 = vadd.f32 %v1316, %v1380
      %v1382 = vpop.f32.mrf.mxu0
      %v1383 = vpop.f32.mrf.mxu0
      %v1384 = vadd.f32 %v1319, %v1383
      %v1385 = vpop.f32.mrf.mxu0
      %1386 = vmatprep.mubr.bf16.mxu0 %v739
      %1387 = vmatmul.mubr.bf16.gmra.mxu0 %v738
      %v1388 = vpop.f32.mrf.mxu0
      %v1389 = vadd.f32 %v1324, %v1388
      %v1390 = vpop.f32.mrf.mxu0
      %v1391 = vpop.f32.mrf.mxu0
      %v1392 = vadd.f32 %v1327, %v1391
      %v1393 = vpop.f32.mrf.mxu0
      %1394 = vmatprep.mubr.bf16.mxu0 %v745
      %1395 = vmatmul.mubr.bf16.gmra.mxu0 %v744
      %v1396 = vpop.f32.mrf.mxu0
      %v1397 = vadd.f32 %v1332, %v1396
      %v1398 = vpop.f32.mrf.mxu0
      %v1399 = vpop.f32.mrf.mxu0
      %v1400 = vadd.f32 %v1335, %v1399
      %v1401 = vpop.f32.mrf.mxu0
      %1402 = vdwg.mxu0
      %1403 = vmatprep.subr.bf16.mxu0 0
      %1404 = vmatpush1.bf16.msra.mxu0 %v1119
      %1405 = vmatprep.subr.bf16.mxu0 0
      %1406 = vmatpush1.bf16.msra.mxu0 %v1118
      %1407 = vmatprep.subr.bf16.mxu0 0
      %1408 = vmatpush1.bf16.msra.mxu0 %v1117
      %1409 = vmatprep.subr.bf16.mxu0 0
      %1410 = vmatpush1.bf16.msra.mxu0 %v1116
      %1411 = vmatprep.subr.bf16.mxu0 0
      %1412 = vmatpush1.bf16.msra.mxu0 %v1115
      %1413 = vmatprep.subr.bf16.mxu0 0
      %1414 = vmatpush1.bf16.msra.mxu0 %v1114
      %1415 = vmatprep.subr.bf16.mxu0 0
      %1416 = vmatpush1.bf16.msra.mxu0 %v1113
      %1417 = vmatprep.subr.bf16.mxu0 0
      %1418 = vmatpush1.bf16.msra.mxu0 %v1112
      %1419 = vmatprep.subr.bf16.mxu0 0
      %1420 = vmatpush2.bf16.msra.mxu0 %v1127
      %1421 = vmatprep.subr.bf16.mxu0 0
      %1422 = vmatpush2.bf16.msra.mxu0 %v1126
      %1423 = vmatprep.subr.bf16.mxu0 0
      %1424 = vmatpush2.bf16.msra.mxu0 %v1125
      %1425 = vmatprep.subr.bf16.mxu0 0
      %1426 = vmatpush2.bf16.msra.mxu0 %v1124
      %1427 = vmatprep.subr.bf16.mxu0 0
      %1428 = vmatpush2.bf16.msra.mxu0 %v1123
      %1429 = vmatprep.subr.bf16.mxu0 0
      %1430 = vmatpush2.bf16.msra.mxu0 %v1122
      %1431 = vmatprep.subr.bf16.mxu0 0
      %1432 = vmatpush2.bf16.msra.mxu0 %v1121
      %1433 = vmatprep.subr.bf16.mxu0 0
      %1434 = vmatpush2.bf16.msra.mxu0 %v1120
      %1435 = vmatprep.mubr.bf16.mxu0 %v729
      %1436 = vmatmul.mubr.bf16.gmra.mxu0 %v728
      %v1437 = vpop.f32.mrf.mxu0
      %v1438 = vadd.f32 %v1373, %v1437
      %v1439 = vpop.f32.mrf.mxu0
      %v1440 = vpop.f32.mrf.mxu0
      %v1441 = vadd.f32 %v1376, %v1440
      %v1442 = vpop.f32.mrf.mxu0
      %1443 = vmatprep.mubr.bf16.mxu0 %v735
      %1444 = vmatmul.mubr.bf16.gmra.mxu0 %v734
      %v1445 = vpop.f32.mrf.mxu0
      %v1446 = vadd.f32 %v1381, %v1445
      %v1447 = vpop.f32.mrf.mxu0
      %v1448 = vpop.f32.mrf.mxu0
      %v1449 = vadd.f32 %v1384, %v1448
      %v1450 = vpop.f32.mrf.mxu0
      %1451 = vmatprep.mubr.bf16.mxu0 %v741
      %1452 = vmatmul.mubr.bf16.gmra.mxu0 %v740
      %v1453 = vpop.f32.mrf.mxu0
      %v1454 = vadd.f32 %v1389, %v1453
      %v1455 = vpop.f32.mrf.mxu0
      %v1456 = vpop.f32.mrf.mxu0
      %v1457 = vadd.f32 %v1392, %v1456
      %v1458 = vpop.f32.mrf.mxu0
      %1459 = vmatprep.mubr.bf16.mxu0 %v747
      %1460 = vmatmul.mubr.bf16.gmra.mxu0 %v746
      %v1461 = vpop.f32.mrf.mxu0
      %v1462 = vadd.f32 %v1397, %v1461
      %v1463 = vpop.f32.mrf.mxu0
      %v1464 = vpop.f32.mrf.mxu0
      %v1465 = vadd.f32 %v1400, %v1464
      %v1466 = vpop.f32.mrf.mxu0
      %1467 = vdwg.mxu0
      %1468 = vmatprep.subr.bf16.mxu0 0
      %1469 = vmatpush1.bf16.msra.mxu0 %v1135
      %1470 = vmatprep.subr.bf16.mxu0 0
      %1471 = vmatpush1.bf16.msra.mxu0 %v1134
      %1472 = vmatprep.subr.bf16.mxu0 0
      %1473 = vmatpush1.bf16.msra.mxu0 %v1133
      %1474 = vmatprep.subr.bf16.mxu0 0
      %1475 = vmatpush1.bf16.msra.mxu0 %v1132
      %1476 = vmatprep.subr.bf16.mxu0 0
      %1477 = vmatpush1.bf16.msra.mxu0 %v1131
      %1478 = vmatprep.subr.bf16.mxu0 0
      %1479 = vmatpush1.bf16.msra.mxu0 %v1130
      %1480 = vmatprep.subr.bf16.mxu0 0
      %1481 = vmatpush1.bf16.msra.mxu0 %v1129
      %1482 = vmatprep.subr.bf16.mxu0 0
      %1483 = vmatpush1.bf16.msra.mxu0 %v1128
      %1484 = vmatprep.subr.bf16.mxu0 0
      %1485 = vmatpush2.bf16.msra.mxu0 0
      %1486 = vmatprep.subr.bf16.mxu0 0
      %1487 = vmatpush2.bf16.msra.mxu0 0
      %1488 = vmatprep.subr.bf16.mxu0 0
      %1489 = vmatpush2.bf16.msra.mxu0 0
      %1490 = vmatprep.subr.bf16.mxu0 0
      %1491 = vmatpush2.bf16.msra.mxu0 0
      %1492 = vmatprep.subr.bf16.mxu0 0
      %1493 = vmatpush2.bf16.msra.mxu0 0
      %1494 = vmatprep.subr.bf16.mxu0 0
      %1495 = vmatpush2.bf16.msra.mxu0 0
      %1496 = vmatprep.subr.bf16.mxu0 0
      %1497 = vmatpush2.bf16.msra.mxu0 0
      %1498 = vmatprep.subr.bf16.mxu0 0
      %1499 = vmatpush2.bf16.msra.mxu0 0
      %1500 = vmatprep.mubr.bf16.mxu0 0
      %1501 = vmatmul.mubr.bf16.gmra.mxu0 %v730
      %v1502 = vpop.f32.mrf.mxu0
      %v1503 = vadd.f32 %v1438, %v1502
      %v1504 = vpop.f32.mrf.mxu0
      %v1505 = vpop.f32.mrf.mxu0
      %v1506 = vadd.f32 %v1441, %v1505
      %v1507 = vpop.f32.mrf.mxu0
      %1508 = vmatprep.mubr.bf16.mxu0 0
      %1509 = vmatmul.mubr.bf16.gmra.mxu0 %v736
      %v1510 = vpop.f32.mrf.mxu0
      %v1511 = vadd.f32 %v1446, %v1510
      %v1512 = vpop.f32.mrf.mxu0
      %v1513 = vpop.f32.mrf.mxu0
      %v1514 = vadd.f32 %v1449, %v1513
      %v1515 = vpop.f32.mrf.mxu0
      %1516 = vmatprep.mubr.bf16.mxu0 0
      %1517 = vmatmul.mubr.bf16.gmra.mxu0 %v742
      %v1518 = vpop.f32.mrf.mxu0
      %v1519 = vadd.f32 %v1454, %v1518
      %v1520 = vpop.f32.mrf.mxu0
      %v1521 = vpop.f32.mrf.mxu0
      %v1522 = vadd.f32 %v1457, %v1521
      %v1523 = vpop.f32.mrf.mxu0
      %1524 = vmatprep.mubr.bf16.mxu0 0
      %1525 = vmatmul.mubr.bf16.gmra.mxu0 %v748
      %v1526 = vpop.f32.mrf.mxu0
      %v1527 = vadd.f32 %v1462, %v1526
      %v1528 = vpop.f32.mrf.mxu0
      %v1529 = vpop.f32.mrf.mxu0
      %v1530 = vadd.f32 %v1465, %v1529
      %v1531 = vpop.f32.mrf.mxu0
      %1532 = vdwg.mxu0
      %v1533 = vpack.c.bf16 %v1503, %v1503
      %v1534 = vpack.c.bf16 %v1506, %v1506
      %v1535 = vpack.c.bf16 %v1511, %v1511
      %v1536 = vpack.c.bf16 %v1514, %v1514
      %v1537 = vpack.c.bf16 %v1519, %v1519
      %v1538 = vpack.c.bf16 %v1522, %v1522
      %v1539 = vpack.c.bf16 %v1527, %v1527
      %v1540 = vpack.c.bf16 %v1530, %v1530
      %1541 = vst [vmem:[%s398] sm:$0xf] %v1533
      %1542 = vst [vmem:[%s398 + $0x4] sm:$0xf] %v1534
      %1543 = vst [vmem:[%s398 + $0x8] sm:$0xf] %v1535
      %1544 = vst [vmem:[%s398 + $0xc] sm:$0xf] %v1536
      %1545 = vst [vmem:[%s398 + $0x10] sm:$0xf] %v1537
      %1546 = vst [vmem:[%s398 + $0x14] sm:$0xf] %v1538
      %1547 = vst [vmem:[%s398 + $0x18] sm:$0xf] %v1539
      %1548 = vst [vmem:[%s398 + $0x1c] sm:$0xf] %v1540
      %v1549 = vadd.f32 %v1503, %v1506
      %v1550 = vadd.f32 %v1549, %v1511
      %v1551 = vadd.f32 %v1550, %v1514
      %v1552 = vadd.f32 %v1551, %v1519
      %v1553 = vadd.f32 %v1552, %v1522
      %v1554 = vadd.f32 %v1553, %v1527
      %v1555 = vadd.f32 %v1554, %v1530
      %v1556 = vrot.slane %v1555, 4
      %v1557 = vadd.f32 %v1555, %v1556
      %v1558 = vrot.slane %v1557, 2
      %v1559 = vadd.f32 %v1557, %v1558
      %v1560 = vrot.slane %v1559, 1
      %v1561 = vadd.f32 %v1559, %v1560
      %v1562 = vmul.f32 %v1503, %v1503
      %v1563 = vmul.f32 %v1506, %v1506
      %v1564 = vmul.f32 %v1511, %v1511
      %v1565 = vmul.f32 %v1514, %v1514
      %v1566 = vmul.f32 %v1519, %v1519
      %v1567 = vmul.f32 %v1522, %v1522
      %v1568 = vmul.f32 %v1527, %v1527
      %v1569 = vmul.f32 %v1530, %v1530
      %v1570 = vadd.f32 %v1562, %v1563
      %v1571 = vadd.f32 %v1570, %v1564
      %v1572 = vadd.f32 %v1571, %v1565
      %v1573 = vadd.f32 %v1572, %v1566
      %v1574 = vadd.f32 %v1573, %v1567
      %v1575 = vadd.f32 %v1574, %v1568
      %v1576 = vadd.f32 %v1575, %v1569
      %v1577 = vrot.slane %v1576, 4
      %v1578 = vadd.f32 %v1576, %v1577
      %v1579 = vrot.slane %v1578, 2
      %v1580 = vadd.f32 %v1578, %v1579
      %v1581 = vrot.slane %v1580, 1
      %v1582 = vadd.f32 %v1580, %v1581
      %vm1583 = vcmask 1040384
      %v1584 = vsel %vm1583, %v1561, %v1582
      %1585 = vst [vmem:[%s406] sm:$0x3] %v1584
      %s1586 = smul.u32 8, %s22
      %p1587 = scmp.lt.s32.totalorder %s21, 1
      %s1588 = scalar_select %p1587, %s21, 1
      %p1589 = scmp.lt.s32.totalorder %s1586, 7
      %s1590 = scalar_select %p1589, %s1586, 7
      %s1591 = smul.addr %s1588, 8
      %s1592 = sadd.s32 %s1590, %s1591
      %s1593 = smul.addr %s1592, 4
      %s1594 = scalar_lea.vmem %s4, %s1593
      %p1595 = scmp.lt.s32.totalorder %s21, 1
      %s1596 = scalar_select %p1595, %s21, 1
      %p1597 = scmp.lt.s32.totalorder %s22, 0
      %s1598 = scalar_select %p1597, %s22, 0
      %s1599 = sadd.s32 %s1598, %s1596
      %s1600 = smul.addr %s1599, 2
      %s1601 = scalar_lea.vmem %s5, %s1600
      // Predicated region
      $region37: #{down_forward.8} parent=35 // pred_check
        %p1602 = pneg %p162
      $region38: #{down_forward.8} parent=35 // pred_check_branch
        %1604 = sbr.rel (%p1602) target = $region40
      $region39: #{down_forward.8} parent=35 // pred_region
        %s1605 = smul.u32 8, %s22
      $region40: #{down_forward.8} parent=35 // pred_fallthru
        _
      // Predicated region
      $region41: #{down_forward.8} parent=35 // pred_check
        %p1606 = pneg %p190
      $region42: #{down_forward.8} parent=35 // pred_check_branch
        %1608 = sbr.rel (%p1606) target = $region44
      $region43: #{down_forward.8} parent=35 // pred_region
        _
      $region44: #{down_forward.8} parent=35 // pred_fallthru
        _
    $region36: #{down_forward.8} parent=5 // pred_fallthru
      _
    %p1609 = scmp.le.s32.totalorder 2, %s12
    // Predicated region
    $region45: #{down_forward.8} parent=5 // pred_check
      %p1610 = pneg %p1609
    $region46: #{down_forward.8} parent=5 // pred_check_branch
      %1612 = sbr.rel (%p1610) target = $region48
    $region47: #{down_forward.8} parent=5 // pred_region
      %s1613 = ssub.s32 %s12, 2
      // Predicated region
      $region49: #{down_forward.8} parent=47 // pred_check
        %p1614 = pneg %p168
      $region50: #{down_forward.8} parent=47 // pred_check_branch
        %1616 = sbr.rel (%p1614) target = $region52
      $region51: #{down_forward.8} parent=47 // pred_region
        %s1617 = smul.u32 8, %s24
        %p1618 = scmp.lt.s32.totalorder %s23, 1
        %s1619 = scalar_select %p1618, %s23, 1
        %p1620 = scmp.lt.s32.totalorder %s1617, 7
        %s1621 = scalar_select %p1620, %s1617, 7
        %s1622 = smul.addr %s1619, 8
        %s1623 = sadd.s32 %s1621, %s1622
        %s1624 = smul.addr %s1623, 4
        %s1625 = scalar_lea.vmem %s4, %s1624
      $region52: #{down_forward.8} parent=47 // pred_fallthru
        _
      // Predicated region
      $region53: #{down_forward.8} parent=47 // pred_check
        %p1626 = pneg %p196
      $region54: #{down_forward.8} parent=47 // pred_check_branch
        %1628 = sbr.rel (%p1626) target = $region56
      $region55: #{down_forward.8} parent=47 // pred_region
        %p1629 = scmp.lt.s32.totalorder %s23, 1
        %s1630 = scalar_select %p1629, %s23, 1
        %p1631 = scmp.lt.s32.totalorder %s24, 0
        %s1632 = scalar_select %p1631, %s24, 0
        %s1633 = sadd.s32 %s1632, %s1630
        %s1634 = smul.addr %s1633, 2
        %s1635 = scalar_lea.vmem %s5, %s1634
      $region56: #{down_forward.8} parent=47 // pred_fallthru
        _
    $region48: #{down_forward.8} parent=5 // pred_fallthru
      _
  $region6: #{down_forward.8} parent=0 // loop_footer
    %s16 = sadd.s32 1, %s12
  $region7: #{down_forward.8} parent=0 // loop_footer_branch
    %11 = sbr.rel target = $region3
  $region8: #{down_forward.8} parent=0 // loop_exit
    _

</llo_original>
